<compile_context>
chip_gen: v7x
topology: tpu7x:2x2x1
jax: 0.10.0
libtpu: 0.0.40
codegen_flags: <defaults>
</compile_context>

<pallas_src>
import functools

import numpy as np

import jax
import jax.numpy as jnp
from jax.experimental import pallas as pl
from jax.experimental.pallas import tpu as pltpu

jax.config.update("jax_default_matmul_precision", "highest")


def get_same_pad(k, s, d):
    assert not (s > 1 and d > 1)
    if s > 1:
        return (k - s + 1) // 2
    return (k - 1) * d // 2


# ----------------------------------------------------------------------------
# Fused chain-of-ResBlocks kernel
# ----------------------------------------------------------------------------

def _chain_kernel(x_ref, w_ref, o_ref, *, plan, B):
    """Fused chain of ResBlocks (eval mode).

    Activations stay as lane-dense (C, B*T) f32 values; intermediates of the
    chain never touch HBM.  Per block:
      1 merged MXU pass  (K conv taps + 1x1 scale stacked)        -> p_all
      <=K-1 MXU passes   (constant shift/pad matrices, 'same' conv)
      VPU: +bias, ReLU, residual add
      1 optional MXU pass (AvgPool1d as a constant matrix)
    No scratch, no masked sub-tile stores, no per-batch loop.
    """
    h = x_ref[...]                                            # (Cin0, B*T0) f32
    for blk in plan:
        Cin, Cout, K = blk["cin"], blk["cout"], blk["K"]
        T, Tout = blk["T"], blk["Tout"]
        TB = B * T

        # One merged weight matmul: rows [conv tap 0 .. tap K-1 ; 1x1 scale].
        w_all = w_ref[blk["r_w"]:blk["r_w"] + (K + 1) * Cout, 0:Cin]
        p_all = jnp.dot(w_all, h, preferred_element_type=jnp.float32)

        # Dilated 'same' conv = sum over taps, each tap time-shifted (with
        # implicit zero padding) by a constant 0/1 matrix on the MXU.
        conv = None
        for k, (s, r_s) in enumerate(blk["shifts"]):
            tap = p_all[k * Cout:(k + 1) * Cout, :]
            if s != 0:
                shift = w_ref[r_s:r_s + TB, 0:TB]
                tap = jnp.dot(tap, shift, preferred_element_type=jnp.float32)
            conv = tap if conv is None else conv + tap

        bias = w_ref[blk["r_b"]:blk["r_b"] + Cout, 0:2]       # [:,0]=conv, [:,1]=scale
        hc = jnp.maximum(conv + bias[:, 0:1], 0.0)            # folded BN + ReLU
        # Dropout is identity in eval mode.
        h = hc + p_all[K * Cout:(K + 1) * Cout, :] + bias[:, 1:2]   # residual 1x1 conv

        if blk["stride"] > 1:                                 # fused AvgPool1d
            pool = w_ref[blk["r_pool"]:blk["r_pool"] + TB, 0:B * Tout]
            h = jnp.dot(h, pool, preferred_element_type=jnp.float32)

    o_ref[...] = h                                            # single lane-dense store


# ----------------------------------------------------------------------------
# Host-side (one-time) parameter packing: BN fold + weight stacking + constant
# shift / pool matrices, all concatenated into ONE f32 operand.
# ----------------------------------------------------------------------------

def _np(a):
    return np.asarray(a, dtype=np.float32)


def _pack_chain(params_list, configs, B, T_in, eps=1e-5):
    pieces, plan = [], []
    row, maxcols = 0, 2
    T = T_in

    def add(arr):
        nonlocal row, maxcols
        arr = np.asarray(arr, np.float32)
        start = row
        pieces.append((start, arr))
        row = -(-(start + arr.shape[0]) // 8) * 8        # keep 8-sublane alignment
        maxcols = max(maxcols, arr.shape[1])
        return start

    prev_out = configs[0][0]
    for p, (in_c, out_c, K, stride, dil) in zip(params_list, configs):
        assert in_c == prev_out, "chained blocks must have matching channels"
        # PyTorch residual add only length-matches when (K-1)*dilation is even.
        assert (K - 1) * dil % 2 == 0
        pad = get_same_pad(K, 1, dil)

        # Fold eval-mode BatchNorm1d (running stats) into the conv weight/bias.
        inv = _np(p["bn_gamma"]) / np.sqrt(_np(p["bn_var"]) + eps)
        Wc = _np(p["conv_w"]) * inv[:, None, None]                 # (Cout, Cin, K)
        bc = (_np(p["conv_b"]) - _np(p["bn_mean"])) * inv + _np(p["bn_beta"])
        Ws = _np(p["scale_w"])[:, :, 0]                            # (Cout, Cin)
        bs = _np(p["scale_b"])

        # Merged weight: [conv tap 0; ...; conv tap K-1; 1x1 scale].
        r_w = add(np.concatenate([Wc[:, :, k] for k in range(K)] + [Ws], axis=0))
        r_b = add(np.stack([bc, bs], axis=1))                      # (Cout, 2)

        TB = B * T
        shifts = []
        for k in range(K):
            s = k * dil - pad
            if s == 0:
                shifts.append((0, -1))
                continue
            # out[:, b*T + t] = in[:, b*T + t + s] if 0 <= t+s < T else 0
            S = np.zeros((TB, TB), np.float32)
            for b in range(B):
                for t in range(max(0, -s), min(T, T - s)):
                    S[b * T + t + s, b * T + t] = 1.0
            shifts.append((s, add(S)))

        if stride > 1:
            # AvgPool1d(kernel=stride, stride=stride, padding=0), floor mode.
            Tout = T // stride
            P = np.zeros((TB, B * Tout), np.float32)
            for b in range(B):
                for j in range(Tout):
                    P[b * T + j * stride:b * T + (j + 1) * stride,
                      b * Tout + j] = 1.0 / stride
            r_pool = add(P)
        else:
            Tout, r_pool = T, -1

        plan.append(dict(cin=in_c, cout=out_c, K=K, T=T, Tout=Tout, stride=stride,
                         r_w=r_w, r_b=r_b, shifts=tuple(shifts), r_pool=r_pool))
        T, prev_out = Tout, out_c

    W = np.zeros((max(8, row), maxcols), np.float32)
    for start, arr in pieces:
        W[start:start + arr.shape[0], :arr.shape[1]] = arr
    return W, plan


def make_resblock_chain(params_list, configs, B, T, eps=1e-5):
    """Build a jitted forward for a chain of ResBlocks fused into ONE pallas_call.

    configs[i] = (in_c, out_c, kernel, stride, dilation); block i+1 consumes
    block i's output.  Eval-mode semantics (BN running stats, Dropout=identity).
    Input/output keep the PyTorch NCW layout (B, C, T).
    """
    wpack_np, plan = _pack_chain(params_list, configs, B, T, eps)
    wpack = jnp.asarray(wpack_np)
    Cin0, CoutL, ToutL = configs[0][0], configs[-1][1], plan[-1]["Tout"]
    kern = functools.partial(_chain_kernel, plan=tuple(plan), B=B)

    @jax.jit
    def forward(x):
        # NCW -> lane-dense (Cin, B*T); tiny layout op in the same jit.
        x2d = jnp.transpose(x.astype(jnp.float32), (1, 0, 2)).reshape(Cin0, B * T)
        # Gridless call: the whole problem fits VMEM trivially.  For realistic
        # B/T add a time-tile grid with dimension_semantics=("parallel",) (v7x
        # has 2 TCs) and size tiles for 64 MiB VMEM (32 MiB default scoped;
        # 16 MiB on v5e -> pltpu.CompilerParams(vmem_limit_bytes=...)).
        out2d = pl.pallas_call(
            kern,
            out_shape=jax.ShapeDtypeStruct((CoutL, B * ToutL), jnp.float32),
        )(x2d, wpack)
        return jnp.transpose(out2d.reshape(CoutL, B, ToutL), (1, 0, 2))

    return forward


# ----------------------------------------------------------------------------
# Pure-JAX reference (mirrors the PyTorch module in eval mode)
# ----------------------------------------------------------------------------

def resblock_ref(x, params, kernel, stride, dilation, eps=1e-5):
    pad = get_same_pad(kernel, 1, dilation)
    dn = ("NCH", "OIH", "NCH")
    h = jax.lax.conv_general_dilated(
        x, params["conv_w"], window_strides=(1,), padding=[(pad, pad)],
        rhs_dilation=(dilation,), dimension_numbers=dn)
    h = h + params["conv_b"][None, :, None]
    inv = params["bn_gamma"] / jnp.sqrt(params["bn_var"] + eps)
    h = (h - params["bn_mean"][None, :, None]) * inv[None, :, None] \
        + params["bn_beta"][None, :, None]
    h = jnp.maximum(h, 0.0)                      # ReLU; Dropout = identity
    scaled = jax.lax.conv_general_dilated(
        x, params["scale_w"], window_strides=(1,), padding=[(0, 0)],
        dimension_numbers=dn) + params["scale_b"][None, :, None]
    h = h + scaled
    if stride > 1:
        Bb, C, T = h.shape
        Tout = (T - stride) // stride + 1
        h = h[:, :, :Tout * stride].reshape(Bb, C, Tout, stride).mean(axis=-1)
    return h


def init_resblock_params(key, in_c, out_c, kernel):
    ks = jax.random.split(key, 8)
    n = lambda k, shape, s=0.3: s * jax.random.normal(k, shape, jnp.float32)
    return dict(
        conv_w=n(ks[0], (out_c, in_c, kernel)),
        conv_b=n(ks[1], (out_c,)),
        bn_gamma=1.0 + n(ks[2], (out_c,), 0.1),
        bn_beta=n(ks[3], (out_c,), 0.1),
        bn_mean=n(ks[4], (out_c,), 0.1),
        bn_var=0.5 + jnp.abs(n(ks[5], (out_c,), 0.2)),
        scale_w=n(ks[6], (out_c, in_c, 1)),
        scale_b=n(ks[7], (out_c,)),
    )


# ----------------------------------------------------------------------------
# Example run
# ----------------------------------------------------------------------------

if __name__ == "__main__":
    key = jax.random.PRNGKey(0)
    k0, k1, k2, k3 = jax.random.split(key, 4)

    B, Cin, T = 2, 4, 16
    x = jax.random.normal(k0, (B, Cin, T), jnp.float32)

    cfg1 = (4, 8, 3, 1, 1)     # plain 'same' conv
    cfg2 = (8, 16, 3, 1, 2)    # dilated conv, chained after cfg1
    cfg3 = (4, 8, 3, 2, 1)     # stride 2 -> fused AvgPool1d path
    p1 = init_resblock_params(k1, 4, 8, 3)
    p2 = init_resblock_params(k2, 8, 16, 3)
    p3 = init_resblock_params(k3, 4, 8, 3)

    # Review item 1: the chained blocks 1->2 run as ONE pallas_call.
    chain12 = make_resblock_chain([p1, p2], [cfg1, cfg2], B, T)
    single1 = make_resblock_chain([p1], [cfg1], B, T)
    single3 = make_resblock_chain([p3], [cfg3], B, T)

    y12 = jax.block_until_ready(chain12(x))
    y1 = jax.block_until_ready(single1(x))
    y3 = jax.block_until_ready(single3(x))

    r1 = resblock_ref(x, p1, *cfg1[2:])
    r12 = resblock_ref(r1, p2, *cfg2[2:])
    r3 = resblock_ref(x, p3, *cfg3[2:])

    assert y1.shape == (B, 8, T), y1.shape
    assert y12.shape == (B, 16, T), y12.shape
    assert y3.shape == (B, 8, T // 2), y3.shape
    for y, r in ((y1, r1), (y12, r12), (y3, r3)):
        assert bool(jnp.all(jnp.isfinite(y)))
        err = float(jnp.max(jnp.abs(y - r)))
        assert bool(jnp.allclose(y, r, rtol=1e-4, atol=1e-4)), err
    print("KERNEL_OK")
</pallas_src>

<mosaic_0001>
module attributes {stable_mosaic.version = 11 : i64} {
  func.func @_chain_kernel(%arg0: memref<4x32xf32, #tpu.memory_space<vmem>>, %arg1: memref<248x32xf32, #tpu.memory_space<vmem>>, %arg2: memref<16x32xf32, #tpu.memory_space<vmem>>) attributes {dimension_semantics = [], scalar_prefetch = 0 : i64, scratch_operands = 0 : i64, tpu.core_type = #tpu.core_type<tc>} {
    %c0 = arith.constant 0 : index
    %c0_0 = arith.constant 0 : index
    %0 = vector.load %arg0[%c0, %c0_0] : memref<4x32xf32, #tpu.memory_space<vmem>>, vector<4x32xf32>
    %c0_1 = arith.constant 0 : index
    %c0_2 = arith.constant 0 : index
    %1 = vector.load %arg1[%c0_1, %c0_2] : memref<248x32xf32, #tpu.memory_space<vmem>>, vector<32x4xf32>
    %cst = arith.constant dense<0.000000e+00> : vector<32x32xf32>
    %2 = tpu.matmul %1, %0, %cst {dimension_numbers = #tpu.dot_dimension_numbers<[1], [0], [0], [1], [0, 0, 1, 1], [], []>, precision = #tpu.contract_precision<fp32>} : vector<32x4xf32>, vector<4x32xf32>, vector<32x32xf32> -> vector<32x32xf32>
    %3 = vector.extract_strided_slice %2 {offsets = [0, 0], sizes = [8, 32], strides = [1, 1]} : vector<32x32xf32> to vector<8x32xf32>
    %c40 = arith.constant 40 : index
    %c0_3 = arith.constant 0 : index
    %4 = vector.load %arg1[%c40, %c0_3] : memref<248x32xf32, #tpu.memory_space<vmem>>, vector<32x32xf32>
    %cst_4 = arith.constant dense<0.000000e+00> : vector<8x32xf32>
    %5 = tpu.matmul %3, %4, %cst_4 {dimension_numbers = #tpu.dot_dimension_numbers<[1], [0], [0], [1], [0, 0, 1, 1], [], []>, precision = #tpu.contract_precision<fp32>} : vector<8x32xf32>, vector<32x32xf32>, vector<8x32xf32> -> vector<8x32xf32>
    %6 = vector.extract_strided_slice %2 {offsets = [8, 0], sizes = [8, 32], strides = [1, 1]} : vector<32x32xf32> to vector<8x32xf32>
    %7 = arith.addf %5, %6 : vector<8x32xf32>
    %8 = vector.extract_strided_slice %2 {offsets = [16, 0], sizes = [8, 32], strides = [1, 1]} : vector<32x32xf32> to vector<8x32xf32>
    %c72 = arith.constant 72 : index
    %c0_5 = arith.constant 0 : index
    %9 = vector.load %arg1[%c72, %c0_5] : memref<248x32xf32, #tpu.memory_space<vmem>>, vector<32x32xf32>
    %cst_6 = arith.constant dense<0.000000e+00> : vector<8x32xf32>
    %10 = tpu.matmul %8, %9, %cst_6 {dimension_numbers = #tpu.dot_dimension_numbers<[1], [0], [0], [1], [0, 0, 1, 1], [], []>, precision = #tpu.contract_precision<fp32>} : vector<8x32xf32>, vector<32x32xf32>, vector<8x32xf32> -> vector<8x32xf32>
    %11 = arith.addf %7, %10 : vector<8x32xf32>
    %c32 = arith.constant 32 : index
    %c0_7 = arith.constant 0 : index
    %12 = vector.load %arg1[%c32, %c0_7] : memref<248x32xf32, #tpu.memory_space<vmem>>, vector<8x2xf32>
    %13 = vector.extract_strided_slice %12 {offsets = [0, 0], sizes = [8, 1], strides = [1, 1]} : vector<8x2xf32> to vector<8x1xf32>
    %14 = vector.broadcast %13 : vector<8x1xf32> to vector<8x32xf32>
    %15 = arith.addf %11, %14 : vector<8x32xf32>
    %cst_8 = arith.constant 0.000000e+00 : f32
    %16 = vector.broadcast %cst_8 : f32 to vector<8x32xf32>
    %17 = arith.maximumf %15, %16 : vector<8x32xf32>
    %18 = vector.extract_strided_slice %2 {offsets = [24, 0], sizes = [8, 32], strides = [1, 1]} : vector<32x32xf32> to vector<8x32xf32>
    %19 = arith.addf %17, %18 : vector<8x32xf32>
    %20 = vector.extract_strided_slice %12 {offsets = [0, 1], sizes = [8, 1], strides = [1, 1]} : vector<8x2xf32> to vector<8x1xf32>
    %21 = vector.broadcast %20 : vector<8x1xf32> to vector<8x32xf32>
    %22 = arith.addf %19, %21 : vector<8x32xf32>
    %c104 = arith.constant 104 : index
    %c0_9 = arith.constant 0 : index
    %23 = vector.load %arg1[%c104, %c0_9] : memref<248x32xf32, #tpu.memory_space<vmem>>, vector<64x8xf32>
    %cst_10 = arith.constant dense<0.000000e+00> : vector<64x32xf32>
    %24 = tpu.matmul %23, %22, %cst_10 {dimension_numbers = #tpu.dot_dimension_numbers<[1], [0], [0], [1], [0, 0, 1, 1], [], []>, precision = #tpu.contract_precision<fp32>} : vector<64x8xf32>, vector<8x32xf32>, vector<64x32xf32> -> vector<64x32xf32>
    %25 = vector.extract_strided_slice %24 {offsets = [0, 0], sizes = [16, 32], strides = [1, 1]} : vector<64x32xf32> to vector<16x32xf32>
    %c184 = arith.constant 184 : index
    %c0_11 = arith.constant 0 : index
    %26 = vector.load %arg1[%c184, %c0_11] : memref<248x32xf32, #tpu.memory_space<vmem>>, vector<32x32xf32>
    %cst_12 = arith.constant dense<0.000000e+00> : vector<16x32xf32>
    %27 = tpu.matmul %25, %26, %cst_12 {dimension_numbers = #tpu.dot_dimension_numbers<[1], [0], [0], [1], [0, 0, 1, 1], [], []>, precision = #tpu.contract_precision<fp32>} : vector<16x32xf32>, vector<32x32xf32>, vector<16x32xf32> -> vector<16x32xf32>
    %28 = vector.extract_strided_slice %24 {offsets = [16, 0], sizes = [16, 32], strides = [1, 1]} : vector<64x32xf32> to vector<16x32xf32>
    %29 = arith.addf %27, %28 : vector<16x32xf32>
    %30 = vector.extract_strided_slice %24 {offsets = [32, 0], sizes = [16, 32], strides = [1, 1]} : vector<64x32xf32> to vector<16x32xf32>
    %c216 = arith.constant 216 : index
    %c0_13 = arith.constant 0 : index
    %31 = vector.load %arg1[%c216, %c0_13] : memref<248x32xf32, #tpu.memory_space<vmem>>, vector<32x32xf32>
    %cst_14 = arith.constant dense<0.000000e+00> : vector<16x32xf32>
    %32 = tpu.matmul %30, %31, %cst_14 {dimension_numbers = #tpu.dot_dimension_numbers<[1], [0], [0], [1], [0, 0, 1, 1], [], []>, precision = #tpu.contract_precision<fp32>} : vector<16x32xf32>, vector<32x32xf32>, vector<16x32xf32> -> vector<16x32xf32>
    %33 = arith.addf %29, %32 : vector<16x32xf32>
    %c168 = arith.constant 168 : index
    %c0_15 = arith.constant 0 : index
    %34 = vector.load %arg1[%c168, %c0_15] : memref<248x32xf32, #tpu.memory_space<vmem>>, vector<16x2xf32>
    %35 = vector.extract_strided_slice %34 {offsets = [0, 0], sizes = [16, 1], strides = [1, 1]} : vector<16x2xf32> to vector<16x1xf32>
    %36 = vector.broadcast %35 : vector<16x1xf32> to vector<16x32xf32>
    %37 = arith.addf %33, %36 : vector<16x32xf32>
    %cst_16 = arith.constant 0.000000e+00 : f32
    %38 = vector.broadcast %cst_16 : f32 to vector<16x32xf32>
    %39 = arith.maximumf %37, %38 : vector<16x32xf32>
    %40 = vector.extract_strided_slice %24 {offsets = [48, 0], sizes = [16, 32], strides = [1, 1]} : vector<64x32xf32> to vector<16x32xf32>
    %41 = arith.addf %39, %40 : vector<16x32xf32>
    %42 = vector.extract_strided_slice %34 {offsets = [0, 1], sizes = [16, 1], strides = [1, 1]} : vector<16x2xf32> to vector<16x1xf32>
    %43 = vector.broadcast %42 : vector<16x1xf32> to vector<16x32xf32>
    %44 = arith.addf %41, %43 : vector<16x32xf32>
    %c0_17 = arith.constant 0 : index
    %c0_18 = arith.constant 0 : index
    %45 = vector.load %arg2[%c0_17, %c0_18] : memref<16x32xf32, #tpu.memory_space<vmem>>, vector<16x32xf32>
    tpu.vector_store %arg2[%c0_17, %c0_18], %44 {strides = array<i32>} : memref<16x32xf32, #tpu.memory_space<vmem>>, vector<16x32xf32>,
    return
  }
}

</mosaic_0001>

<llo_original>
// kernel: forward.1
$region0: #{forward.1}
  #allocation0 [shape = 'u32[]', space=smem, size = 0x4, offset = 0x4, fixed_abs, tag = 'smem constant byte address 0x4 - core index']
  #allocation1 [shape = 'u32[144,128]{1,0:T(1,128)}', space=vmem, size = 0x12000, scoped, tag = 'internal scratch']
  %s0 = inlined_call_operand.vmem [shape: f32[4,32], index: 0, kind: input, shape index: {}]
  %s1 = inlined_call_operand.hbm [shape: f32[248,32], index: 1, kind: input, shape index: {}]
  %s2 = inlined_call_operand.vmem [shape: f32[16,32], index: 2, kind: output, shape index: {}]
  %s3 = sld [smem:[#allocation0]]
  $region22: #{forward.1} parent=0
    _
  %s5 = ssub.s32 1, %s3
  %s6 = scalar_select 0, %s5, %s3
  $region1: #{forward.1} parent=0
    #allocation2 [shape = 'u8[126976]{0}', space=vmem, size = 0x1f000, scoped, tag = 'input window, operand 1, single buffered']
    #allocation3 [shape = 's32[1]{0}', space=sflag, size = 0x4, scoped, tag = 'scoped memory for forward.1']
    %7 = vsyncpa [#allocation3], 0
    // Predicated region
    $region2: #{forward.1} parent=1 // pred_check
      _
    $region3: #{forward.1} parent=1 // pred_check_branch
      %9 = sbr.rel (0) target = $region5
    $region4: #{forward.1} parent=1 // pred_region
      _
    $region5: #{forward.1} parent=1 // pred_fallthru
      _
    // Predicated region
    $region6: #{forward.1} parent=1 // pred_check
      _
    $region7: #{forward.1} parent=1 // pred_check_branch
      %11 = sbr.rel (0) target = $region9
    $region8: #{forward.1} parent=1 // pred_region
      %s13 = ssub.s32 3968, 3968
      %14 = vsyncadd [#allocation3], %s13
      %s15 = sshll.u32 [#allocation2], 4
      %s16 = int_to_ptr.vmem [resolvable:$true] %s15
      %21 = dma.hbm_to_vmem [thread:$0]  %s1, 3968, %s16, [#allocation3], 128, 128, 8
    $region9: #{forward.1} parent=1 // pred_fallthru
      _
    // Predicated region
    $region10: #{forward.1} parent=1 // pred_check
      _
    $region11: #{forward.1} parent=1 // pred_check_branch
      %23 = sbr.rel (0) target = $region13
    $region12: #{forward.1} parent=1 // pred_region
      %24 = dma.done [#allocation3], 3968
    $region13: #{forward.1} parent=1 // pred_fallthru
      _
    %v25 = vld [vmem:[%s0] sm:$0xf]
    %v26 = vld [vmem:[#allocation2] sm:$0xff]
    %v27 = vld [vmem:[#allocation2 + $0x8] sm:$0xff]
    %v28 = vld [vmem:[#allocation2 + $0x10] sm:$0xff]
    %v29 = vld [vmem:[#allocation2 + $0x18] sm:$0xff]
    %vm30 = vcmask 31744
    %v32 = vsel %vm30, %v26, 0
    %v35 = vsel %vm30, %v27, 0
    %v38 = vsel %vm30, %v28, 0
    %v41 = vsel %vm30, %v29, 0
    %vm43 = vcmask 1043456
    %v45 = vsel %vm43, %v25, 0
    %47 = vmatprep.subr.mxu0 0.0
    %v48 = vand.u32 %v45, 4294901760
    %49 = vmatpush1.msra.mxu0 %v48
    %50 = vmatprep.subr.mxu0 0.0
    %51 = vmatpush1.msra.mxu0 0.0
    %52 = vmatprep.subr.mxu0 0.0
    %53 = vmatpush1.msra.mxu0 0.0
    %54 = vmatprep.subr.mxu0 0.0
    %55 = vmatpush1.msra.mxu0 0.0
    %56 = vmatprep.subr.mxu0 0.0
    %57 = vmatpush1.msra.mxu0 0.0
    %58 = vmatprep.subr.mxu0 0.0
    %59 = vmatpush1.msra.mxu0 0.0
    %60 = vmatprep.subr.mxu0 0.0
    %61 = vmatpush1.msra.mxu0 0.0
    %62 = vmatprep.subr.mxu0 0.0
    %63 = vmatpush1.msra.mxu0 0.0
    %64 = vmatprep.subr.mxu0 0.0
    %65 = vmatpush1.msra.mxu0 0.0
    %66 = vmatprep.subr.mxu0 0.0
    %67 = vmatpush1.msra.mxu0 0.0
    %68 = vmatprep.subr.mxu0 0.0
    %69 = vmatpush1.msra.mxu0 0.0
    %70 = vmatprep.subr.mxu0 0.0
    %71 = vmatpush1.msra.mxu0 0.0
    %72 = vmatprep.subr.mxu0 0.0
    %73 = vmatpush1.msra.mxu0 0.0
    %74 = vmatprep.subr.mxu0 0.0
    %75 = vmatpush1.msra.mxu0 0.0
    %76 = vmatprep.subr.mxu0 0.0
    %77 = vmatpush1.msra.mxu0 0.0
    %78 = vmatprep.subr.mxu0 0.0
    %79 = vmatpush1.msra.mxu0 0.0
    %80 = vmatprep.subr.mxu0 0.0
    %81 = vmatpush1.msra.mxu0 0.0
    %82 = vmatprep.subr.mxu0 0.0
    %83 = vmatpush1.msra.mxu0 0.0
    %84 = vmatprep.subr.mxu0 0.0
    %85 = vmatpush1.msra.mxu0 0.0
    %86 = vmatprep.subr.mxu0 0.0
    %87 = vmatpush1.msra.mxu0 0.0
    %88 = vmatprep.subr.mxu0 0.0
    %89 = vmatpush1.msra.mxu0 0.0
    %90 = vmatprep.subr.mxu0 0.0
    %91 = vmatpush1.msra.mxu0 0.0
    %92 = vmatprep.subr.mxu0 0.0
    %93 = vmatpush1.msra.mxu0 0.0
    %94 = vmatprep.subr.mxu0 0.0
    %95 = vmatpush1.msra.mxu0 0.0
    %96 = vmatprep.subr.mxu0 0.0
    %97 = vmatpush1.msra.mxu0 0.0
    %98 = vmatprep.subr.mxu0 0.0
    %99 = vmatpush1.msra.mxu0 0.0
    %100 = vmatprep.subr.mxu0 0.0
    %101 = vmatpush1.msra.mxu0 0.0
    %102 = vmatprep.subr.mxu0 0.0
    %103 = vmatpush1.msra.mxu0 0.0
    %104 = vmatprep.subr.mxu0 0.0
    %105 = vmatpush1.msra.mxu0 0.0
    %106 = vmatprep.subr.mxu0 0.0
    %107 = vmatpush1.msra.mxu0 0.0
    %108 = vmatprep.subr.mxu0 0.0
    %109 = vmatpush1.msra.mxu0 0.0
    %110 = vmatprep.subr.mxu0 0.0
    %111 = vmatpush1.msra.mxu0 0.0
    %112 = vmatprep.mubr.f32.mxu0 0.0
    %v113 = vand.u32 %v32, 4294901760
    %v114 = vsub.f32 %v32, %v113
    %v115 = vand.u32 %v114, 4294901760
    %v116 = vsub.f32 %v114, %v115
    %v117 = vand.u32 %v116, 4294901760
    %118 = vmatmul.mubr.f32.gmra.mrb[0].mxu0 %v117
    %v119 = vpop.f32.mrb[0].mxu0
    %v120 = vadd.f32 0.0, %v119
    %v121 = vpop.f32.mrb[0].mxu0
    %122 = vmatprep.mubr.f32.mxu0 0.0
    %v123 = vand.u32 %v35, 4294901760
    %v124 = vsub.f32 %v35, %v123
    %v125 = vand.u32 %v124, 4294901760
    %v126 = vsub.f32 %v124, %v125
    %v127 = vand.u32 %v126, 4294901760
    %128 = vmatmul.mubr.f32.gmra.mrb[0].mxu0 %v127
    %v129 = vpop.f32.mrb[0].mxu0
    %v130 = vadd.f32 0.0, %v129
    %v131 = vpop.f32.mrb[0].mxu0
    %132 = vmatprep.mubr.f32.mxu0 0.0
    %v133 = vand.u32 %v38, 4294901760
    %v134 = vsub.f32 %v38, %v133
    %v135 = vand.u32 %v134, 4294901760
    %v136 = vsub.f32 %v134, %v135
    %v137 = vand.u32 %v136, 4294901760
    %138 = vmatmul.mubr.f32.gmra.mrb[0].mxu0 %v137
    %v139 = vpop.f32.mrb[0].mxu0
    %v140 = vadd.f32 0.0, %v139
    %v141 = vpop.f32.mrb[0].mxu0
    %142 = vmatprep.mubr.f32.mxu0 0.0
    %v143 = vand.u32 %v41, 4294901760
    %v144 = vsub.f32 %v41, %v143
    %v145 = vand.u32 %v144, 4294901760
    %v146 = vsub.f32 %v144, %v145
    %v147 = vand.u32 %v146, 4294901760
    %148 = vmatmul.mubr.f32.gmra.mrb[0].mxu0 %v147
    %v149 = vpop.f32.mrb[0].mxu0
    %v150 = vadd.f32 0.0, %v149
    %v151 = vpop.f32.mrb[0].mxu0
    %152 = vdwg.mxu0
    %153 = vmatprep.subr.mxu0 0.0
    %v154 = vand.u32 %v45, 4294901760
    %v155 = vsub.f32 %v45, %v154
    %v156 = vand.u32 %v155, 4294901760
    %v157 = vsub.f32 %v155, %v156
    %v158 = vand.u32 %v157, 4294901760
    %159 = vmatpush1.msra.mxu0 %v158
    %160 = vmatprep.subr.mxu0 0.0
    %161 = vmatpush1.msra.mxu0 0.0
    %162 = vmatprep.subr.mxu0 0.0
    %163 = vmatpush1.msra.mxu0 0.0
    %164 = vmatprep.subr.mxu0 0.0
    %165 = vmatpush1.msra.mxu0 0.0
    %166 = vmatprep.subr.mxu0 0.0
    %167 = vmatpush1.msra.mxu0 0.0
    %168 = vmatprep.subr.mxu0 0.0
    %169 = vmatpush1.msra.mxu0 0.0
    %170 = vmatprep.subr.mxu0 0.0
    %171 = vmatpush1.msra.mxu0 0.0
    %172 = vmatprep.subr.mxu0 0.0
    %173 = vmatpush1.msra.mxu0 0.0
    %174 = vmatprep.subr.mxu0 0.0
    %175 = vmatpush1.msra.mxu0 0.0
    %176 = vmatprep.subr.mxu0 0.0
    %177 = vmatpush1.msra.mxu0 0.0
    %178 = vmatprep.subr.mxu0 0.0
    %179 = vmatpush1.msra.mxu0 0.0
    %180 = vmatprep.subr.mxu0 0.0
    %181 = vmatpush1.msra.mxu0 0.0
    %182 = vmatprep.subr.mxu0 0.0
    %183 = vmatpush1.msra.mxu0 0.0
    %184 = vmatprep.subr.mxu0 0.0
    %185 = vmatpush1.msra.mxu0 0.0
    %186 = vmatprep.subr.mxu0 0.0
    %187 = vmatpush1.msra.mxu0 0.0
    %188 = vmatprep.subr.mxu0 0.0
    %189 = vmatpush1.msra.mxu0 0.0
    %190 = vmatprep.subr.mxu0 0.0
    %191 = vmatpush1.msra.mxu0 0.0
    %192 = vmatprep.subr.mxu0 0.0
    %193 = vmatpush1.msra.mxu0 0.0
    %194 = vmatprep.subr.mxu0 0.0
    %195 = vmatpush1.msra.mxu0 0.0
    %196 = vmatprep.subr.mxu0 0.0
    %197 = vmatpush1.msra.mxu0 0.0
    %198 = vmatprep.subr.mxu0 0.0
    %199 = vmatpush1.msra.mxu0 0.0
    %200 = vmatprep.subr.mxu0 0.0
    %201 = vmatpush1.msra.mxu0 0.0
    %202 = vmatprep.subr.mxu0 0.0
    %203 = vmatpush1.msra.mxu0 0.0
    %204 = vmatprep.subr.mxu0 0.0
    %205 = vmatpush1.msra.mxu0 0.0
    %206 = vmatprep.subr.mxu0 0.0
    %207 = vmatpush1.msra.mxu0 0.0
    %208 = vmatprep.subr.mxu0 0.0
    %209 = vmatpush1.msra.mxu0 0.0
    %210 = vmatprep.subr.mxu0 0.0
    %211 = vmatpush1.msra.mxu0 0.0
    %212 = vmatprep.subr.mxu0 0.0
    %213 = vmatpush1.msra.mxu0 0.0
    %214 = vmatprep.subr.mxu0 0.0
    %215 = vmatpush1.msra.mxu0 0.0
    %216 = vmatprep.subr.mxu0 0.0
    %217 = vmatpush1.msra.mxu0 0.0
    %218 = vmatprep.subr.mxu0 0.0
    %219 = vmatpush1.msra.mxu0 0.0
    %220 = vmatprep.subr.mxu0 0.0
    %221 = vmatpush1.msra.mxu0 0.0
    %222 = vmatprep.mubr.f32.mxu0 0.0
    %v223 = vand.u32 %v32, 4294901760
    %224 = vmatmul.mubr.f32.gmra.mrb[0].mxu0 %v223
    %v225 = vpop.f32.mrb[0].mxu0
    %v226 = vadd.f32 %v120, %v225
    %v227 = vpop.f32.mrb[0].mxu0
    %228 = vmatprep.mubr.f32.mxu0 0.0
    %v229 = vand.u32 %v35, 4294901760
    %230 = vmatmul.mubr.f32.gmra.mrb[0].mxu0 %v229
    %v231 = vpop.f32.mrb[0].mxu0
    %v232 = vadd.f32 %v130, %v231
    %v233 = vpop.f32.mrb[0].mxu0
    %234 = vmatprep.mubr.f32.mxu0 0.0
    %v235 = vand.u32 %v38, 4294901760
    %236 = vmatmul.mubr.f32.gmra.mrb[0].mxu0 %v235
    %v237 = vpop.f32.mrb[0].mxu0
    %v238 = vadd.f32 %v140, %v237
    %v239 = vpop.f32.mrb[0].mxu0
    %240 = vmatprep.mubr.f32.mxu0 0.0
    %v241 = vand.u32 %v41, 4294901760
    %242 = vmatmul.mubr.f32.gmra.mrb[0].mxu0 %v241
    %v243 = vpop.f32.mrb[0].mxu0
    %v244 = vadd.f32 %v150, %v243
    %v245 = vpop.f32.mrb[0].mxu0
    %246 = vdwg.mxu0
    %247 = vmatprep.subr.mxu0 0.0
    %v248 = vand.u32 %v45, 4294901760
    %v249 = vsub.f32 %v45, %v248
    %250 = vmatpush1.msra.mxu0 %v249
    %251 = vmatprep.subr.mxu0 0.0
    %252 = vmatpush1.msra.mxu0 0.0
    %253 = vmatprep.subr.mxu0 0.0
    %254 = vmatpush1.msra.mxu0 0.0
    %255 = vmatprep.subr.mxu0 0.0
    %256 = vmatpush1.msra.mxu0 0.0
    %257 = vmatprep.subr.mxu0 0.0
    %258 = vmatpush1.msra.mxu0 0.0
    %259 = vmatprep.subr.mxu0 0.0
    %260 = vmatpush1.msra.mxu0 0.0
    %261 = vmatprep.subr.mxu0 0.0
    %262 = vmatpush1.msra.mxu0 0.0
    %263 = vmatprep.subr.mxu0 0.0
    %264 = vmatpush1.msra.mxu0 0.0
    %265 = vmatprep.subr.mxu0 0.0
    %266 = vmatpush1.msra.mxu0 0.0
    %267 = vmatprep.subr.mxu0 0.0
    %268 = vmatpush1.msra.mxu0 0.0
    %269 = vmatprep.subr.mxu0 0.0
    %270 = vmatpush1.msra.mxu0 0.0
    %271 = vmatprep.subr.mxu0 0.0
    %272 = vmatpush1.msra.mxu0 0.0
    %273 = vmatprep.subr.mxu0 0.0
    %274 = vmatpush1.msra.mxu0 0.0
    %275 = vmatprep.subr.mxu0 0.0
    %276 = vmatpush1.msra.mxu0 0.0
    %277 = vmatprep.subr.mxu0 0.0
    %278 = vmatpush1.msra.mxu0 0.0
    %279 = vmatprep.subr.mxu0 0.0
    %280 = vmatpush1.msra.mxu0 0.0
    %281 = vmatprep.subr.mxu0 0.0
    %282 = vmatpush1.msra.mxu0 0.0
    %283 = vmatprep.subr.mxu0 0.0
    %284 = vmatpush1.msra.mxu0 0.0
    %285 = vmatprep.subr.mxu0 0.0
    %286 = vmatpush1.msra.mxu0 0.0
    %287 = vmatprep.subr.mxu0 0.0
    %288 = vmatpush1.msra.mxu0 0.0
    %289 = vmatprep.subr.mxu0 0.0
    %290 = vmatpush1.msra.mxu0 0.0
    %291 = vmatprep.subr.mxu0 0.0
    %292 = vmatpush1.msra.mxu0 0.0
    %293 = vmatprep.subr.mxu0 0.0
    %294 = vmatpush1.msra.mxu0 0.0
    %295 = vmatprep.subr.mxu0 0.0
    %296 = vmatpush1.msra.mxu0 0.0
    %297 = vmatprep.subr.mxu0 0.0
    %298 = vmatpush1.msra.mxu0 0.0
    %299 = vmatprep.subr.mxu0 0.0
    %300 = vmatpush1.msra.mxu0 0.0
    %301 = vmatprep.subr.mxu0 0.0
    %302 = vmatpush1.msra.mxu0 0.0
    %303 = vmatprep.subr.mxu0 0.0
    %304 = vmatpush1.msra.mxu0 0.0
    %305 = vmatprep.subr.mxu0 0.0
    %306 = vmatpush1.msra.mxu0 0.0
    %307 = vmatprep.subr.mxu0 0.0
    %308 = vmatpush1.msra.mxu0 0.0
    %309 = vmatprep.subr.mxu0 0.0
    %310 = vmatpush1.msra.mxu0 0.0
    %311 = vmatprep.subr.mxu0 0.0
    %312 = vmatpush1.msra.mxu0 0.0
    %313 = vmatprep.mubr.f32.mxu0 0.0
    %v314 = vand.u32 %v32, 4294901760
    %v315 = vsub.f32 %v32, %v314
    %316 = vmatmul.mubr.f32.gmra.mrb[0].mxu0 %v315
    %v317 = vpop.f32.mrb[0].mxu0
    %v318 = vadd.f32 %v226, %v317
    %v319 = vpop.f32.mrb[0].mxu0
    %320 = vmatprep.mubr.f32.mxu0 0.0
    %v321 = vand.u32 %v35, 4294901760
    %v322 = vsub.f32 %v35, %v321
    %323 = vmatmul.mubr.f32.gmra.mrb[0].mxu0 %v322
    %v324 = vpop.f32.mrb[0].mxu0
    %v325 = vadd.f32 %v232, %v324
    %v326 = vpop.f32.mrb[0].mxu0
    %327 = vmatprep.mubr.f32.mxu0 0.0
    %v328 = vand.u32 %v38, 4294901760
    %v329 = vsub.f32 %v38, %v328
    %330 = vmatmul.mubr.f32.gmra.mrb[0].mxu0 %v329
    %v331 = vpop.f32.mrb[0].mxu0
    %v332 = vadd.f32 %v238, %v331
    %v333 = vpop.f32.mrb[0].mxu0
    %334 = vmatprep.mubr.f32.mxu0 0.0
    %v335 = vand.u32 %v41, 4294901760
    %v336 = vsub.f32 %v41, %v335
    %337 = vmatmul.mubr.f32.gmra.mrb[0].mxu0 %v336
    %v338 = vpop.f32.mrb[0].mxu0
    %v339 = vadd.f32 %v244, %v338
    %v340 = vpop.f32.mrb[0].mxu0
    %341 = vdwg.mxu0
    %342 = vmatprep.subr.mxu0 0.0
    %v343 = vand.u32 %v45, 4294901760
    %344 = vmatpush1.msra.mxu0 %v343
    %345 = vmatprep.subr.mxu0 0.0
    %346 = vmatpush1.msra.mxu0 0.0
    %347 = vmatprep.subr.mxu0 0.0
    %348 = vmatpush1.msra.mxu0 0.0
    %349 = vmatprep.subr.mxu0 0.0
    %350 = vmatpush1.msra.mxu0 0.0
    %351 = vmatprep.subr.mxu0 0.0
    %352 = vmatpush1.msra.mxu0 0.0
    %353 = vmatprep.subr.mxu0 0.0
    %354 = vmatpush1.msra.mxu0 0.0
    %355 = vmatprep.subr.mxu0 0.0
    %356 = vmatpush1.msra.mxu0 0.0
    %357 = vmatprep.subr.mxu0 0.0
    %358 = vmatpush1.msra.mxu0 0.0
    %359 = vmatprep.subr.mxu0 0.0
    %360 = vmatpush1.msra.mxu0 0.0
    %361 = vmatprep.subr.mxu0 0.0
    %362 = vmatpush1.msra.mxu0 0.0
    %363 = vmatprep.subr.mxu0 0.0
    %364 = vmatpush1.msra.mxu0 0.0
    %365 = vmatprep.subr.mxu0 0.0
    %366 = vmatpush1.msra.mxu0 0.0
    %367 = vmatprep.subr.mxu0 0.0
    %368 = vmatpush1.msra.mxu0 0.0
    %369 = vmatprep.subr.mxu0 0.0
    %370 = vmatpush1.msra.mxu0 0.0
    %371 = vmatprep.subr.mxu0 0.0
    %372 = vmatpush1.msra.mxu0 0.0
    %373 = vmatprep.subr.mxu0 0.0
    %374 = vmatpush1.msra.mxu0 0.0
    %375 = vmatprep.subr.mxu0 0.0
    %376 = vmatpush1.msra.mxu0 0.0
    %377 = vmatprep.subr.mxu0 0.0
    %378 = vmatpush1.msra.mxu0 0.0
    %379 = vmatprep.subr.mxu0 0.0
    %380 = vmatpush1.msra.mxu0 0.0
    %381 = vmatprep.subr.mxu0 0.0
    %382 = vmatpush1.msra.mxu0 0.0
    %383 = vmatprep.subr.mxu0 0.0
    %384 = vmatpush1.msra.mxu0 0.0
    %385 = vmatprep.subr.mxu0 0.0
    %386 = vmatpush1.msra.mxu0 0.0
    %387 = vmatprep.subr.mxu0 0.0
    %388 = vmatpush1.msra.mxu0 0.0
    %389 = vmatprep.subr.mxu0 0.0
    %390 = vmatpush1.msra.mxu0 0.0
    %391 = vmatprep.subr.mxu0 0.0
    %392 = vmatpush1.msra.mxu0 0.0
    %393 = vmatprep.subr.mxu0 0.0
    %394 = vmatpush1.msra.mxu0 0.0
    %395 = vmatprep.subr.mxu0 0.0
    %396 = vmatpush1.msra.mxu0 0.0
    %397 = vmatprep.subr.mxu0 0.0
    %398 = vmatpush1.msra.mxu0 0.0
    %399 = vmatprep.subr.mxu0 0.0
    %400 = vmatpush1.msra.mxu0 0.0
    %401 = vmatprep.subr.mxu0 0.0
    %402 = vmatpush1.msra.mxu0 0.0
    %403 = vmatprep.subr.mxu0 0.0
    %404 = vmatpush1.msra.mxu0 0.0
    %405 = vmatprep.subr.mxu0 0.0
    %406 = vmatpush1.msra.mxu0 0.0
    %407 = vmatprep.mubr.f32.mxu0 0.0
    %v408 = vand.u32 %v32, 4294901760
    %v409 = vsub.f32 %v32, %v408
    %v410 = vand.u32 %v409, 4294901760
    %411 = vmatmul.mubr.f32.gmra.mrb[0].mxu0 %v410
    %v412 = vpop.f32.mrb[0].mxu0
    %v413 = vadd.f32 %v318, %v412
    %v414 = vpop.f32.mrb[0].mxu0
    %415 = vmatprep.mubr.f32.mxu0 0.0
    %v416 = vand.u32 %v35, 4294901760
    %v417 = vsub.f32 %v35, %v416
    %v418 = vand.u32 %v417, 4294901760
    %419 = vmatmul.mubr.f32.gmra.mrb[0].mxu0 %v418
    %v420 = vpop.f32.mrb[0].mxu0
    %v421 = vadd.f32 %v325, %v420
    %v422 = vpop.f32.mrb[0].mxu0
    %423 = vmatprep.mubr.f32.mxu0 0.0
    %v424 = vand.u32 %v38, 4294901760
    %v425 = vsub.f32 %v38, %v424
    %v426 = vand.u32 %v425, 4294901760
    %427 = vmatmul.mubr.f32.gmra.mrb[0].mxu0 %v426
    %v428 = vpop.f32.mrb[0].mxu0
    %v429 = vadd.f32 %v332, %v428
    %v430 = vpop.f32.mrb[0].mxu0
    %431 = vmatprep.mubr.f32.mxu0 0.0
    %v432 = vand.u32 %v41, 4294901760
    %v433 = vsub.f32 %v41, %v432
    %v434 = vand.u32 %v433, 4294901760
    %435 = vmatmul.mubr.f32.gmra.mrb[0].mxu0 %v434
    %v436 = vpop.f32.mrb[0].mxu0
    %v437 = vadd.f32 %v339, %v436
    %v438 = vpop.f32.mrb[0].mxu0
    %439 = vdwg.mxu0
    %440 = vmatprep.subr.mxu0 0.0
    %v441 = vand.u32 %v45, 4294901760
    %v442 = vsub.f32 %v45, %v441
    %v443 = vand.u32 %v442, 4294901760
    %444 = vmatpush1.msra.mxu0 %v443
    %445 = vmatprep.subr.mxu0 0.0
    %446 = vmatpush1.msra.mxu0 0.0
    %447 = vmatprep.subr.mxu0 0.0
    %448 = vmatpush1.msra.mxu0 0.0
    %449 = vmatprep.subr.mxu0 0.0
    %450 = vmatpush1.msra.mxu0 0.0
    %451 = vmatprep.subr.mxu0 0.0
    %452 = vmatpush1.msra.mxu0 0.0
    %453 = vmatprep.subr.mxu0 0.0
    %454 = vmatpush1.msra.mxu0 0.0
    %455 = vmatprep.subr.mxu0 0.0
    %456 = vmatpush1.msra.mxu0 0.0
    %457 = vmatprep.subr.mxu0 0.0
    %458 = vmatpush1.msra.mxu0 0.0
    %459 = vmatprep.subr.mxu0 0.0
    %460 = vmatpush1.msra.mxu0 0.0
    %461 = vmatprep.subr.mxu0 0.0
    %462 = vmatpush1.msra.mxu0 0.0
    %463 = vmatprep.subr.mxu0 0.0
    %464 = vmatpush1.msra.mxu0 0.0
    %465 = vmatprep.subr.mxu0 0.0
    %466 = vmatpush1.msra.mxu0 0.0
    %467 = vmatprep.subr.mxu0 0.0
    %468 = vmatpush1.msra.mxu0 0.0
    %469 = vmatprep.subr.mxu0 0.0
    %470 = vmatpush1.msra.mxu0 0.0
    %471 = vmatprep.subr.mxu0 0.0
    %472 = vmatpush1.msra.mxu0 0.0
    %473 = vmatprep.subr.mxu0 0.0
    %474 = vmatpush1.msra.mxu0 0.0
    %475 = vmatprep.subr.mxu0 0.0
    %476 = vmatpush1.msra.mxu0 0.0
    %477 = vmatprep.subr.mxu0 0.0
    %478 = vmatpush1.msra.mxu0 0.0
    %479 = vmatprep.subr.mxu0 0.0
    %480 = vmatpush1.msra.mxu0 0.0
    %481 = vmatprep.subr.mxu0 0.0
    %482 = vmatpush1.msra.mxu0 0.0
    %483 = vmatprep.subr.mxu0 0.0
    %484 = vmatpush1.msra.mxu0 0.0
    %485 = vmatprep.subr.mxu0 0.0
    %486 = vmatpush1.msra.mxu0 0.0
    %487 = vmatprep.subr.mxu0 0.0
    %488 = vmatpush1.msra.mxu0 0.0
    %489 = vmatprep.subr.mxu0 0.0
    %490 = vmatpush1.msra.mxu0 0.0
    %491 = vmatprep.subr.mxu0 0.0
    %492 = vmatpush1.msra.mxu0 0.0
    %493 = vmatprep.subr.mxu0 0.0
    %494 = vmatpush1.msra.mxu0 0.0
    %495 = vmatprep.subr.mxu0 0.0
    %496 = vmatpush1.msra.mxu0 0.0
    %497 = vmatprep.subr.mxu0 0.0
    %498 = vmatpush1.msra.mxu0 0.0
    %499 = vmatprep.subr.mxu0 0.0
    %500 = vmatpush1.msra.mxu0 0.0
    %501 = vmatprep.subr.mxu0 0.0
    %502 = vmatpush1.msra.mxu0 0.0
    %503 = vmatprep.subr.mxu0 0.0
    %504 = vmatpush1.msra.mxu0 0.0
    %505 = vmatprep.subr.mxu0 0.0
    %506 = vmatpush1.msra.mxu0 0.0
    %507 = vmatprep.mubr.f32.mxu0 0.0
    %v508 = vand.u32 %v32, 4294901760
    %509 = vmatmul.mubr.f32.gmra.mrb[0].mxu0 %v508
    %v510 = vpop.f32.mrb[0].mxu0
    %v511 = vadd.f32 %v413, %v510
    %v512 = vpop.f32.mrb[0].mxu0
    %513 = vmatprep.mubr.f32.mxu0 0.0
    %v514 = vand.u32 %v35, 4294901760
    %515 = vmatmul.mubr.f32.gmra.mrb[0].mxu0 %v514
    %v516 = vpop.f32.mrb[0].mxu0
    %v517 = vadd.f32 %v421, %v516
    %v518 = vpop.f32.mrb[0].mxu0
    %519 = vmatprep.mubr.f32.mxu0 0.0
    %v520 = vand.u32 %v38, 4294901760
    %521 = vmatmul.mubr.f32.gmra.mrb[0].mxu0 %v520
    %v522 = vpop.f32.mrb[0].mxu0
    %v523 = vadd.f32 %v429, %v522
    %v524 = vpop.f32.mrb[0].mxu0
    %525 = vmatprep.mubr.f32.mxu0 0.0
    %v526 = vand.u32 %v41, 4294901760
    %527 = vmatmul.mubr.f32.gmra.mrb[0].mxu0 %v526
    %v528 = vpop.f32.mrb[0].mxu0
    %v529 = vadd.f32 %v437, %v528
    %v530 = vpop.f32.mrb[0].mxu0
    %531 = vdwg.mxu0
    %532 = vmatprep.subr.mxu0 0.0
    %v533 = vand.u32 %v45, 4294901760
    %534 = vmatpush1.msra.mxu0 %v533
    %535 = vmatprep.subr.mxu0 0.0
    %536 = vmatpush1.msra.mxu0 0.0
    %537 = vmatprep.subr.mxu0 0.0
    %538 = vmatpush1.msra.mxu0 0.0
    %539 = vmatprep.subr.mxu0 0.0
    %540 = vmatpush1.msra.mxu0 0.0
    %541 = vmatprep.subr.mxu0 0.0
    %542 = vmatpush1.msra.mxu0 0.0
    %543 = vmatprep.subr.mxu0 0.0
    %544 = vmatpush1.msra.mxu0 0.0
    %545 = vmatprep.subr.mxu0 0.0
    %546 = vmatpush1.msra.mxu0 0.0
    %547 = vmatprep.subr.mxu0 0.0
    %548 = vmatpush1.msra.mxu0 0.0
    %549 = vmatprep.subr.mxu0 0.0
    %550 = vmatpush1.msra.mxu0 0.0
    %551 = vmatprep.subr.mxu0 0.0
    %552 = vmatpush1.msra.mxu0 0.0
    %553 = vmatprep.subr.mxu0 0.0
    %554 = vmatpush1.msra.mxu0 0.0
    %555 = vmatprep.subr.mxu0 0.0
    %556 = vmatpush1.msra.mxu0 0.0
    %557 = vmatprep.subr.mxu0 0.0
    %558 = vmatpush1.msra.mxu0 0.0
    %559 = vmatprep.subr.mxu0 0.0
    %560 = vmatpush1.msra.mxu0 0.0
    %561 = vmatprep.subr.mxu0 0.0
    %562 = vmatpush1.msra.mxu0 0.0
    %563 = vmatprep.subr.mxu0 0.0
    %564 = vmatpush1.msra.mxu0 0.0
    %565 = vmatprep.subr.mxu0 0.0
    %566 = vmatpush1.msra.mxu0 0.0
    %567 = vmatprep.subr.mxu0 0.0
    %568 = vmatpush1.msra.mxu0 0.0
    %569 = vmatprep.subr.mxu0 0.0
    %570 = vmatpush1.msra.mxu0 0.0
    %571 = vmatprep.subr.mxu0 0.0
    %572 = vmatpush1.msra.mxu0 0.0
    %573 = vmatprep.subr.mxu0 0.0
    %574 = vmatpush1.msra.mxu0 0.0
    %575 = vmatprep.subr.mxu0 0.0
    %576 = vmatpush1.msra.mxu0 0.0
    %577 = vmatprep.subr.mxu0 0.0
    %578 = vmatpush1.msra.mxu0 0.0
    %579 = vmatprep.subr.mxu0 0.0
    %580 = vmatpush1.msra.mxu0 0.0
    %581 = vmatprep.subr.mxu0 0.0
    %582 = vmatpush1.msra.mxu0 0.0
    %583 = vmatprep.subr.mxu0 0.0
    %584 = vmatpush1.msra.mxu0 0.0
    %585 = vmatprep.subr.mxu0 0.0
    %586 = vmatpush1.msra.mxu0 0.0
    %587 = vmatprep.subr.mxu0 0.0
    %588 = vmatpush1.msra.mxu0 0.0
    %589 = vmatprep.subr.mxu0 0.0
    %590 = vmatpush1.msra.mxu0 0.0
    %591 = vmatprep.subr.mxu0 0.0
    %592 = vmatpush1.msra.mxu0 0.0
    %593 = vmatprep.subr.mxu0 0.0
    %594 = vmatpush1.msra.mxu0 0.0
    %595 = vmatprep.subr.mxu0 0.0
    %596 = vmatpush1.msra.mxu0 0.0
    %597 = vmatprep.mubr.f32.mxu0 0.0
    %v598 = vand.u32 %v32, 4294901760
    %599 = vmatmul.mubr.f32.gmra.mrb[0].mxu0 %v598
    %v600 = vpop.f32.mrb[0].mxu0
    %v601 = vadd.f32 %v511, %v600
    %v602 = vpop.f32.mrb[0].mxu0
    %603 = vmatprep.mubr.f32.mxu0 0.0
    %v604 = vand.u32 %v35, 4294901760
    %605 = vmatmul.mubr.f32.gmra.mrb[0].mxu0 %v604
    %v606 = vpop.f32.mrb[0].mxu0
    %v607 = vadd.f32 %v517, %v606
    %v608 = vpop.f32.mrb[0].mxu0
    %609 = vmatprep.mubr.f32.mxu0 0.0
    %v610 = vand.u32 %v38, 4294901760
    %611 = vmatmul.mubr.f32.gmra.mrb[0].mxu0 %v610
    %v612 = vpop.f32.mrb[0].mxu0
    %v613 = vadd.f32 %v523, %v612
    %v614 = vpop.f32.mrb[0].mxu0
    %615 = vmatprep.mubr.f32.mxu0 0.0
    %v616 = vand.u32 %v41, 4294901760
    %617 = vmatmul.mubr.f32.gmra.mrb[0].mxu0 %v616
    %v618 = vpop.f32.mrb[0].mxu0
    %v619 = vadd.f32 %v529, %v618
    %v620 = vpop.f32.mrb[0].mxu0
    %621 = vdwg.mxu0
    %v622 = vld [vmem:[#allocation2 + $0x28] sm:$0xff]
    %v623 = vld [vmem:[#allocation2 + $0x30] sm:$0xff]
    %v624 = vld [vmem:[#allocation2 + $0x38] sm:$0xff]
    %v625 = vld [vmem:[#allocation2 + $0x40] sm:$0xff]
    %vm626 = vcmask 261120
    %v628 = vsel %vm626, %v601, 0
    %630 = vmatprep.subr.mxu0 0.0
    %v631 = vand.u32 %v622, 4294901760
    %632 = vmatpush1.msra.mxu0 %v631
    %633 = vmatprep.subr.mxu0 0.0
    %v634 = vand.u32 %v623, 4294901760
    %635 = vmatpush1.msra.mxu0 %v634
    %636 = vmatprep.subr.mxu0 0.0
    %v637 = vand.u32 %v624, 4294901760
    %638 = vmatpush1.msra.mxu0 %v637
    %639 = vmatprep.subr.mxu0 0.0
    %v640 = vand.u32 %v625, 4294901760
    %641 = vmatpush1.msra.mxu0 %v640
    %642 = vmatprep.subr.mxu0 0.0
    %643 = vmatpush1.msra.mxu0 0.0
    %644 = vmatprep.subr.mxu0 0.0
    %645 = vmatpush1.msra.mxu0 0.0
    %646 = vmatprep.subr.mxu0 0.0
    %647 = vmatpush1.msra.mxu0 0.0
    %648 = vmatprep.subr.mxu0 0.0
    %649 = vmatpush1.msra.mxu0 0.0
    %650 = vmatprep.subr.mxu0 0.0
    %651 = vmatpush1.msra.mxu0 0.0
    %652 = vmatprep.subr.mxu0 0.0
    %653 = vmatpush1.msra.mxu0 0.0
    %654 = vmatprep.subr.mxu0 0.0
    %655 = vmatpush1.msra.mxu0 0.0
    %656 = vmatprep.subr.mxu0 0.0
    %657 = vmatpush1.msra.mxu0 0.0
    %658 = vmatprep.subr.mxu0 0.0
    %659 = vmatpush1.msra.mxu0 0.0
    %660 = vmatprep.subr.mxu0 0.0
    %661 = vmatpush1.msra.mxu0 0.0
    %662 = vmatprep.subr.mxu0 0.0
    %663 = vmatpush1.msra.mxu0 0.0
    %664 = vmatprep.subr.mxu0 0.0
    %665 = vmatpush1.msra.mxu0 0.0
    %666 = vmatprep.subr.mxu0 0.0
    %667 = vmatpush1.msra.mxu0 0.0
    %668 = vmatprep.subr.mxu0 0.0
    %669 = vmatpush1.msra.mxu0 0.0
    %670 = vmatprep.subr.mxu0 0.0
    %671 = vmatpush1.msra.mxu0 0.0
    %672 = vmatprep.subr.mxu0 0.0
    %673 = vmatpush1.msra.mxu0 0.0
    %674 = vmatprep.subr.mxu0 0.0
    %675 = vmatpush1.msra.mxu0 0.0
    %676 = vmatprep.subr.mxu0 0.0
    %677 = vmatpush1.msra.mxu0 0.0
    %678 = vmatprep.subr.mxu0 0.0
    %679 = vmatpush1.msra.mxu0 0.0
    %680 = vmatprep.subr.mxu0 0.0
    %681 = vmatpush1.msra.mxu0 0.0
    %682 = vmatprep.subr.mxu0 0.0
    %683 = vmatpush1.msra.mxu0 0.0
    %684 = vmatprep.subr.mxu0 0.0
    %685 = vmatpush1.msra.mxu0 0.0
    %686 = vmatprep.subr.mxu0 0.0
    %687 = vmatpush1.msra.mxu0 0.0
    %688 = vmatprep.subr.mxu0 0.0
    %689 = vmatpush1.msra.mxu0 0.0
    %690 = vmatprep.subr.mxu0 0.0
    %691 = vmatpush1.msra.mxu0 0.0
    %692 = vmatprep.subr.mxu0 0.0
    %693 = vmatpush1.msra.mxu0 0.0
    %694 = vmatprep.subr.mxu0 0.0
    %695 = vmatpush1.msra.mxu0 0.0
    %696 = vmatprep.subr.mxu0 0.0
    %697 = vmatpush1.msra.mxu0 0.0
    %698 = vmatprep.mubr.f32.mxu0 0.0
    %v699 = vand.u32 %v628, 4294901760
    %v700 = vsub.f32 %v628, %v699
    %v701 = vand.u32 %v700, 4294901760
    %v702 = vsub.f32 %v700, %v701
    %v703 = vand.u32 %v702, 4294901760
    %704 = vmatmul.mubr.f32.gmra.mrb[0].mxu0 %v703
    %v705 = vpop.f32.mrb[0].mxu0
    %v706 = vadd.f32 %v607, %v705
    %v707 = vpop.f32.mrb[0].mxu0
    %708 = vdwg.mxu0
    %709 = vmatprep.subr.mxu0 0.0
    %v710 = vand.u32 %v622, 4294901760
    %v711 = vsub.f32 %v622, %v710
    %v712 = vand.u32 %v711, 4294901760
    %v713 = vsub.f32 %v711, %v712
    %v714 = vand.u32 %v713, 4294901760
    %715 = vmatpush1.msra.mxu0 %v714
    %716 = vmatprep.subr.mxu0 0.0
    %v717 = vand.u32 %v623, 4294901760
    %v718 = vsub.f32 %v623, %v717
    %v719 = vand.u32 %v718, 4294901760
    %v720 = vsub.f32 %v718, %v719
    %v721 = vand.u32 %v720, 4294901760
    %722 = vmatpush1.msra.mxu0 %v721
    %723 = vmatprep.subr.mxu0 0.0
    %v724 = vand.u32 %v624, 4294901760
    %v725 = vsub.f32 %v624, %v724
    %v726 = vand.u32 %v725, 4294901760
    %v727 = vsub.f32 %v725, %v726
    %v728 = vand.u32 %v727, 4294901760
    %729 = vmatpush1.msra.mxu0 %v728
    %730 = vmatprep.subr.mxu0 0.0
    %v731 = vand.u32 %v625, 4294901760
    %v732 = vsub.f32 %v625, %v731
    %v733 = vand.u32 %v732, 4294901760
    %v734 = vsub.f32 %v732, %v733
    %v735 = vand.u32 %v734, 4294901760
    %736 = vmatpush1.msra.mxu0 %v735
    %737 = vmatprep.subr.mxu0 0.0
    %738 = vmatpush1.msra.mxu0 0.0
    %739 = vmatprep.subr.mxu0 0.0
    %740 = vmatpush1.msra.mxu0 0.0
    %741 = vmatprep.subr.mxu0 0.0
    %742 = vmatpush1.msra.mxu0 0.0
    %743 = vmatprep.subr.mxu0 0.0
    %744 = vmatpush1.msra.mxu0 0.0
    %745 = vmatprep.subr.mxu0 0.0
    %746 = vmatpush1.msra.mxu0 0.0
    %747 = vmatprep.subr.mxu0 0.0
    %748 = vmatpush1.msra.mxu0 0.0
    %749 = vmatprep.subr.mxu0 0.0
    %750 = vmatpush1.msra.mxu0 0.0
    %751 = vmatprep.subr.mxu0 0.0
    %752 = vmatpush1.msra.mxu0 0.0
    %753 = vmatprep.subr.mxu0 0.0
    %754 = vmatpush1.msra.mxu0 0.0
    %755 = vmatprep.subr.mxu0 0.0
    %756 = vmatpush1.msra.mxu0 0.0
    %757 = vmatprep.subr.mxu0 0.0
    %758 = vmatpush1.msra.mxu0 0.0
    %759 = vmatprep.subr.mxu0 0.0
    %760 = vmatpush1.msra.mxu0 0.0
    %761 = vmatprep.subr.mxu0 0.0
    %762 = vmatpush1.msra.mxu0 0.0
    %763 = vmatprep.subr.mxu0 0.0
    %764 = vmatpush1.msra.mxu0 0.0
    %765 = vmatprep.subr.mxu0 0.0
    %766 = vmatpush1.msra.mxu0 0.0
    %767 = vmatprep.subr.mxu0 0.0
    %768 = vmatpush1.msra.mxu0 0.0
    %769 = vmatprep.subr.mxu0 0.0
    %770 = vmatpush1.msra.mxu0 0.0
    %771 = vmatprep.subr.mxu0 0.0
    %772 = vmatpush1.msra.mxu0 0.0
    %773 = vmatprep.subr.mxu0 0.0
    %774 = vmatpush1.msra.mxu0 0.0
    %775 = vmatprep.subr.mxu0 0.0
    %776 = vmatpush1.msra.mxu0 0.0
    %777 = vmatprep.subr.mxu0 0.0
    %778 = vmatpush1.msra.mxu0 0.0
    %779 = vmatprep.subr.mxu0 0.0
    %780 = vmatpush1.msra.mxu0 0.0
    %781 = vmatprep.subr.mxu0 0.0
    %782 = vmatpush1.msra.mxu0 0.0
    %783 = vmatprep.subr.mxu0 0.0
    %784 = vmatpush1.msra.mxu0 0.0
    %785 = vmatprep.subr.mxu0 0.0
    %786 = vmatpush1.msra.mxu0 0.0
    %787 = vmatprep.subr.mxu0 0.0
    %788 = vmatpush1.msra.mxu0 0.0
    %789 = vmatprep.subr.mxu0 0.0
    %790 = vmatpush1.msra.mxu0 0.0
    %791 = vmatprep.subr.mxu0 0.0
    %792 = vmatpush1.msra.mxu0 0.0
    %793 = vmatprep.mubr.f32.mxu0 0.0
    %v794 = vand.u32 %v628, 4294901760
    %795 = vmatmul.mubr.f32.gmra.mrb[0].mxu0 %v794
    %v796 = vpop.f32.mrb[0].mxu0
    %v797 = vadd.f32 %v706, %v796
    %v798 = vpop.f32.mrb[0].mxu0
    %799 = vdwg.mxu0
    %800 = vmatprep.subr.mxu0 0.0
    %v801 = vand.u32 %v622, 4294901760
    %v802 = vsub.f32 %v622, %v801
    %803 = vmatpush1.msra.mxu0 %v802
    %804 = vmatprep.subr.mxu0 0.0
    %v805 = vand.u32 %v623, 4294901760
    %v806 = vsub.f32 %v623, %v805
    %807 = vmatpush1.msra.mxu0 %v806
    %808 = vmatprep.subr.mxu0 0.0
    %v809 = vand.u32 %v624, 4294901760
    %v810 = vsub.f32 %v624, %v809
    %811 = vmatpush1.msra.mxu0 %v810
    %812 = vmatprep.subr.mxu0 0.0
    %v813 = vand.u32 %v625, 4294901760
    %v814 = vsub.f32 %v625, %v813
    %815 = vmatpush1.msra.mxu0 %v814
    %816 = vmatprep.subr.mxu0 0.0
    %817 = vmatpush1.msra.mxu0 0.0
    %818 = vmatprep.subr.mxu0 0.0
    %819 = vmatpush1.msra.mxu0 0.0
    %820 = vmatprep.subr.mxu0 0.0
    %821 = vmatpush1.msra.mxu0 0.0
    %822 = vmatprep.subr.mxu0 0.0
    %823 = vmatpush1.msra.mxu0 0.0
    %824 = vmatprep.subr.mxu0 0.0
    %825 = vmatpush1.msra.mxu0 0.0
    %826 = vmatprep.subr.mxu0 0.0
    %827 = vmatpush1.msra.mxu0 0.0
    %828 = vmatprep.subr.mxu0 0.0
    %829 = vmatpush1.msra.mxu0 0.0
    %830 = vmatprep.subr.mxu0 0.0
    %831 = vmatpush1.msra.mxu0 0.0
    %832 = vmatprep.subr.mxu0 0.0
    %833 = vmatpush1.msra.mxu0 0.0
    %834 = vmatprep.subr.mxu0 0.0
    %835 = vmatpush1.msra.mxu0 0.0
    %836 = vmatprep.subr.mxu0 0.0
    %837 = vmatpush1.msra.mxu0 0.0
    %838 = vmatprep.subr.mxu0 0.0
    %839 = vmatpush1.msra.mxu0 0.0
    %840 = vmatprep.subr.mxu0 0.0
    %841 = vmatpush1.msra.mxu0 0.0
    %842 = vmatprep.subr.mxu0 0.0
    %843 = vmatpush1.msra.mxu0 0.0
    %844 = vmatprep.subr.mxu0 0.0
    %845 = vmatpush1.msra.mxu0 0.0
    %846 = vmatprep.subr.mxu0 0.0
    %847 = vmatpush1.msra.mxu0 0.0
    %848 = vmatprep.subr.mxu0 0.0
    %849 = vmatpush1.msra.mxu0 0.0
    %850 = vmatprep.subr.mxu0 0.0
    %851 = vmatpush1.msra.mxu0 0.0
    %852 = vmatprep.subr.mxu0 0.0
    %853 = vmatpush1.msra.mxu0 0.0
    %854 = vmatprep.subr.mxu0 0.0
    %855 = vmatpush1.msra.mxu0 0.0
    %856 = vmatprep.subr.mxu0 0.0
    %857 = vmatpush1.msra.mxu0 0.0
    %858 = vmatprep.subr.mxu0 0.0
    %859 = vmatpush1.msra.mxu0 0.0
    %860 = vmatprep.subr.mxu0 0.0
    %861 = vmatpush1.msra.mxu0 0.0
    %862 = vmatprep.subr.mxu0 0.0
    %863 = vmatpush1.msra.mxu0 0.0
    %864 = vmatprep.subr.mxu0 0.0
    %865 = vmatpush1.msra.mxu0 0.0
    %866 = vmatprep.subr.mxu0 0.0
    %867 = vmatpush1.msra.mxu0 0.0
    %868 = vmatprep.subr.mxu0 0.0
    %869 = vmatpush1.msra.mxu0 0.0
    %870 = vmatprep.subr.mxu0 0.0
    %871 = vmatpush1.msra.mxu0 0.0
    %872 = vmatprep.mubr.f32.mxu0 0.0
    %v873 = vand.u32 %v628, 4294901760
    %v874 = vsub.f32 %v628, %v873
    %875 = vmatmul.mubr.f32.gmra.mrb[0].mxu0 %v874
    %v876 = vpop.f32.mrb[0].mxu0
    %v877 = vadd.f32 %v797, %v876
    %v878 = vpop.f32.mrb[0].mxu0
    %879 = vdwg.mxu0
    %880 = vmatprep.subr.mxu0 0.0
    %v881 = vand.u32 %v622, 4294901760
    %882 = vmatpush1.msra.mxu0 %v881
    %883 = vmatprep.subr.mxu0 0.0
    %v884 = vand.u32 %v623, 4294901760
    %885 = vmatpush1.msra.mxu0 %v884
    %886 = vmatprep.subr.mxu0 0.0
    %v887 = vand.u32 %v624, 4294901760
    %888 = vmatpush1.msra.mxu0 %v887
    %889 = vmatprep.subr.mxu0 0.0
    %v890 = vand.u32 %v625, 4294901760
    %891 = vmatpush1.msra.mxu0 %v890
    %892 = vmatprep.subr.mxu0 0.0
    %893 = vmatpush1.msra.mxu0 0.0
    %894 = vmatprep.subr.mxu0 0.0
    %895 = vmatpush1.msra.mxu0 0.0
    %896 = vmatprep.subr.mxu0 0.0
    %897 = vmatpush1.msra.mxu0 0.0
    %898 = vmatprep.subr.mxu0 0.0
    %899 = vmatpush1.msra.mxu0 0.0
    %900 = vmatprep.subr.mxu0 0.0
    %901 = vmatpush1.msra.mxu0 0.0
    %902 = vmatprep.subr.mxu0 0.0
    %903 = vmatpush1.msra.mxu0 0.0
    %904 = vmatprep.subr.mxu0 0.0
    %905 = vmatpush1.msra.mxu0 0.0
    %906 = vmatprep.subr.mxu0 0.0
    %907 = vmatpush1.msra.mxu0 0.0
    %908 = vmatprep.subr.mxu0 0.0
    %909 = vmatpush1.msra.mxu0 0.0
    %910 = vmatprep.subr.mxu0 0.0
    %911 = vmatpush1.msra.mxu0 0.0
    %912 = vmatprep.subr.mxu0 0.0
    %913 = vmatpush1.msra.mxu0 0.0
    %914 = vmatprep.subr.mxu0 0.0
    %915 = vmatpush1.msra.mxu0 0.0
    %916 = vmatprep.subr.mxu0 0.0
    %917 = vmatpush1.msra.mxu0 0.0
    %918 = vmatprep.subr.mxu0 0.0
    %919 = vmatpush1.msra.mxu0 0.0
    %920 = vmatprep.subr.mxu0 0.0
    %921 = vmatpush1.msra.mxu0 0.0
    %922 = vmatprep.subr.mxu0 0.0
    %923 = vmatpush1.msra.mxu0 0.0
    %924 = vmatprep.subr.mxu0 0.0
    %925 = vmatpush1.msra.mxu0 0.0
    %926 = vmatprep.subr.mxu0 0.0
    %927 = vmatpush1.msra.mxu0 0.0
    %928 = vmatprep.subr.mxu0 0.0
    %929 = vmatpush1.msra.mxu0 0.0
    %930 = vmatprep.subr.mxu0 0.0
    %931 = vmatpush1.msra.mxu0 0.0
    %932 = vmatprep.subr.mxu0 0.0
    %933 = vmatpush1.msra.mxu0 0.0
    %934 = vmatprep.subr.mxu0 0.0
    %935 = vmatpush1.msra.mxu0 0.0
    %936 = vmatprep.subr.mxu0 0.0
    %937 = vmatpush1.msra.mxu0 0.0
    %938 = vmatprep.subr.mxu0 0.0
    %939 = vmatpush1.msra.mxu0 0.0
    %940 = vmatprep.subr.mxu0 0.0
    %941 = vmatpush1.msra.mxu0 0.0
    %942 = vmatprep.subr.mxu0 0.0
    %943 = vmatpush1.msra.mxu0 0.0
    %944 = vmatprep.subr.mxu0 0.0
    %945 = vmatpush1.msra.mxu0 0.0
    %946 = vmatprep.subr.mxu0 0.0
    %947 = vmatpush1.msra.mxu0 0.0
    %948 = vmatprep.mubr.f32.mxu0 0.0
    %v949 = vand.u32 %v628, 4294901760
    %v950 = vsub.f32 %v628, %v949
    %v951 = vand.u32 %v950, 4294901760
    %952 = vmatmul.mubr.f32.gmra.mrb[0].mxu0 %v951
    %v953 = vpop.f32.mrb[0].mxu0
    %v954 = vadd.f32 %v877, %v953
    %v955 = vpop.f32.mrb[0].mxu0
    %956 = vdwg.mxu0
    %957 = vmatprep.subr.mxu0 0.0
    %v958 = vand.u32 %v622, 4294901760
    %v959 = vsub.f32 %v622, %v958
    %v960 = vand.u32 %v959, 4294901760
    %961 = vmatpush1.msra.mxu0 %v960
    %962 = vmatprep.subr.mxu0 0.0
    %v963 = vand.u32 %v623, 4294901760
    %v964 = vsub.f32 %v623, %v963
    %v965 = vand.u32 %v964, 4294901760
    %966 = vmatpush1.msra.mxu0 %v965
    %967 = vmatprep.subr.mxu0 0.0
    %v968 = vand.u32 %v624, 4294901760
    %v969 = vsub.f32 %v624, %v968
    %v970 = vand.u32 %v969, 4294901760
    %971 = vmatpush1.msra.mxu0 %v970
    %972 = vmatprep.subr.mxu0 0.0
    %v973 = vand.u32 %v625, 4294901760
    %v974 = vsub.f32 %v625, %v973
    %v975 = vand.u32 %v974, 4294901760
    %976 = vmatpush1.msra.mxu0 %v975
    %977 = vmatprep.subr.mxu0 0.0
    %978 = vmatpush1.msra.mxu0 0.0
    %979 = vmatprep.subr.mxu0 0.0
    %980 = vmatpush1.msra.mxu0 0.0
    %981 = vmatprep.subr.mxu0 0.0
    %982 = vmatpush1.msra.mxu0 0.0
    %983 = vmatprep.subr.mxu0 0.0
    %984 = vmatpush1.msra.mxu0 0.0
    %985 = vmatprep.subr.mxu0 0.0
    %986 = vmatpush1.msra.mxu0 0.0
    %987 = vmatprep.subr.mxu0 0.0
    %988 = vmatpush1.msra.mxu0 0.0
    %989 = vmatprep.subr.mxu0 0.0
    %990 = vmatpush1.msra.mxu0 0.0
    %991 = vmatprep.subr.mxu0 0.0
    %992 = vmatpush1.msra.mxu0 0.0
    %993 = vmatprep.subr.mxu0 0.0
    %994 = vmatpush1.msra.mxu0 0.0
    %995 = vmatprep.subr.mxu0 0.0
    %996 = vmatpush1.msra.mxu0 0.0
    %997 = vmatprep.subr.mxu0 0.0
    %998 = vmatpush1.msra.mxu0 0.0
    %999 = vmatprep.subr.mxu0 0.0
    %1000 = vmatpush1.msra.mxu0 0.0
    %1001 = vmatprep.subr.mxu0 0.0
    %1002 = vmatpush1.msra.mxu0 0.0
    %1003 = vmatprep.subr.mxu0 0.0
    %1004 = vmatpush1.msra.mxu0 0.0
    %1005 = vmatprep.subr.mxu0 0.0
    %1006 = vmatpush1.msra.mxu0 0.0
    %1007 = vmatprep.subr.mxu0 0.0
    %1008 = vmatpush1.msra.mxu0 0.0
    %1009 = vmatprep.subr.mxu0 0.0
    %1010 = vmatpush1.msra.mxu0 0.0
    %1011 = vmatprep.subr.mxu0 0.0
    %1012 = vmatpush1.msra.mxu0 0.0
    %1013 = vmatprep.subr.mxu0 0.0
    %1014 = vmatpush1.msra.mxu0 0.0
    %1015 = vmatprep.subr.mxu0 0.0
    %1016 = vmatpush1.msra.mxu0 0.0
    %1017 = vmatprep.subr.mxu0 0.0
    %1018 = vmatpush1.msra.mxu0 0.0
    %1019 = vmatprep.subr.mxu0 0.0
    %1020 = vmatpush1.msra.mxu0 0.0
    %1021 = vmatprep.subr.mxu0 0.0
    %1022 = vmatpush1.msra.mxu0 0.0
    %1023 = vmatprep.subr.mxu0 0.0
    %1024 = vmatpush1.msra.mxu0 0.0
    %1025 = vmatprep.subr.mxu0 0.0
    %1026 = vmatpush1.msra.mxu0 0.0
    %1027 = vmatprep.subr.mxu0 0.0
    %1028 = vmatpush1.msra.mxu0 0.0
    %1029 = vmatprep.subr.mxu0 0.0
    %1030 = vmatpush1.msra.mxu0 0.0
    %1031 = vmatprep.subr.mxu0 0.0
    %1032 = vmatpush1.msra.mxu0 0.0
    %1033 = vmatprep.mubr.f32.mxu0 0.0
    %v1034 = vand.u32 %v628, 4294901760
    %1035 = vmatmul.mubr.f32.gmra.mrb[0].mxu0 %v1034
    %v1036 = vpop.f32.mrb[0].mxu0
    %v1037 = vadd.f32 %v954, %v1036
    %v1038 = vpop.f32.mrb[0].mxu0
    %1039 = vdwg.mxu0
    %1040 = vmatprep.subr.mxu0 0.0
    %v1041 = vand.u32 %v622, 4294901760
    %1042 = vmatpush1.msra.mxu0 %v1041
    %1043 = vmatprep.subr.mxu0 0.0
    %v1044 = vand.u32 %v623, 4294901760
    %1045 = vmatpush1.msra.mxu0 %v1044
    %1046 = vmatprep.subr.mxu0 0.0
    %v1047 = vand.u32 %v624, 4294901760
    %1048 = vmatpush1.msra.mxu0 %v1047
    %1049 = vmatprep.subr.mxu0 0.0
    %v1050 = vand.u32 %v625, 4294901760
    %1051 = vmatpush1.msra.mxu0 %v1050
    %1052 = vmatprep.subr.mxu0 0.0
    %1053 = vmatpush1.msra.mxu0 0.0
    %1054 = vmatprep.subr.mxu0 0.0
    %1055 = vmatpush1.msra.mxu0 0.0
    %1056 = vmatprep.subr.mxu0 0.0
    %1057 = vmatpush1.msra.mxu0 0.0
    %1058 = vmatprep.subr.mxu0 0.0
    %1059 = vmatpush1.msra.mxu0 0.0
    %1060 = vmatprep.subr.mxu0 0.0
    %1061 = vmatpush1.msra.mxu0 0.0
    %1062 = vmatprep.subr.mxu0 0.0
    %1063 = vmatpush1.msra.mxu0 0.0
    %1064 = vmatprep.subr.mxu0 0.0
    %1065 = vmatpush1.msra.mxu0 0.0
    %1066 = vmatprep.subr.mxu0 0.0
    %1067 = vmatpush1.msra.mxu0 0.0
    %1068 = vmatprep.subr.mxu0 0.0
    %1069 = vmatpush1.msra.mxu0 0.0
    %1070 = vmatprep.subr.mxu0 0.0
    %1071 = vmatpush1.msra.mxu0 0.0
    %1072 = vmatprep.subr.mxu0 0.0
    %1073 = vmatpush1.msra.mxu0 0.0
    %1074 = vmatprep.subr.mxu0 0.0
    %1075 = vmatpush1.msra.mxu0 0.0
    %1076 = vmatprep.subr.mxu0 0.0
    %1077 = vmatpush1.msra.mxu0 0.0
    %1078 = vmatprep.subr.mxu0 0.0
    %1079 = vmatpush1.msra.mxu0 0.0
    %1080 = vmatprep.subr.mxu0 0.0
    %1081 = vmatpush1.msra.mxu0 0.0
    %1082 = vmatprep.subr.mxu0 0.0
    %1083 = vmatpush1.msra.mxu0 0.0
    %1084 = vmatprep.subr.mxu0 0.0
    %1085 = vmatpush1.msra.mxu0 0.0
    %1086 = vmatprep.subr.mxu0 0.0
    %1087 = vmatpush1.msra.mxu0 0.0
    %1088 = vmatprep.subr.mxu0 0.0
    %1089 = vmatpush1.msra.mxu0 0.0
    %1090 = vmatprep.subr.mxu0 0.0
    %1091 = vmatpush1.msra.mxu0 0.0
    %1092 = vmatprep.subr.mxu0 0.0
    %1093 = vmatpush1.msra.mxu0 0.0
    %1094 = vmatprep.subr.mxu0 0.0
    %1095 = vmatpush1.msra.mxu0 0.0
    %1096 = vmatprep.subr.mxu0 0.0
    %1097 = vmatpush1.msra.mxu0 0.0
    %1098 = vmatprep.subr.mxu0 0.0
    %1099 = vmatpush1.msra.mxu0 0.0
    %1100 = vmatprep.subr.mxu0 0.0
    %1101 = vmatpush1.msra.mxu0 0.0
    %1102 = vmatprep.subr.mxu0 0.0
    %1103 = vmatpush1.msra.mxu0 0.0
    %1104 = vmatprep.subr.mxu0 0.0
    %1105 = vmatpush1.msra.mxu0 0.0
    %1106 = vmatprep.subr.mxu0 0.0
    %1107 = vmatpush1.msra.mxu0 0.0
    %1108 = vmatprep.mubr.f32.mxu0 0.0
    %v1109 = vand.u32 %v628, 4294901760
    %1110 = vmatmul.mubr.f32.gmra.mrb[0].mxu0 %v1109
    %v1111 = vpop.f32.mrb[0].mxu0
    %v1112 = vadd.f32 %v1037, %v1111
    %v1113 = vpop.f32.mrb[0].mxu0
    %1114 = vdwg.mxu0
    %v1115 = vld [vmem:[#allocation2 + $0x48] sm:$0xff]
    %v1116 = vld [vmem:[#allocation2 + $0x50] sm:$0xff]
    %v1117 = vld [vmem:[#allocation2 + $0x58] sm:$0xff]
    %v1118 = vld [vmem:[#allocation2 + $0x60] sm:$0xff]
    %v1120 = vsel %vm626, %v613, 0
    %1122 = vmatprep.subr.mxu0 0.0
    %v1123 = vand.u32 %v1115, 4294901760
    %1124 = vmatpush1.msra.mxu0 %v1123
    %1125 = vmatprep.subr.mxu0 0.0
    %v1126 = vand.u32 %v1116, 4294901760
    %1127 = vmatpush1.msra.mxu0 %v1126
    %1128 = vmatprep.subr.mxu0 0.0
    %v1129 = vand.u32 %v1117, 4294901760
    %1130 = vmatpush1.msra.mxu0 %v1129
    %1131 = vmatprep.subr.mxu0 0.0
    %v1132 = vand.u32 %v1118, 4294901760
    %1133 = vmatpush1.msra.mxu0 %v1132
    %1134 = vmatprep.subr.mxu0 0.0
    %1135 = vmatpush1.msra.mxu0 0.0
    %1136 = vmatprep.subr.mxu0 0.0
    %1137 = vmatpush1.msra.mxu0 0.0
    %1138 = vmatprep.subr.mxu0 0.0
    %1139 = vmatpush1.msra.mxu0 0.0
    %1140 = vmatprep.subr.mxu0 0.0
    %1141 = vmatpush1.msra.mxu0 0.0
    %1142 = vmatprep.subr.mxu0 0.0
    %1143 = vmatpush1.msra.mxu0 0.0
    %1144 = vmatprep.subr.mxu0 0.0
    %1145 = vmatpush1.msra.mxu0 0.0
    %1146 = vmatprep.subr.mxu0 0.0
    %1147 = vmatpush1.msra.mxu0 0.0
    %1148 = vmatprep.subr.mxu0 0.0
    %1149 = vmatpush1.msra.mxu0 0.0
    %1150 = vmatprep.subr.mxu0 0.0
    %1151 = vmatpush1.msra.mxu0 0.0
    %1152 = vmatprep.subr.mxu0 0.0
    %1153 = vmatpush1.msra.mxu0 0.0
    %1154 = vmatprep.subr.mxu0 0.0
    %1155 = vmatpush1.msra.mxu0 0.0
    %1156 = vmatprep.subr.mxu0 0.0
    %1157 = vmatpush1.msra.mxu0 0.0
    %1158 = vmatprep.subr.mxu0 0.0
    %1159 = vmatpush1.msra.mxu0 0.0
    %1160 = vmatprep.subr.mxu0 0.0
    %1161 = vmatpush1.msra.mxu0 0.0
    %1162 = vmatprep.subr.mxu0 0.0
    %1163 = vmatpush1.msra.mxu0 0.0
    %1164 = vmatprep.subr.mxu0 0.0
    %1165 = vmatpush1.msra.mxu0 0.0
    %1166 = vmatprep.subr.mxu0 0.0
    %1167 = vmatpush1.msra.mxu0 0.0
    %1168 = vmatprep.subr.mxu0 0.0
    %1169 = vmatpush1.msra.mxu0 0.0
    %1170 = vmatprep.subr.mxu0 0.0
    %1171 = vmatpush1.msra.mxu0 0.0
    %1172 = vmatprep.subr.mxu0 0.0
    %1173 = vmatpush1.msra.mxu0 0.0
    %1174 = vmatprep.subr.mxu0 0.0
    %1175 = vmatpush1.msra.mxu0 0.0
    %1176 = vmatprep.subr.mxu0 0.0
    %1177 = vmatpush1.msra.mxu0 0.0
    %1178 = vmatprep.subr.mxu0 0.0
    %1179 = vmatpush1.msra.mxu0 0.0
    %1180 = vmatprep.subr.mxu0 0.0
    %1181 = vmatpush1.msra.mxu0 0.0
    %1182 = vmatprep.subr.mxu0 0.0
    %1183 = vmatpush1.msra.mxu0 0.0
    %1184 = vmatprep.subr.mxu0 0.0
    %1185 = vmatpush1.msra.mxu0 0.0
    %1186 = vmatprep.subr.mxu0 0.0
    %1187 = vmatpush1.msra.mxu0 0.0
    %1188 = vmatprep.subr.mxu0 0.0
    %1189 = vmatpush1.msra.mxu0 0.0
    %1190 = vmatprep.mubr.f32.mxu0 0.0
    %v1191 = vand.u32 %v1120, 4294901760
    %v1192 = vsub.f32 %v1120, %v1191
    %v1193 = vand.u32 %v1192, 4294901760
    %v1194 = vsub.f32 %v1192, %v1193
    %v1195 = vand.u32 %v1194, 4294901760
    %1196 = vmatmul.mubr.f32.gmra.mrb[0].mxu0 %v1195
    %v1197 = vpop.f32.mrb[0].mxu0
    %v1198 = vadd.f32 0.0, %v1197
    %v1199 = vpop.f32.mrb[0].mxu0
    %1200 = vdwg.mxu0
    %1201 = vmatprep.subr.mxu0 0.0
    %v1202 = vand.u32 %v1115, 4294901760
    %v1203 = vsub.f32 %v1115, %v1202
    %v1204 = vand.u32 %v1203, 4294901760
    %v1205 = vsub.f32 %v1203, %v1204
    %v1206 = vand.u32 %v1205, 4294901760
    %1207 = vmatpush1.msra.mxu0 %v1206
    %1208 = vmatprep.subr.mxu0 0.0
    %v1209 = vand.u32 %v1116, 4294901760
    %v1210 = vsub.f32 %v1116, %v1209
    %v1211 = vand.u32 %v1210, 4294901760
    %v1212 = vsub.f32 %v1210, %v1211
    %v1213 = vand.u32 %v1212, 4294901760
    %1214 = vmatpush1.msra.mxu0 %v1213
    %1215 = vmatprep.subr.mxu0 0.0
    %v1216 = vand.u32 %v1117, 4294901760
    %v1217 = vsub.f32 %v1117, %v1216
    %v1218 = vand.u32 %v1217, 4294901760
    %v1219 = vsub.f32 %v1217, %v1218
    %v1220 = vand.u32 %v1219, 4294901760
    %1221 = vmatpush1.msra.mxu0 %v1220
    %1222 = vmatprep.subr.mxu0 0.0
    %v1223 = vand.u32 %v1118, 4294901760
    %v1224 = vsub.f32 %v1118, %v1223
    %v1225 = vand.u32 %v1224, 4294901760
    %v1226 = vsub.f32 %v1224, %v1225
    %v1227 = vand.u32 %v1226, 4294901760
    %1228 = vmatpush1.msra.mxu0 %v1227
    %1229 = vmatprep.subr.mxu0 0.0
    %1230 = vmatpush1.msra.mxu0 0.0
    %1231 = vmatprep.subr.mxu0 0.0
    %1232 = vmatpush1.msra.mxu0 0.0
    %1233 = vmatprep.subr.mxu0 0.0
    %1234 = vmatpush1.msra.mxu0 0.0
    %1235 = vmatprep.subr.mxu0 0.0
    %1236 = vmatpush1.msra.mxu0 0.0
    %1237 = vmatprep.subr.mxu0 0.0
    %1238 = vmatpush1.msra.mxu0 0.0
    %1239 = vmatprep.subr.mxu0 0.0
    %1240 = vmatpush1.msra.mxu0 0.0
    %1241 = vmatprep.subr.mxu0 0.0
    %1242 = vmatpush1.msra.mxu0 0.0
    %1243 = vmatprep.subr.mxu0 0.0
    %1244 = vmatpush1.msra.mxu0 0.0
    %1245 = vmatprep.subr.mxu0 0.0
    %1246 = vmatpush1.msra.mxu0 0.0
    %1247 = vmatprep.subr.mxu0 0.0
    %1248 = vmatpush1.msra.mxu0 0.0
    %1249 = vmatprep.subr.mxu0 0.0
    %1250 = vmatpush1.msra.mxu0 0.0
    %1251 = vmatprep.subr.mxu0 0.0
    %1252 = vmatpush1.msra.mxu0 0.0
    %1253 = vmatprep.subr.mxu0 0.0
    %1254 = vmatpush1.msra.mxu0 0.0
    %1255 = vmatprep.subr.mxu0 0.0
    %1256 = vmatpush1.msra.mxu0 0.0
    %1257 = vmatprep.subr.mxu0 0.0
    %1258 = vmatpush1.msra.mxu0 0.0
    %1259 = vmatprep.subr.mxu0 0.0
    %1260 = vmatpush1.msra.mxu0 0.0
    %1261 = vmatprep.subr.mxu0 0.0
    %1262 = vmatpush1.msra.mxu0 0.0
    %1263 = vmatprep.subr.mxu0 0.0
    %1264 = vmatpush1.msra.mxu0 0.0
    %1265 = vmatprep.subr.mxu0 0.0
    %1266 = vmatpush1.msra.mxu0 0.0
    %1267 = vmatprep.subr.mxu0 0.0
    %1268 = vmatpush1.msra.mxu0 0.0
    %1269 = vmatprep.subr.mxu0 0.0
    %1270 = vmatpush1.msra.mxu0 0.0
    %1271 = vmatprep.subr.mxu0 0.0
    %1272 = vmatpush1.msra.mxu0 0.0
    %1273 = vmatprep.subr.mxu0 0.0
    %1274 = vmatpush1.msra.mxu0 0.0
    %1275 = vmatprep.subr.mxu0 0.0
    %1276 = vmatpush1.msra.mxu0 0.0
    %1277 = vmatprep.subr.mxu0 0.0
    %1278 = vmatpush1.msra.mxu0 0.0
    %1279 = vmatprep.subr.mxu0 0.0
    %1280 = vmatpush1.msra.mxu0 0.0
    %1281 = vmatprep.subr.mxu0 0.0
    %1282 = vmatpush1.msra.mxu0 0.0
    %1283 = vmatprep.subr.mxu0 0.0
    %1284 = vmatpush1.msra.mxu0 0.0
    %1285 = vmatprep.mubr.f32.mxu0 0.0
    %v1286 = vand.u32 %v1120, 4294901760
    %1287 = vmatmul.mubr.f32.gmra.mrb[0].mxu0 %v1286
    %v1288 = vpop.f32.mrb[0].mxu0
    %v1289 = vadd.f32 %v1198, %v1288
    %v1290 = vpop.f32.mrb[0].mxu0
    %1291 = vdwg.mxu0
    %1292 = vmatprep.subr.mxu0 0.0
    %v1293 = vand.u32 %v1115, 4294901760
    %v1294 = vsub.f32 %v1115, %v1293
    %1295 = vmatpush1.msra.mxu0 %v1294
    %1296 = vmatprep.subr.mxu0 0.0
    %v1297 = vand.u32 %v1116, 4294901760
    %v1298 = vsub.f32 %v1116, %v1297
    %1299 = vmatpush1.msra.mxu0 %v1298
    %1300 = vmatprep.subr.mxu0 0.0
    %v1301 = vand.u32 %v1117, 4294901760
    %v1302 = vsub.f32 %v1117, %v1301
    %1303 = vmatpush1.msra.mxu0 %v1302
    %1304 = vmatprep.subr.mxu0 0.0
    %v1305 = vand.u32 %v1118, 4294901760
    %v1306 = vsub.f32 %v1118, %v1305
    %1307 = vmatpush1.msra.mxu0 %v1306
    %1308 = vmatprep.subr.mxu0 0.0
    %1309 = vmatpush1.msra.mxu0 0.0
    %1310 = vmatprep.subr.mxu0 0.0
    %1311 = vmatpush1.msra.mxu0 0.0
    %1312 = vmatprep.subr.mxu0 0.0
    %1313 = vmatpush1.msra.mxu0 0.0
    %1314 = vmatprep.subr.mxu0 0.0
    %1315 = vmatpush1.msra.mxu0 0.0
    %1316 = vmatprep.subr.mxu0 0.0
    %1317 = vmatpush1.msra.mxu0 0.0
    %1318 = vmatprep.subr.mxu0 0.0
    %1319 = vmatpush1.msra.mxu0 0.0
    %1320 = vmatprep.subr.mxu0 0.0
    %1321 = vmatpush1.msra.mxu0 0.0
    %1322 = vmatprep.subr.mxu0 0.0
    %1323 = vmatpush1.msra.mxu0 0.0
    %1324 = vmatprep.subr.mxu0 0.0
    %1325 = vmatpush1.msra.mxu0 0.0
    %1326 = vmatprep.subr.mxu0 0.0
    %1327 = vmatpush1.msra.mxu0 0.0
    %1328 = vmatprep.subr.mxu0 0.0
    %1329 = vmatpush1.msra.mxu0 0.0
    %1330 = vmatprep.subr.mxu0 0.0
    %1331 = vmatpush1.msra.mxu0 0.0
    %1332 = vmatprep.subr.mxu0 0.0
    %1333 = vmatpush1.msra.mxu0 0.0
    %1334 = vmatprep.subr.mxu0 0.0
    %1335 = vmatpush1.msra.mxu0 0.0
    %1336 = vmatprep.subr.mxu0 0.0
    %1337 = vmatpush1.msra.mxu0 0.0
    %1338 = vmatprep.subr.mxu0 0.0
    %1339 = vmatpush1.msra.mxu0 0.0
    %1340 = vmatprep.subr.mxu0 0.0
    %1341 = vmatpush1.msra.mxu0 0.0
    %1342 = vmatprep.subr.mxu0 0.0
    %1343 = vmatpush1.msra.mxu0 0.0
    %1344 = vmatprep.subr.mxu0 0.0
    %1345 = vmatpush1.msra.mxu0 0.0
    %1346 = vmatprep.subr.mxu0 0.0
    %1347 = vmatpush1.msra.mxu0 0.0
    %1348 = vmatprep.subr.mxu0 0.0
    %1349 = vmatpush1.msra.mxu0 0.0
    %1350 = vmatprep.subr.mxu0 0.0
    %1351 = vmatpush1.msra.mxu0 0.0
    %1352 = vmatprep.subr.mxu0 0.0
    %1353 = vmatpush1.msra.mxu0 0.0
    %1354 = vmatprep.subr.mxu0 0.0
    %1355 = vmatpush1.msra.mxu0 0.0
    %1356 = vmatprep.subr.mxu0 0.0
    %1357 = vmatpush1.msra.mxu0 0.0
    %1358 = vmatprep.subr.mxu0 0.0
    %1359 = vmatpush1.msra.mxu0 0.0
    %1360 = vmatprep.subr.mxu0 0.0
    %1361 = vmatpush1.msra.mxu0 0.0
    %1362 = vmatprep.subr.mxu0 0.0
    %1363 = vmatpush1.msra.mxu0 0.0
    %1364 = vmatprep.mubr.f32.mxu0 0.0
    %v1365 = vand.u32 %v1120, 4294901760
    %v1366 = vsub.f32 %v1120, %v1365
    %1367 = vmatmul.mubr.f32.gmra.mrb[0].mxu0 %v1366
    %v1368 = vpop.f32.mrb[0].mxu0
    %v1369 = vadd.f32 %v1289, %v1368
    %v1370 = vpop.f32.mrb[0].mxu0
    %1371 = vdwg.mxu0
    %1372 = vmatprep.subr.mxu0 0.0
    %v1373 = vand.u32 %v1115, 4294901760
    %1374 = vmatpush1.msra.mxu0 %v1373
    %1375 = vmatprep.subr.mxu0 0.0
    %v1376 = vand.u32 %v1116, 4294901760
    %1377 = vmatpush1.msra.mxu0 %v1376
    %1378 = vmatprep.subr.mxu0 0.0
    %v1379 = vand.u32 %v1117, 4294901760
    %1380 = vmatpush1.msra.mxu0 %v1379
    %1381 = vmatprep.subr.mxu0 0.0
    %v1382 = vand.u32 %v1118, 4294901760
    %1383 = vmatpush1.msra.mxu0 %v1382
    %1384 = vmatprep.subr.mxu0 0.0
    %1385 = vmatpush1.msra.mxu0 0.0
    %1386 = vmatprep.subr.mxu0 0.0
    %1387 = vmatpush1.msra.mxu0 0.0
    %1388 = vmatprep.subr.mxu0 0.0
    %1389 = vmatpush1.msra.mxu0 0.0
    %1390 = vmatprep.subr.mxu0 0.0
    %1391 = vmatpush1.msra.mxu0 0.0
    %1392 = vmatprep.subr.mxu0 0.0
    %1393 = vmatpush1.msra.mxu0 0.0
    %1394 = vmatprep.subr.mxu0 0.0
    %1395 = vmatpush1.msra.mxu0 0.0
    %1396 = vmatprep.subr.mxu0 0.0
    %1397 = vmatpush1.msra.mxu0 0.0
    %1398 = vmatprep.subr.mxu0 0.0
    %1399 = vmatpush1.msra.mxu0 0.0
    %1400 = vmatprep.subr.mxu0 0.0
    %1401 = vmatpush1.msra.mxu0 0.0
    %1402 = vmatprep.subr.mxu0 0.0
    %1403 = vmatpush1.msra.mxu0 0.0
    %1404 = vmatprep.subr.mxu0 0.0
    %1405 = vmatpush1.msra.mxu0 0.0
    %1406 = vmatprep.subr.mxu0 0.0
    %1407 = vmatpush1.msra.mxu0 0.0
    %1408 = vmatprep.subr.mxu0 0.0
    %1409 = vmatpush1.msra.mxu0 0.0
    %1410 = vmatprep.subr.mxu0 0.0
    %1411 = vmatpush1.msra.mxu0 0.0
    %1412 = vmatprep.subr.mxu0 0.0
    %1413 = vmatpush1.msra.mxu0 0.0
    %1414 = vmatprep.subr.mxu0 0.0
    %1415 = vmatpush1.msra.mxu0 0.0
    %1416 = vmatprep.subr.mxu0 0.0
    %1417 = vmatpush1.msra.mxu0 0.0
    %1418 = vmatprep.subr.mxu0 0.0
    %1419 = vmatpush1.msra.mxu0 0.0
    %1420 = vmatprep.subr.mxu0 0.0
    %1421 = vmatpush1.msra.mxu0 0.0
    %1422 = vmatprep.subr.mxu0 0.0
    %1423 = vmatpush1.msra.mxu0 0.0
    %1424 = vmatprep.subr.mxu0 0.0
    %1425 = vmatpush1.msra.mxu0 0.0
    %1426 = vmatprep.subr.mxu0 0.0
    %1427 = vmatpush1.msra.mxu0 0.0
    %1428 = vmatprep.subr.mxu0 0.0
    %1429 = vmatpush1.msra.mxu0 0.0
    %1430 = vmatprep.subr.mxu0 0.0
    %1431 = vmatpush1.msra.mxu0 0.0
    %1432 = vmatprep.subr.mxu0 0.0
    %1433 = vmatpush1.msra.mxu0 0.0
    %1434 = vmatprep.subr.mxu0 0.0
    %1435 = vmatpush1.msra.mxu0 0.0
    %1436 = vmatprep.subr.mxu0 0.0
    %1437 = vmatpush1.msra.mxu0 0.0
    %1438 = vmatprep.subr.mxu0 0.0
    %1439 = vmatpush1.msra.mxu0 0.0
    %1440 = vmatprep.mubr.f32.mxu0 0.0
    %v1441 = vand.u32 %v1120, 4294901760
    %v1442 = vsub.f32 %v1120, %v1441
    %v1443 = vand.u32 %v1442, 4294901760
    %1444 = vmatmul.mubr.f32.gmra.mrb[0].mxu0 %v1443
    %v1445 = vpop.f32.mrb[0].mxu0
    %v1446 = vadd.f32 %v1369, %v1445
    %v1447 = vpop.f32.mrb[0].mxu0
    %1448 = vdwg.mxu0
    %1449 = vmatprep.subr.mxu0 0.0
    %v1450 = vand.u32 %v1115, 4294901760
    %v1451 = vsub.f32 %v1115, %v1450
    %v1452 = vand.u32 %v1451, 4294901760
    %1453 = vmatpush1.msra.mxu0 %v1452
    %1454 = vmatprep.subr.mxu0 0.0
    %v1455 = vand.u32 %v1116, 4294901760
    %v1456 = vsub.f32 %v1116, %v1455
    %v1457 = vand.u32 %v1456, 4294901760
    %1458 = vmatpush1.msra.mxu0 %v1457
    %1459 = vmatprep.subr.mxu0 0.0
    %v1460 = vand.u32 %v1117, 4294901760
    %v1461 = vsub.f32 %v1117, %v1460
    %v1462 = vand.u32 %v1461, 4294901760
    %1463 = vmatpush1.msra.mxu0 %v1462
    %1464 = vmatprep.subr.mxu0 0.0
    %v1465 = vand.u32 %v1118, 4294901760
    %v1466 = vsub.f32 %v1118, %v1465
    %v1467 = vand.u32 %v1466, 4294901760
    %1468 = vmatpush1.msra.mxu0 %v1467
    %1469 = vmatprep.subr.mxu0 0.0
    %1470 = vmatpush1.msra.mxu0 0.0
    %1471 = vmatprep.subr.mxu0 0.0
    %1472 = vmatpush1.msra.mxu0 0.0
    %1473 = vmatprep.subr.mxu0 0.0
    %1474 = vmatpush1.msra.mxu0 0.0
    %1475 = vmatprep.subr.mxu0 0.0
    %1476 = vmatpush1.msra.mxu0 0.0
    %1477 = vmatprep.subr.mxu0 0.0
    %1478 = vmatpush1.msra.mxu0 0.0
    %1479 = vmatprep.subr.mxu0 0.0
    %1480 = vmatpush1.msra.mxu0 0.0
    %1481 = vmatprep.subr.mxu0 0.0
    %1482 = vmatpush1.msra.mxu0 0.0
    %1483 = vmatprep.subr.mxu0 0.0
    %1484 = vmatpush1.msra.mxu0 0.0
    %1485 = vmatprep.subr.mxu0 0.0
    %1486 = vmatpush1.msra.mxu0 0.0
    %1487 = vmatprep.subr.mxu0 0.0
    %1488 = vmatpush1.msra.mxu0 0.0
    %1489 = vmatprep.subr.mxu0 0.0
    %1490 = vmatpush1.msra.mxu0 0.0
    %1491 = vmatprep.subr.mxu0 0.0
    %1492 = vmatpush1.msra.mxu0 0.0
    %1493 = vmatprep.subr.mxu0 0.0
    %1494 = vmatpush1.msra.mxu0 0.0
    %1495 = vmatprep.subr.mxu0 0.0
    %1496 = vmatpush1.msra.mxu0 0.0
    %1497 = vmatprep.subr.mxu0 0.0
    %1498 = vmatpush1.msra.mxu0 0.0
    %1499 = vmatprep.subr.mxu0 0.0
    %1500 = vmatpush1.msra.mxu0 0.0
    %1501 = vmatprep.subr.mxu0 0.0
    %1502 = vmatpush1.msra.mxu0 0.0
    %1503 = vmatprep.subr.mxu0 0.0
    %1504 = vmatpush1.msra.mxu0 0.0
    %1505 = vmatprep.subr.mxu0 0.0
    %1506 = vmatpush1.msra.mxu0 0.0
    %1507 = vmatprep.subr.mxu0 0.0
    %1508 = vmatpush1.msra.mxu0 0.0
    %1509 = vmatprep.subr.mxu0 0.0
    %1510 = vmatpush1.msra.mxu0 0.0
    %1511 = vmatprep.subr.mxu0 0.0
    %1512 = vmatpush1.msra.mxu0 0.0
    %1513 = vmatprep.subr.mxu0 0.0
    %1514 = vmatpush1.msra.mxu0 0.0
    %1515 = vmatprep.subr.mxu0 0.0
    %1516 = vmatpush1.msra.mxu0 0.0
    %1517 = vmatprep.subr.mxu0 0.0
    %1518 = vmatpush1.msra.mxu0 0.0
    %1519 = vmatprep.subr.mxu0 0.0
    %1520 = vmatpush1.msra.mxu0 0.0
    %1521 = vmatprep.subr.mxu0 0.0
    %1522 = vmatpush1.msra.mxu0 0.0
    %1523 = vmatprep.subr.mxu0 0.0
    %1524 = vmatpush1.msra.mxu0 0.0
    %1525 = vmatprep.mubr.f32.mxu0 0.0
    %v1526 = vand.u32 %v1120, 4294901760
    %1527 = vmatmul.mubr.f32.gmra.mrb[0].mxu0 %v1526
    %v1528 = vpop.f32.mrb[0].mxu0
    %v1529 = vadd.f32 %v1446, %v1528
    %v1530 = vpop.f32.mrb[0].mxu0
    %1531 = vdwg.mxu0
    %1532 = vmatprep.subr.mxu0 0.0
    %v1533 = vand.u32 %v1115, 4294901760
    %1534 = vmatpush1.msra.mxu0 %v1533
    %1535 = vmatprep.subr.mxu0 0.0
    %v1536 = vand.u32 %v1116, 4294901760
    %1537 = vmatpush1.msra.mxu0 %v1536
    %1538 = vmatprep.subr.mxu0 0.0
    %v1539 = vand.u32 %v1117, 4294901760
    %1540 = vmatpush1.msra.mxu0 %v1539
    %1541 = vmatprep.subr.mxu0 0.0
    %v1542 = vand.u32 %v1118, 4294901760
    %1543 = vmatpush1.msra.mxu0 %v1542
    %1544 = vmatprep.subr.mxu0 0.0
    %1545 = vmatpush1.msra.mxu0 0.0
    %1546 = vmatprep.subr.mxu0 0.0
    %1547 = vmatpush1.msra.mxu0 0.0
    %1548 = vmatprep.subr.mxu0 0.0
    %1549 = vmatpush1.msra.mxu0 0.0
    %1550 = vmatprep.subr.mxu0 0.0
    %1551 = vmatpush1.msra.mxu0 0.0
    %1552 = vmatprep.subr.mxu0 0.0
    %1553 = vmatpush1.msra.mxu0 0.0
    %1554 = vmatprep.subr.mxu0 0.0
    %1555 = vmatpush1.msra.mxu0 0.0
    %1556 = vmatprep.subr.mxu0 0.0
    %1557 = vmatpush1.msra.mxu0 0.0
    %1558 = vmatprep.subr.mxu0 0.0
    %1559 = vmatpush1.msra.mxu0 0.0
    %1560 = vmatprep.subr.mxu0 0.0
    %1561 = vmatpush1.msra.mxu0 0.0
    %1562 = vmatprep.subr.mxu0 0.0
    %1563 = vmatpush1.msra.mxu0 0.0
    %1564 = vmatprep.subr.mxu0 0.0
    %1565 = vmatpush1.msra.mxu0 0.0
    %1566 = vmatprep.subr.mxu0 0.0
    %1567 = vmatpush1.msra.mxu0 0.0
    %1568 = vmatprep.subr.mxu0 0.0
    %1569 = vmatpush1.msra.mxu0 0.0
    %1570 = vmatprep.subr.mxu0 0.0
    %1571 = vmatpush1.msra.mxu0 0.0
    %1572 = vmatprep.subr.mxu0 0.0
    %1573 = vmatpush1.msra.mxu0 0.0
    %1574 = vmatprep.subr.mxu0 0.0
    %1575 = vmatpush1.msra.mxu0 0.0
    %1576 = vmatprep.subr.mxu0 0.0
    %1577 = vmatpush1.msra.mxu0 0.0
    %1578 = vmatprep.subr.mxu0 0.0
    %1579 = vmatpush1.msra.mxu0 0.0
    %1580 = vmatprep.subr.mxu0 0.0
    %1581 = vmatpush1.msra.mxu0 0.0
    %1582 = vmatprep.subr.mxu0 0.0
    %1583 = vmatpush1.msra.mxu0 0.0
    %1584 = vmatprep.subr.mxu0 0.0
    %1585 = vmatpush1.msra.mxu0 0.0
    %1586 = vmatprep.subr.mxu0 0.0
    %1587 = vmatpush1.msra.mxu0 0.0
    %1588 = vmatprep.subr.mxu0 0.0
    %1589 = vmatpush1.msra.mxu0 0.0
    %1590 = vmatprep.subr.mxu0 0.0
    %1591 = vmatpush1.msra.mxu0 0.0
    %1592 = vmatprep.subr.mxu0 0.0
    %1593 = vmatpush1.msra.mxu0 0.0
    %1594 = vmatprep.subr.mxu0 0.0
    %1595 = vmatpush1.msra.mxu0 0.0
    %1596 = vmatprep.subr.mxu0 0.0
    %1597 = vmatpush1.msra.mxu0 0.0
    %1598 = vmatprep.subr.mxu0 0.0
    %1599 = vmatpush1.msra.mxu0 0.0
    %1600 = vmatprep.mubr.f32.mxu0 0.0
    %v1601 = vand.u32 %v1120, 4294901760
    %1602 = vmatmul.mubr.f32.gmra.mrb[0].mxu0 %v1601
    %v1603 = vpop.f32.mrb[0].mxu0
    %v1604 = vadd.f32 %v1529, %v1603
    %v1605 = vpop.f32.mrb[0].mxu0
    %1606 = vdwg.mxu0
    %v1607 = vadd.f32 %v1112, %v1604
    %v1608 = vld [vmem:[#allocation2 + $0x20] sm:$0xff]
    %1610 = vset.pattern.permute.xlu0 0
    %1611 = vperm.xlu0 %1610, %v1608
    %v1612 = vpop.permute.xlu0 %1611
    %v1614 = vadd.f32 %v1607, %v1612
    %v1615 = vmax.f32 %v1614, 0.0
    %v1616 = vadd.f32 %v1615, %v619
    %1617 = vset.pattern.permute.xlu0 1
    %1618 = vperm.xlu0 %1617, %v1608
    %v1619 = vpop.permute.xlu0 %1618
    %v1621 = vadd.f32 %v1616, %v1619
    %v1622 = vld [vmem:[#allocation2 + $0x68] sm:$0xff]
    %v1623 = vld [vmem:[#allocation2 + $0x70] sm:$0xff]
    %v1624 = vld [vmem:[#allocation2 + $0x78] sm:$0xff]
    %v1625 = vld [vmem:[#allocation2 + $0x80] sm:$0xff]
    %v1626 = vld [vmem:[#allocation2 + $0x88] sm:$0xff]
    %v1627 = vld [vmem:[#allocation2 + $0x90] sm:$0xff]
    %v1628 = vld [vmem:[#allocation2 + $0x98] sm:$0xff]
    %v1629 = vld [vmem:[#allocation2 + $0xa0] sm:$0xff]
    %vm1630 = vcmask 64512
    %v1632 = vsel %vm1630, %v1622, 0
    %v1635 = vsel %vm1630, %v1623, 0
    %v1638 = vsel %vm1630, %v1624, 0
    %v1641 = vsel %vm1630, %v1625, 0
    %v1644 = vsel %vm1630, %v1626, 0
    %v1647 = vsel %vm1630, %v1627, 0
    %v1650 = vsel %vm1630, %v1628, 0
    %v1653 = vsel %vm1630, %v1629, 0
    %1655 = vmatprep.subr.mxu0 0.0
    %v1656 = vand.u32 %v1621, 4294901760
    %1657 = vmatpush1.msra.mxu0 %v1656
    %1658 = vmatprep.subr.mxu0 0.0
    %1659 = vmatpush1.msra.mxu0 0.0
    %1660 = vmatprep.subr.mxu0 0.0
    %1661 = vmatpush1.msra.mxu0 0.0
    %1662 = vmatprep.subr.mxu0 0.0
    %1663 = vmatpush1.msra.mxu0 0.0
    %1664 = vmatprep.subr.mxu0 0.0
    %1665 = vmatpush1.msra.mxu0 0.0
    %1666 = vmatprep.subr.mxu0 0.0
    %1667 = vmatpush1.msra.mxu0 0.0
    %1668 = vmatprep.subr.mxu0 0.0
    %1669 = vmatpush1.msra.mxu0 0.0
    %1670 = vmatprep.subr.mxu0 0.0
    %1671 = vmatpush1.msra.mxu0 0.0
    %1672 = vmatprep.subr.mxu0 0.0
    %1673 = vmatpush1.msra.mxu0 0.0
    %1674 = vmatprep.subr.mxu0 0.0
    %1675 = vmatpush1.msra.mxu0 0.0
    %1676 = vmatprep.subr.mxu0 0.0
    %1677 = vmatpush1.msra.mxu0 0.0
    %1678 = vmatprep.subr.mxu0 0.0
    %1679 = vmatpush1.msra.mxu0 0.0
    %1680 = vmatprep.subr.mxu0 0.0
    %1681 = vmatpush1.msra.mxu0 0.0
    %1682 = vmatprep.subr.mxu0 0.0
    %1683 = vmatpush1.msra.mxu0 0.0
    %1684 = vmatprep.subr.mxu0 0.0
    %1685 = vmatpush1.msra.mxu0 0.0
    %1686 = vmatprep.subr.mxu0 0.0
    %1687 = vmatpush1.msra.mxu0 0.0
    %1688 = vmatprep.subr.mxu0 0.0
    %1689 = vmatpush1.msra.mxu0 0.0
    %1690 = vmatprep.subr.mxu0 0.0
    %1691 = vmatpush1.msra.mxu0 0.0
    %1692 = vmatprep.subr.mxu0 0.0
    %1693 = vmatpush1.msra.mxu0 0.0
    %1694 = vmatprep.subr.mxu0 0.0
    %1695 = vmatpush1.msra.mxu0 0.0
    %1696 = vmatprep.subr.mxu0 0.0
    %1697 = vmatpush1.msra.mxu0 0.0
    %1698 = vmatprep.subr.mxu0 0.0
    %1699 = vmatpush1.msra.mxu0 0.0
    %1700 = vmatprep.subr.mxu0 0.0
    %1701 = vmatpush1.msra.mxu0 0.0
    %1702 = vmatprep.subr.mxu0 0.0
    %1703 = vmatpush1.msra.mxu0 0.0
    %1704 = vmatprep.subr.mxu0 0.0
    %1705 = vmatpush1.msra.mxu0 0.0
    %1706 = vmatprep.subr.mxu0 0.0
    %1707 = vmatpush1.msra.mxu0 0.0
    %1708 = vmatprep.subr.mxu0 0.0
    %1709 = vmatpush1.msra.mxu0 0.0
    %1710 = vmatprep.subr.mxu0 0.0
    %1711 = vmatpush1.msra.mxu0 0.0
    %1712 = vmatprep.subr.mxu0 0.0
    %1713 = vmatpush1.msra.mxu0 0.0
    %1714 = vmatprep.subr.mxu0 0.0
    %1715 = vmatpush1.msra.mxu0 0.0
    %1716 = vmatprep.subr.mxu0 0.0
    %1717 = vmatpush1.msra.mxu0 0.0
    %1718 = vmatprep.subr.mxu0 0.0
    %1719 = vmatpush1.msra.mxu0 0.0
    %1720 = vmatprep.mubr.f32.mxu0 0.0
    %v1721 = vand.u32 %v1632, 4294901760
    %v1722 = vsub.f32 %v1632, %v1721
    %v1723 = vand.u32 %v1722, 4294901760
    %v1724 = vsub.f32 %v1722, %v1723
    %v1725 = vand.u32 %v1724, 4294901760
    %1726 = vmatmul.mubr.f32.gmra.mrb[0].mxu0 %v1725
    %v1727 = vpop.f32.mrb[0].mxu0
    %v1728 = vadd.f32 0.0, %v1727
    %v1729 = vpop.f32.mrb[0].mxu0
    %1730 = vmatprep.mubr.f32.mxu0 0.0
    %v1731 = vand.u32 %v1635, 4294901760
    %v1732 = vsub.f32 %v1635, %v1731
    %v1733 = vand.u32 %v1732, 4294901760
    %v1734 = vsub.f32 %v1732, %v1733
    %v1735 = vand.u32 %v1734, 4294901760
    %1736 = vmatmul.mubr.f32.gmra.mrb[0].mxu0 %v1735
    %v1737 = vpop.f32.mrb[0].mxu0
    %v1738 = vadd.f32 0.0, %v1737
    %v1739 = vpop.f32.mrb[0].mxu0
    %1740 = vmatprep.mubr.f32.mxu0 0.0
    %v1741 = vand.u32 %v1638, 4294901760
    %v1742 = vsub.f32 %v1638, %v1741
    %v1743 = vand.u32 %v1742, 4294901760
    %v1744 = vsub.f32 %v1742, %v1743
    %v1745 = vand.u32 %v1744, 4294901760
    %1746 = vmatmul.mubr.f32.gmra.mrb[0].mxu0 %v1745
    %v1747 = vpop.f32.mrb[0].mxu0
    %v1748 = vadd.f32 0.0, %v1747
    %v1749 = vpop.f32.mrb[0].mxu0
    %1750 = vmatprep.mubr.f32.mxu0 0.0
    %v1751 = vand.u32 %v1641, 4294901760
    %v1752 = vsub.f32 %v1641, %v1751
    %v1753 = vand.u32 %v1752, 4294901760
    %v1754 = vsub.f32 %v1752, %v1753
    %v1755 = vand.u32 %v1754, 4294901760
    %1756 = vmatmul.mubr.f32.gmra.mrb[0].mxu0 %v1755
    %v1757 = vpop.f32.mrb[0].mxu0
    %v1758 = vadd.f32 0.0, %v1757
    %v1759 = vpop.f32.mrb[0].mxu0
    %1760 = vmatprep.mubr.f32.mxu0 0.0
    %v1761 = vand.u32 %v1644, 4294901760
    %v1762 = vsub.f32 %v1644, %v1761
    %v1763 = vand.u32 %v1762, 4294901760
    %v1764 = vsub.f32 %v1762, %v1763
    %v1765 = vand.u32 %v1764, 4294901760
    %1766 = vmatmul.mubr.f32.gmra.mrb[0].mxu0 %v1765
    %v1767 = vpop.f32.mrb[0].mxu0
    %v1768 = vadd.f32 0.0, %v1767
    %v1769 = vpop.f32.mrb[0].mxu0
    %1770 = vmatprep.mubr.f32.mxu0 0.0
    %v1771 = vand.u32 %v1647, 4294901760
    %v1772 = vsub.f32 %v1647, %v1771
    %v1773 = vand.u32 %v1772, 4294901760
    %v1774 = vsub.f32 %v1772, %v1773
    %v1775 = vand.u32 %v1774, 4294901760
    %1776 = vmatmul.mubr.f32.gmra.mrb[0].mxu0 %v1775
    %v1777 = vpop.f32.mrb[0].mxu0
    %v1778 = vadd.f32 0.0, %v1777
    %v1779 = vpop.f32.mrb[0].mxu0
    %1780 = vmatprep.mubr.f32.mxu0 0.0
    %v1781 = vand.u32 %v1650, 4294901760
    %v1782 = vsub.f32 %v1650, %v1781
    %v1783 = vand.u32 %v1782, 4294901760
    %v1784 = vsub.f32 %v1782, %v1783
    %v1785 = vand.u32 %v1784, 4294901760
    %1786 = vmatmul.mubr.f32.gmra.mrb[0].mxu0 %v1785
    %v1787 = vpop.f32.mrb[0].mxu0
    %v1788 = vadd.f32 0.0, %v1787
    %v1789 = vpop.f32.mrb[0].mxu0
    %1790 = vmatprep.mubr.f32.mxu0 0.0
    %v1791 = vand.u32 %v1653, 4294901760
    %v1792 = vsub.f32 %v1653, %v1791
    %v1793 = vand.u32 %v1792, 4294901760
    %v1794 = vsub.f32 %v1792, %v1793
    %v1795 = vand.u32 %v1794, 4294901760
    %1796 = vmatmul.mubr.f32.gmra.mrb[0].mxu0 %v1795
    %v1797 = vpop.f32.mrb[0].mxu0
    %v1798 = vadd.f32 0.0, %v1797
    %v1799 = vpop.f32.mrb[0].mxu0
    %1800 = vdwg.mxu0
    %1801 = vmatprep.subr.mxu0 0.0
    %v1802 = vand.u32 %v1621, 4294901760
    %v1803 = vsub.f32 %v1621, %v1802
    %v1804 = vand.u32 %v1803, 4294901760
    %v1805 = vsub.f32 %v1803, %v1804
    %v1806 = vand.u32 %v1805, 4294901760
    %1807 = vmatpush1.msra.mxu0 %v1806
    %1808 = vmatprep.subr.mxu0 0.0
    %1809 = vmatpush1.msra.mxu0 0.0
    %1810 = vmatprep.subr.mxu0 0.0
    %1811 = vmatpush1.msra.mxu0 0.0
    %1812 = vmatprep.subr.mxu0 0.0
    %1813 = vmatpush1.msra.mxu0 0.0
    %1814 = vmatprep.subr.mxu0 0.0
    %1815 = vmatpush1.msra.mxu0 0.0
    %1816 = vmatprep.subr.mxu0 0.0
    %1817 = vmatpush1.msra.mxu0 0.0
    %1818 = vmatprep.subr.mxu0 0.0
    %1819 = vmatpush1.msra.mxu0 0.0
    %1820 = vmatprep.subr.mxu0 0.0
    %1821 = vmatpush1.msra.mxu0 0.0
    %1822 = vmatprep.subr.mxu0 0.0
    %1823 = vmatpush1.msra.mxu0 0.0
    %1824 = vmatprep.subr.mxu0 0.0
    %1825 = vmatpush1.msra.mxu0 0.0
    %1826 = vmatprep.subr.mxu0 0.0
    %1827 = vmatpush1.msra.mxu0 0.0
    %1828 = vmatprep.subr.mxu0 0.0
    %1829 = vmatpush1.msra.mxu0 0.0
    %1830 = vmatprep.subr.mxu0 0.0
    %1831 = vmatpush1.msra.mxu0 0.0
    %1832 = vmatprep.subr.mxu0 0.0
    %1833 = vmatpush1.msra.mxu0 0.0
    %1834 = vmatprep.subr.mxu0 0.0
    %1835 = vmatpush1.msra.mxu0 0.0
    %1836 = vmatprep.subr.mxu0 0.0
    %1837 = vmatpush1.msra.mxu0 0.0
    %1838 = vmatprep.subr.mxu0 0.0
    %1839 = vmatpush1.msra.mxu0 0.0
    %1840 = vmatprep.subr.mxu0 0.0
    %1841 = vmatpush1.msra.mxu0 0.0
    %1842 = vmatprep.subr.mxu0 0.0
    %1843 = vmatpush1.msra.mxu0 0.0
    %1844 = vmatprep.subr.mxu0 0.0
    %1845 = vmatpush1.msra.mxu0 0.0
    %1846 = vmatprep.subr.mxu0 0.0
    %1847 = vmatpush1.msra.mxu0 0.0
    %1848 = vmatprep.subr.mxu0 0.0
    %1849 = vmatpush1.msra.mxu0 0.0
    %1850 = vmatprep.subr.mxu0 0.0
    %1851 = vmatpush1.msra.mxu0 0.0
    %1852 = vmatprep.subr.mxu0 0.0
    %1853 = vmatpush1.msra.mxu0 0.0
    %1854 = vmatprep.subr.mxu0 0.0
    %1855 = vmatpush1.msra.mxu0 0.0
    %1856 = vmatprep.subr.mxu0 0.0
    %1857 = vmatpush1.msra.mxu0 0.0
    %1858 = vmatprep.subr.mxu0 0.0
    %1859 = vmatpush1.msra.mxu0 0.0
    %1860 = vmatprep.subr.mxu0 0.0
    %1861 = vmatpush1.msra.mxu0 0.0
    %1862 = vmatprep.subr.mxu0 0.0
    %1863 = vmatpush1.msra.mxu0 0.0
    %1864 = vmatprep.subr.mxu0 0.0
    %1865 = vmatpush1.msra.mxu0 0.0
    %1866 = vmatprep.subr.mxu0 0.0
    %1867 = vmatpush1.msra.mxu0 0.0
    %1868 = vmatprep.subr.mxu0 0.0
    %1869 = vmatpush1.msra.mxu0 0.0
    %1870 = vmatprep.mubr.f32.mxu0 0.0
    %v1871 = vand.u32 %v1632, 4294901760
    %1872 = vmatmul.mubr.f32.gmra.mrb[0].mxu0 %v1871
    %v1873 = vpop.f32.mrb[0].mxu0
    %v1874 = vadd.f32 %v1728, %v1873
    %v1875 = vpop.f32.mrb[0].mxu0
    %1876 = vmatprep.mubr.f32.mxu0 0.0
    %v1877 = vand.u32 %v1635, 4294901760
    %1878 = vmatmul.mubr.f32.gmra.mrb[0].mxu0 %v1877
    %v1879 = vpop.f32.mrb[0].mxu0
    %v1880 = vadd.f32 %v1738, %v1879
    %v1881 = vpop.f32.mrb[0].mxu0
    %1882 = vmatprep.mubr.f32.mxu0 0.0
    %v1883 = vand.u32 %v1638, 4294901760
    %1884 = vmatmul.mubr.f32.gmra.mrb[0].mxu0 %v1883
    %v1885 = vpop.f32.mrb[0].mxu0
    %v1886 = vadd.f32 %v1748, %v1885
    %v1887 = vpop.f32.mrb[0].mxu0
    %1888 = vmatprep.mubr.f32.mxu0 0.0
    %v1889 = vand.u32 %v1641, 4294901760
    %1890 = vmatmul.mubr.f32.gmra.mrb[0].mxu0 %v1889
    %v1891 = vpop.f32.mrb[0].mxu0
    %v1892 = vadd.f32 %v1758, %v1891
    %v1893 = vpop.f32.mrb[0].mxu0
    %1894 = vmatprep.mubr.f32.mxu0 0.0
    %v1895 = vand.u32 %v1644, 4294901760
    %1896 = vmatmul.mubr.f32.gmra.mrb[0].mxu0 %v1895
    %v1897 = vpop.f32.mrb[0].mxu0
    %v1898 = vadd.f32 %v1768, %v1897
    %v1899 = vpop.f32.mrb[0].mxu0
    %1900 = vmatprep.mubr.f32.mxu0 0.0
    %v1901 = vand.u32 %v1647, 4294901760
    %1902 = vmatmul.mubr.f32.gmra.mrb[0].mxu0 %v1901
    %v1903 = vpop.f32.mrb[0].mxu0
    %v1904 = vadd.f32 %v1778, %v1903
    %v1905 = vpop.f32.mrb[0].mxu0
    %1906 = vmatprep.mubr.f32.mxu0 0.0
    %v1907 = vand.u32 %v1650, 4294901760
    %1908 = vmatmul.mubr.f32.gmra.mrb[0].mxu0 %v1907
    %v1909 = vpop.f32.mrb[0].mxu0
    %v1910 = vadd.f32 %v1788, %v1909
    %v1911 = vpop.f32.mrb[0].mxu0
    %1912 = vmatprep.mubr.f32.mxu0 0.0
    %v1913 = vand.u32 %v1653, 4294901760
    %1914 = vmatmul.mubr.f32.gmra.mrb[0].mxu0 %v1913
    %v1915 = vpop.f32.mrb[0].mxu0
    %v1916 = vadd.f32 %v1798, %v1915
    %v1917 = vpop.f32.mrb[0].mxu0
    %1918 = vdwg.mxu0
    %1919 = vmatprep.subr.mxu0 0.0
    %v1920 = vand.u32 %v1621, 4294901760
    %v1921 = vsub.f32 %v1621, %v1920
    %1922 = vmatpush1.msra.mxu0 %v1921
    %1923 = vmatprep.subr.mxu0 0.0
    %1924 = vmatpush1.msra.mxu0 0.0
    %1925 = vmatprep.subr.mxu0 0.0
    %1926 = vmatpush1.msra.mxu0 0.0
    %1927 = vmatprep.subr.mxu0 0.0
    %1928 = vmatpush1.msra.mxu0 0.0
    %1929 = vmatprep.subr.mxu0 0.0
    %1930 = vmatpush1.msra.mxu0 0.0
    %1931 = vmatprep.subr.mxu0 0.0
    %1932 = vmatpush1.msra.mxu0 0.0
    %1933 = vmatprep.subr.mxu0 0.0
    %1934 = vmatpush1.msra.mxu0 0.0
    %1935 = vmatprep.subr.mxu0 0.0
    %1936 = vmatpush1.msra.mxu0 0.0
    %1937 = vmatprep.subr.mxu0 0.0
    %1938 = vmatpush1.msra.mxu0 0.0
    %1939 = vmatprep.subr.mxu0 0.0
    %1940 = vmatpush1.msra.mxu0 0.0
    %1941 = vmatprep.subr.mxu0 0.0
    %1942 = vmatpush1.msra.mxu0 0.0
    %1943 = vmatprep.subr.mxu0 0.0
    %1944 = vmatpush1.msra.mxu0 0.0
    %1945 = vmatprep.subr.mxu0 0.0
    %1946 = vmatpush1.msra.mxu0 0.0
    %1947 = vmatprep.subr.mxu0 0.0
    %1948 = vmatpush1.msra.mxu0 0.0
    %1949 = vmatprep.subr.mxu0 0.0
    %1950 = vmatpush1.msra.mxu0 0.0
    %1951 = vmatprep.subr.mxu0 0.0
    %1952 = vmatpush1.msra.mxu0 0.0
    %1953 = vmatprep.subr.mxu0 0.0
    %1954 = vmatpush1.msra.mxu0 0.0
    %1955 = vmatprep.subr.mxu0 0.0
    %1956 = vmatpush1.msra.mxu0 0.0
    %1957 = vmatprep.subr.mxu0 0.0
    %1958 = vmatpush1.msra.mxu0 0.0
    %1959 = vmatprep.subr.mxu0 0.0
    %1960 = vmatpush1.msra.mxu0 0.0
    %1961 = vmatprep.subr.mxu0 0.0
    %1962 = vmatpush1.msra.mxu0 0.0
    %1963 = vmatprep.subr.mxu0 0.0
    %1964 = vmatpush1.msra.mxu0 0.0
    %1965 = vmatprep.subr.mxu0 0.0
    %1966 = vmatpush1.msra.mxu0 0.0
    %1967 = vmatprep.subr.mxu0 0.0
    %1968 = vmatpush1.msra.mxu0 0.0
    %1969 = vmatprep.subr.mxu0 0.0
    %1970 = vmatpush1.msra.mxu0 0.0
    %1971 = vmatprep.subr.mxu0 0.0
    %1972 = vmatpush1.msra.mxu0 0.0
    %1973 = vmatprep.subr.mxu0 0.0
    %1974 = vmatpush1.msra.mxu0 0.0
    %1975 = vmatprep.subr.mxu0 0.0
    %1976 = vmatpush1.msra.mxu0 0.0
    %1977 = vmatprep.subr.mxu0 0.0
    %1978 = vmatpush1.msra.mxu0 0.0
    %1979 = vmatprep.subr.mxu0 0.0
    %1980 = vmatpush1.msra.mxu0 0.0
    %1981 = vmatprep.subr.mxu0 0.0
    %1982 = vmatpush1.msra.mxu0 0.0
    %1983 = vmatprep.subr.mxu0 0.0
    %1984 = vmatpush1.msra.mxu0 0.0
    %1985 = vmatprep.mubr.f32.mxu0 0.0
    %v1986 = vand.u32 %v1632, 4294901760
    %v1987 = vsub.f32 %v1632, %v1986
    %1988 = vmatmul.mubr.f32.gmra.mrb[0].mxu0 %v1987
    %v1989 = vpop.f32.mrb[0].mxu0
    %v1990 = vadd.f32 %v1874, %v1989
    %v1991 = vpop.f32.mrb[0].mxu0
    %1992 = vmatprep.mubr.f32.mxu0 0.0
    %v1993 = vand.u32 %v1635, 4294901760
    %v1994 = vsub.f32 %v1635, %v1993
    %1995 = vmatmul.mubr.f32.gmra.mrb[0].mxu0 %v1994
    %v1996 = vpop.f32.mrb[0].mxu0
    %v1997 = vadd.f32 %v1880, %v1996
    %v1998 = vpop.f32.mrb[0].mxu0
    %1999 = vmatprep.mubr.f32.mxu0 0.0
    %v2000 = vand.u32 %v1638, 4294901760
    %v2001 = vsub.f32 %v1638, %v2000
    %2002 = vmatmul.mubr.f32.gmra.mrb[0].mxu0 %v2001
    %v2003 = vpop.f32.mrb[0].mxu0
    %v2004 = vadd.f32 %v1886, %v2003
    %v2005 = vpop.f32.mrb[0].mxu0
    %2006 = vmatprep.mubr.f32.mxu0 0.0
    %v2007 = vand.u32 %v1641, 4294901760
    %v2008 = vsub.f32 %v1641, %v2007
    %2009 = vmatmul.mubr.f32.gmra.mrb[0].mxu0 %v2008
    %v2010 = vpop.f32.mrb[0].mxu0
    %v2011 = vadd.f32 %v1892, %v2010
    %v2012 = vpop.f32.mrb[0].mxu0
    %2013 = vmatprep.mubr.f32.mxu0 0.0
    %v2014 = vand.u32 %v1644, 4294901760
    %v2015 = vsub.f32 %v1644, %v2014
    %2016 = vmatmul.mubr.f32.gmra.mrb[0].mxu0 %v2015
    %v2017 = vpop.f32.mrb[0].mxu0
    %v2018 = vadd.f32 %v1898, %v2017
    %v2019 = vpop.f32.mrb[0].mxu0
    %2020 = vmatprep.mubr.f32.mxu0 0.0
    %v2021 = vand.u32 %v1647, 4294901760
    %v2022 = vsub.f32 %v1647, %v2021
    %2023 = vmatmul.mubr.f32.gmra.mrb[0].mxu0 %v2022
    %v2024 = vpop.f32.mrb[0].mxu0
    %v2025 = vadd.f32 %v1904, %v2024
    %v2026 = vpop.f32.mrb[0].mxu0
    %2027 = vmatprep.mubr.f32.mxu0 0.0
    %v2028 = vand.u32 %v1650, 4294901760
    %v2029 = vsub.f32 %v1650, %v2028
    %2030 = vmatmul.mubr.f32.gmra.mrb[0].mxu0 %v2029
    %v2031 = vpop.f32.mrb[0].mxu0
    %v2032 = vadd.f32 %v1910, %v2031
    %v2033 = vpop.f32.mrb[0].mxu0
    %2034 = vmatprep.mubr.f32.mxu0 0.0
    %v2035 = vand.u32 %v1653, 4294901760
    %v2036 = vsub.f32 %v1653, %v2035
    %2037 = vmatmul.mubr.f32.gmra.mrb[0].mxu0 %v2036
    %v2038 = vpop.f32.mrb[0].mxu0
    %v2039 = vadd.f32 %v1916, %v2038
    %v2040 = vpop.f32.mrb[0].mxu0
    %2041 = vdwg.mxu0
    %2042 = vmatprep.subr.mxu0 0.0
    %v2043 = vand.u32 %v1621, 4294901760
    %2044 = vmatpush1.msra.mxu0 %v2043
    %2045 = vmatprep.subr.mxu0 0.0
    %2046 = vmatpush1.msra.mxu0 0.0
    %2047 = vmatprep.subr.mxu0 0.0
    %2048 = vmatpush1.msra.mxu0 0.0
    %2049 = vmatprep.subr.mxu0 0.0
    %2050 = vmatpush1.msra.mxu0 0.0
    %2051 = vmatprep.subr.mxu0 0.0
    %2052 = vmatpush1.msra.mxu0 0.0
    %2053 = vmatprep.subr.mxu0 0.0
    %2054 = vmatpush1.msra.mxu0 0.0
    %2055 = vmatprep.subr.mxu0 0.0
    %2056 = vmatpush1.msra.mxu0 0.0
    %2057 = vmatprep.subr.mxu0 0.0
    %2058 = vmatpush1.msra.mxu0 0.0
    %2059 = vmatprep.subr.mxu0 0.0
    %2060 = vmatpush1.msra.mxu0 0.0
    %2061 = vmatprep.subr.mxu0 0.0
    %2062 = vmatpush1.msra.mxu0 0.0
    %2063 = vmatprep.subr.mxu0 0.0
    %2064 = vmatpush1.msra.mxu0 0.0
    %2065 = vmatprep.subr.mxu0 0.0
    %2066 = vmatpush1.msra.mxu0 0.0
    %2067 = vmatprep.subr.mxu0 0.0
    %2068 = vmatpush1.msra.mxu0 0.0
    %2069 = vmatprep.subr.mxu0 0.0
    %2070 = vmatpush1.msra.mxu0 0.0
    %2071 = vmatprep.subr.mxu0 0.0
    %2072 = vmatpush1.msra.mxu0 0.0
    %2073 = vmatprep.subr.mxu0 0.0
    %2074 = vmatpush1.msra.mxu0 0.0
    %2075 = vmatprep.subr.mxu0 0.0
    %2076 = vmatpush1.msra.mxu0 0.0
    %2077 = vmatprep.subr.mxu0 0.0
    %2078 = vmatpush1.msra.mxu0 0.0
    %2079 = vmatprep.subr.mxu0 0.0
    %2080 = vmatpush1.msra.mxu0 0.0
    %2081 = vmatprep.subr.mxu0 0.0
    %2082 = vmatpush1.msra.mxu0 0.0
    %2083 = vmatprep.subr.mxu0 0.0
    %2084 = vmatpush1.msra.mxu0 0.0
    %2085 = vmatprep.subr.mxu0 0.0
    %2086 = vmatpush1.msra.mxu0 0.0
    %2087 = vmatprep.subr.mxu0 0.0
    %2088 = vmatpush1.msra.mxu0 0.0
    %2089 = vmatprep.subr.mxu0 0.0
    %2090 = vmatpush1.msra.mxu0 0.0
    %2091 = vmatprep.subr.mxu0 0.0
    %2092 = vmatpush1.msra.mxu0 0.0
    %2093 = vmatprep.subr.mxu0 0.0
    %2094 = vmatpush1.msra.mxu0 0.0
    %2095 = vmatprep.subr.mxu0 0.0
    %2096 = vmatpush1.msra.mxu0 0.0
    %2097 = vmatprep.subr.mxu0 0.0
    %2098 = vmatpush1.msra.mxu0 0.0
    %2099 = vmatprep.subr.mxu0 0.0
    %2100 = vmatpush1.msra.mxu0 0.0
    %2101 = vmatprep.subr.mxu0 0.0
    %2102 = vmatpush1.msra.mxu0 0.0
    %2103 = vmatprep.subr.mxu0 0.0
    %2104 = vmatpush1.msra.mxu0 0.0
    %2105 = vmatprep.subr.mxu0 0.0
    %2106 = vmatpush1.msra.mxu0 0.0
    %2107 = vmatprep.mubr.f32.mxu0 0.0
    %v2108 = vand.u32 %v1632, 4294901760
    %v2109 = vsub.f32 %v1632, %v2108
    %v2110 = vand.u32 %v2109, 4294901760
    %2111 = vmatmul.mubr.f32.gmra.mrb[0].mxu0 %v2110
    %v2112 = vpop.f32.mrb[0].mxu0
    %v2113 = vadd.f32 %v1990, %v2112
    %v2114 = vpop.f32.mrb[0].mxu0
    %2115 = vmatprep.mubr.f32.mxu0 0.0
    %v2116 = vand.u32 %v1635, 4294901760
    %v2117 = vsub.f32 %v1635, %v2116
    %v2118 = vand.u32 %v2117, 4294901760
    %2119 = vmatmul.mubr.f32.gmra.mrb[0].mxu0 %v2118
    %v2120 = vpop.f32.mrb[0].mxu0
    %v2121 = vadd.f32 %v1997, %v2120
    %v2122 = vpop.f32.mrb[0].mxu0
    %2123 = vmatprep.mubr.f32.mxu0 0.0
    %v2124 = vand.u32 %v1638, 4294901760
    %v2125 = vsub.f32 %v1638, %v2124
    %v2126 = vand.u32 %v2125, 4294901760
    %2127 = vmatmul.mubr.f32.gmra.mrb[0].mxu0 %v2126
    %v2128 = vpop.f32.mrb[0].mxu0
    %v2129 = vadd.f32 %v2004, %v2128
    %v2130 = vpop.f32.mrb[0].mxu0
    %2131 = vmatprep.mubr.f32.mxu0 0.0
    %v2132 = vand.u32 %v1641, 4294901760
    %v2133 = vsub.f32 %v1641, %v2132
    %v2134 = vand.u32 %v2133, 4294901760
    %2135 = vmatmul.mubr.f32.gmra.mrb[0].mxu0 %v2134
    %v2136 = vpop.f32.mrb[0].mxu0
    %v2137 = vadd.f32 %v2011, %v2136
    %v2138 = vpop.f32.mrb[0].mxu0
    %2139 = vmatprep.mubr.f32.mxu0 0.0
    %v2140 = vand.u32 %v1644, 4294901760
    %v2141 = vsub.f32 %v1644, %v2140
    %v2142 = vand.u32 %v2141, 4294901760
    %2143 = vmatmul.mubr.f32.gmra.mrb[0].mxu0 %v2142
    %v2144 = vpop.f32.mrb[0].mxu0
    %v2145 = vadd.f32 %v2018, %v2144
    %v2146 = vpop.f32.mrb[0].mxu0
    %2147 = vmatprep.mubr.f32.mxu0 0.0
    %v2148 = vand.u32 %v1647, 4294901760
    %v2149 = vsub.f32 %v1647, %v2148
    %v2150 = vand.u32 %v2149, 4294901760
    %2151 = vmatmul.mubr.f32.gmra.mrb[0].mxu0 %v2150
    %v2152 = vpop.f32.mrb[0].mxu0
    %v2153 = vadd.f32 %v2025, %v2152
    %v2154 = vpop.f32.mrb[0].mxu0
    %2155 = vmatprep.mubr.f32.mxu0 0.0
    %v2156 = vand.u32 %v1650, 4294901760
    %v2157 = vsub.f32 %v1650, %v2156
    %v2158 = vand.u32 %v2157, 4294901760
    %2159 = vmatmul.mubr.f32.gmra.mrb[0].mxu0 %v2158
    %v2160 = vpop.f32.mrb[0].mxu0
    %v2161 = vadd.f32 %v2032, %v2160
    %v2162 = vpop.f32.mrb[0].mxu0
    %2163 = vmatprep.mubr.f32.mxu0 0.0
    %v2164 = vand.u32 %v1653, 4294901760
    %v2165 = vsub.f32 %v1653, %v2164
    %v2166 = vand.u32 %v2165, 4294901760
    %2167 = vmatmul.mubr.f32.gmra.mrb[0].mxu0 %v2166
    %v2168 = vpop.f32.mrb[0].mxu0
    %v2169 = vadd.f32 %v2039, %v2168
    %v2170 = vpop.f32.mrb[0].mxu0
    %2171 = vdwg.mxu0
    %2172 = vmatprep.subr.mxu0 0.0
    %v2173 = vand.u32 %v1621, 4294901760
    %v2174 = vsub.f32 %v1621, %v2173
    %v2175 = vand.u32 %v2174, 4294901760
    %2176 = vmatpush1.msra.mxu0 %v2175
    %2177 = vmatprep.subr.mxu0 0.0
    %2178 = vmatpush1.msra.mxu0 0.0
    %2179 = vmatprep.subr.mxu0 0.0
    %2180 = vmatpush1.msra.mxu0 0.0
    %2181 = vmatprep.subr.mxu0 0.0
    %2182 = vmatpush1.msra.mxu0 0.0
    %2183 = vmatprep.subr.mxu0 0.0
    %2184 = vmatpush1.msra.mxu0 0.0
    %2185 = vmatprep.subr.mxu0 0.0
    %2186 = vmatpush1.msra.mxu0 0.0
    %2187 = vmatprep.subr.mxu0 0.0
    %2188 = vmatpush1.msra.mxu0 0.0
    %2189 = vmatprep.subr.mxu0 0.0
    %2190 = vmatpush1.msra.mxu0 0.0
    %2191 = vmatprep.subr.mxu0 0.0
    %2192 = vmatpush1.msra.mxu0 0.0
    %2193 = vmatprep.subr.mxu0 0.0
    %2194 = vmatpush1.msra.mxu0 0.0
    %2195 = vmatprep.subr.mxu0 0.0
    %2196 = vmatpush1.msra.mxu0 0.0
    %2197 = vmatprep.subr.mxu0 0.0
    %2198 = vmatpush1.msra.mxu0 0.0
    %2199 = vmatprep.subr.mxu0 0.0
    %2200 = vmatpush1.msra.mxu0 0.0
    %2201 = vmatprep.subr.mxu0 0.0
    %2202 = vmatpush1.msra.mxu0 0.0
    %2203 = vmatprep.subr.mxu0 0.0
    %2204 = vmatpush1.msra.mxu0 0.0
    %2205 = vmatprep.subr.mxu0 0.0
    %2206 = vmatpush1.msra.mxu0 0.0
    %2207 = vmatprep.subr.mxu0 0.0
    %2208 = vmatpush1.msra.mxu0 0.0
    %2209 = vmatprep.subr.mxu0 0.0
    %2210 = vmatpush1.msra.mxu0 0.0
    %2211 = vmatprep.subr.mxu0 0.0
    %2212 = vmatpush1.msra.mxu0 0.0
    %2213 = vmatprep.subr.mxu0 0.0
    %2214 = vmatpush1.msra.mxu0 0.0
    %2215 = vmatprep.subr.mxu0 0.0
    %2216 = vmatpush1.msra.mxu0 0.0
    %2217 = vmatprep.subr.mxu0 0.0
    %2218 = vmatpush1.msra.mxu0 0.0
    %2219 = vmatprep.subr.mxu0 0.0
    %2220 = vmatpush1.msra.mxu0 0.0
    %2221 = vmatprep.subr.mxu0 0.0
    %2222 = vmatpush1.msra.mxu0 0.0
    %2223 = vmatprep.subr.mxu0 0.0
    %2224 = vmatpush1.msra.mxu0 0.0
    %2225 = vmatprep.subr.mxu0 0.0
    %2226 = vmatpush1.msra.mxu0 0.0
    %2227 = vmatprep.subr.mxu0 0.0
    %2228 = vmatpush1.msra.mxu0 0.0
    %2229 = vmatprep.subr.mxu0 0.0
    %2230 = vmatpush1.msra.mxu0 0.0
    %2231 = vmatprep.subr.mxu0 0.0
    %2232 = vmatpush1.msra.mxu0 0.0
    %2233 = vmatprep.subr.mxu0 0.0
    %2234 = vmatpush1.msra.mxu0 0.0
    %2235 = vmatprep.subr.mxu0 0.0
    %2236 = vmatpush1.msra.mxu0 0.0
    %2237 = vmatprep.subr.mxu0 0.0
    %2238 = vmatpush1.msra.mxu0 0.0
    %2239 = vmatprep.mubr.f32.mxu0 0.0
    %v2240 = vand.u32 %v1632, 4294901760
    %2241 = vmatmul.mubr.f32.gmra.mrb[0].mxu0 %v2240
    %v2242 = vpop.f32.mrb[0].mxu0
    %v2243 = vadd.f32 %v2113, %v2242
    %v2244 = vpop.f32.mrb[0].mxu0
    %2245 = vmatprep.mubr.f32.mxu0 0.0
    %v2246 = vand.u32 %v1635, 4294901760
    %2247 = vmatmul.mubr.f32.gmra.mrb[0].mxu0 %v2246
    %v2248 = vpop.f32.mrb[0].mxu0
    %v2249 = vadd.f32 %v2121, %v2248
    %v2250 = vpop.f32.mrb[0].mxu0
    %2251 = vmatprep.mubr.f32.mxu0 0.0
    %v2252 = vand.u32 %v1638, 4294901760
    %2253 = vmatmul.mubr.f32.gmra.mrb[0].mxu0 %v2252
    %v2254 = vpop.f32.mrb[0].mxu0
    %v2255 = vadd.f32 %v2129, %v2254
    %v2256 = vpop.f32.mrb[0].mxu0
    %2257 = vmatprep.mubr.f32.mxu0 0.0
    %v2258 = vand.u32 %v1641, 4294901760
    %2259 = vmatmul.mubr.f32.gmra.mrb[0].mxu0 %v2258
    %v2260 = vpop.f32.mrb[0].mxu0
    %v2261 = vadd.f32 %v2137, %v2260
    %v2262 = vpop.f32.mrb[0].mxu0
    %2263 = vmatprep.mubr.f32.mxu0 0.0
    %v2264 = vand.u32 %v1644, 4294901760
    %2265 = vmatmul.mubr.f32.gmra.mrb[0].mxu0 %v2264
    %v2266 = vpop.f32.mrb[0].mxu0
    %v2267 = vadd.f32 %v2145, %v2266
    %v2268 = vpop.f32.mrb[0].mxu0
    %2269 = vmatprep.mubr.f32.mxu0 0.0
    %v2270 = vand.u32 %v1647, 4294901760
    %2271 = vmatmul.mubr.f32.gmra.mrb[0].mxu0 %v2270
    %v2272 = vpop.f32.mrb[0].mxu0
    %v2273 = vadd.f32 %v2153, %v2272
    %v2274 = vpop.f32.mrb[0].mxu0
    %2275 = vmatprep.mubr.f32.mxu0 0.0
    %v2276 = vand.u32 %v1650, 4294901760
    %2277 = vmatmul.mubr.f32.gmra.mrb[0].mxu0 %v2276
    %v2278 = vpop.f32.mrb[0].mxu0
    %v2279 = vadd.f32 %v2161, %v2278
    %v2280 = vpop.f32.mrb[0].mxu0
    %2281 = vmatprep.mubr.f32.mxu0 0.0
    %v2282 = vand.u32 %v1653, 4294901760
    %2283 = vmatmul.mubr.f32.gmra.mrb[0].mxu0 %v2282
    %v2284 = vpop.f32.mrb[0].mxu0
    %v2285 = vadd.f32 %v2169, %v2284
    %v2286 = vpop.f32.mrb[0].mxu0
    %2287 = vdwg.mxu0
    %2288 = vmatprep.subr.mxu0 0.0
    %v2289 = vand.u32 %v1621, 4294901760
    %2290 = vmatpush1.msra.mxu0 %v2289
    %2291 = vmatprep.subr.mxu0 0.0
    %2292 = vmatpush1.msra.mxu0 0.0
    %2293 = vmatprep.subr.mxu0 0.0
    %2294 = vmatpush1.msra.mxu0 0.0
    %2295 = vmatprep.subr.mxu0 0.0
    %2296 = vmatpush1.msra.mxu0 0.0
    %2297 = vmatprep.subr.mxu0 0.0
    %2298 = vmatpush1.msra.mxu0 0.0
    %2299 = vmatprep.subr.mxu0 0.0
    %2300 = vmatpush1.msra.mxu0 0.0
    %2301 = vmatprep.subr.mxu0 0.0
    %2302 = vmatpush1.msra.mxu0 0.0
    %2303 = vmatprep.subr.mxu0 0.0
    %2304 = vmatpush1.msra.mxu0 0.0
    %2305 = vmatprep.subr.mxu0 0.0
    %2306 = vmatpush1.msra.mxu0 0.0
    %2307 = vmatprep.subr.mxu0 0.0
    %2308 = vmatpush1.msra.mxu0 0.0
    %2309 = vmatprep.subr.mxu0 0.0
    %2310 = vmatpush1.msra.mxu0 0.0
    %2311 = vmatprep.subr.mxu0 0.0
    %2312 = vmatpush1.msra.mxu0 0.0
    %2313 = vmatprep.subr.mxu0 0.0
    %2314 = vmatpush1.msra.mxu0 0.0
    %2315 = vmatprep.subr.mxu0 0.0
    %2316 = vmatpush1.msra.mxu0 0.0
    %2317 = vmatprep.subr.mxu0 0.0
    %2318 = vmatpush1.msra.mxu0 0.0
    %2319 = vmatprep.subr.mxu0 0.0
    %2320 = vmatpush1.msra.mxu0 0.0
    %2321 = vmatprep.subr.mxu0 0.0
    %2322 = vmatpush1.msra.mxu0 0.0
    %2323 = vmatprep.subr.mxu0 0.0
    %2324 = vmatpush1.msra.mxu0 0.0
    %2325 = vmatprep.subr.mxu0 0.0
    %2326 = vmatpush1.msra.mxu0 0.0
    %2327 = vmatprep.subr.mxu0 0.0
    %2328 = vmatpush1.msra.mxu0 0.0
    %2329 = vmatprep.subr.mxu0 0.0
    %2330 = vmatpush1.msra.mxu0 0.0
    %2331 = vmatprep.subr.mxu0 0.0
    %2332 = vmatpush1.msra.mxu0 0.0
    %2333 = vmatprep.subr.mxu0 0.0
    %2334 = vmatpush1.msra.mxu0 0.0
    %2335 = vmatprep.subr.mxu0 0.0
    %2336 = vmatpush1.msra.mxu0 0.0
    %2337 = vmatprep.subr.mxu0 0.0
    %2338 = vmatpush1.msra.mxu0 0.0
    %2339 = vmatprep.subr.mxu0 0.0
    %2340 = vmatpush1.msra.mxu0 0.0
    %2341 = vmatprep.subr.mxu0 0.0
    %2342 = vmatpush1.msra.mxu0 0.0
    %2343 = vmatprep.subr.mxu0 0.0
    %2344 = vmatpush1.msra.mxu0 0.0
    %2345 = vmatprep.subr.mxu0 0.0
    %2346 = vmatpush1.msra.mxu0 0.0
    %2347 = vmatprep.subr.mxu0 0.0
    %2348 = vmatpush1.msra.mxu0 0.0
    %2349 = vmatprep.subr.mxu0 0.0
    %2350 = vmatpush1.msra.mxu0 0.0
    %2351 = vmatprep.subr.mxu0 0.0
    %2352 = vmatpush1.msra.mxu0 0.0
    %2353 = vmatprep.mubr.f32.mxu0 0.0
    %v2354 = vand.u32 %v1632, 4294901760
    %2355 = vmatmul.mubr.f32.gmra.mrb[0].mxu0 %v2354
    %v2356 = vpop.f32.mrb[0].mxu0
    %v2357 = vadd.f32 %v2243, %v2356
    %v2358 = vpop.f32.mrb[0].mxu0
    %2359 = vmatprep.mubr.f32.mxu0 0.0
    %v2360 = vand.u32 %v1635, 4294901760
    %2361 = vmatmul.mubr.f32.gmra.mrb[0].mxu0 %v2360
    %v2362 = vpop.f32.mrb[0].mxu0
    %v2363 = vadd.f32 %v2249, %v2362
    %v2364 = vpop.f32.mrb[0].mxu0
    %2365 = vmatprep.mubr.f32.mxu0 0.0
    %v2366 = vand.u32 %v1638, 4294901760
    %2367 = vmatmul.mubr.f32.gmra.mrb[0].mxu0 %v2366
    %v2368 = vpop.f32.mrb[0].mxu0
    %v2369 = vadd.f32 %v2255, %v2368
    %v2370 = vpop.f32.mrb[0].mxu0
    %2371 = vmatprep.mubr.f32.mxu0 0.0
    %v2372 = vand.u32 %v1641, 4294901760
    %2373 = vmatmul.mubr.f32.gmra.mrb[0].mxu0 %v2372
    %v2374 = vpop.f32.mrb[0].mxu0
    %v2375 = vadd.f32 %v2261, %v2374
    %v2376 = vpop.f32.mrb[0].mxu0
    %2377 = vmatprep.mubr.f32.mxu0 0.0
    %v2378 = vand.u32 %v1644, 4294901760
    %2379 = vmatmul.mubr.f32.gmra.mrb[0].mxu0 %v2378
    %v2380 = vpop.f32.mrb[0].mxu0
    %v2381 = vadd.f32 %v2267, %v2380
    %v2382 = vpop.f32.mrb[0].mxu0
    %2383 = vmatprep.mubr.f32.mxu0 0.0
    %v2384 = vand.u32 %v1647, 4294901760
    %2385 = vmatmul.mubr.f32.gmra.mrb[0].mxu0 %v2384
    %v2386 = vpop.f32.mrb[0].mxu0
    %v2387 = vadd.f32 %v2273, %v2386
    %v2388 = vpop.f32.mrb[0].mxu0
    %2389 = vmatprep.mubr.f32.mxu0 0.0
    %v2390 = vand.u32 %v1650, 4294901760
    %2391 = vmatmul.mubr.f32.gmra.mrb[0].mxu0 %v2390
    %v2392 = vpop.f32.mrb[0].mxu0
    %v2393 = vadd.f32 %v2279, %v2392
    %v2394 = vpop.f32.mrb[0].mxu0
    %2395 = vmatprep.mubr.f32.mxu0 0.0
    %v2396 = vand.u32 %v1653, 4294901760
    %2397 = vmatmul.mubr.f32.gmra.mrb[0].mxu0 %v2396
    %v2398 = vpop.f32.mrb[0].mxu0
    %v2399 = vadd.f32 %v2285, %v2398
    %v2400 = vpop.f32.mrb[0].mxu0
    %2401 = vdwg.mxu0
    %v2402 = vld [vmem:[#allocation2 + $0xb8] sm:$0xff]
    %v2403 = vld [vmem:[#allocation2 + $0xc0] sm:$0xff]
    %v2404 = vld [vmem:[#allocation2 + $0xc8] sm:$0xff]
    %v2405 = vld [vmem:[#allocation2 + $0xd0] sm:$0xff]
    %v2407 = vsel %vm626, %v2357, 0
    %v2410 = vsel %vm626, %v2363, 0
    %2412 = vmatprep.subr.mxu0 0.0
    %v2413 = vand.u32 %v2402, 4294901760
    %2414 = vmatpush1.msra.mxu0 %v2413
    %2415 = vmatprep.subr.mxu0 0.0
    %v2416 = vand.u32 %v2403, 4294901760
    %2417 = vmatpush1.msra.mxu0 %v2416
    %2418 = vmatprep.subr.mxu0 0.0
    %v2419 = vand.u32 %v2404, 4294901760
    %2420 = vmatpush1.msra.mxu0 %v2419
    %2421 = vmatprep.subr.mxu0 0.0
    %v2422 = vand.u32 %v2405, 4294901760
    %2423 = vmatpush1.msra.mxu0 %v2422
    %2424 = vmatprep.subr.mxu0 0.0
    %2425 = vmatpush1.msra.mxu0 0.0
    %2426 = vmatprep.subr.mxu0 0.0
    %2427 = vmatpush1.msra.mxu0 0.0
    %2428 = vmatprep.subr.mxu0 0.0
    %2429 = vmatpush1.msra.mxu0 0.0
    %2430 = vmatprep.subr.mxu0 0.0
    %2431 = vmatpush1.msra.mxu0 0.0
    %2432 = vmatprep.subr.mxu0 0.0
    %2433 = vmatpush1.msra.mxu0 0.0
    %2434 = vmatprep.subr.mxu0 0.0
    %2435 = vmatpush1.msra.mxu0 0.0
    %2436 = vmatprep.subr.mxu0 0.0
    %2437 = vmatpush1.msra.mxu0 0.0
    %2438 = vmatprep.subr.mxu0 0.0
    %2439 = vmatpush1.msra.mxu0 0.0
    %2440 = vmatprep.subr.mxu0 0.0
    %2441 = vmatpush1.msra.mxu0 0.0
    %2442 = vmatprep.subr.mxu0 0.0
    %2443 = vmatpush1.msra.mxu0 0.0
    %2444 = vmatprep.subr.mxu0 0.0
    %2445 = vmatpush1.msra.mxu0 0.0
    %2446 = vmatprep.subr.mxu0 0.0
    %2447 = vmatpush1.msra.mxu0 0.0
    %2448 = vmatprep.subr.mxu0 0.0
    %2449 = vmatpush1.msra.mxu0 0.0
    %2450 = vmatprep.subr.mxu0 0.0
    %2451 = vmatpush1.msra.mxu0 0.0
    %2452 = vmatprep.subr.mxu0 0.0
    %2453 = vmatpush1.msra.mxu0 0.0
    %2454 = vmatprep.subr.mxu0 0.0
    %2455 = vmatpush1.msra.mxu0 0.0
    %2456 = vmatprep.subr.mxu0 0.0
    %2457 = vmatpush1.msra.mxu0 0.0
    %2458 = vmatprep.subr.mxu0 0.0
    %2459 = vmatpush1.msra.mxu0 0.0
    %2460 = vmatprep.subr.mxu0 0.0
    %2461 = vmatpush1.msra.mxu0 0.0
    %2462 = vmatprep.subr.mxu0 0.0
    %2463 = vmatpush1.msra.mxu0 0.0
    %2464 = vmatprep.subr.mxu0 0.0
    %2465 = vmatpush1.msra.mxu0 0.0
    %2466 = vmatprep.subr.mxu0 0.0
    %2467 = vmatpush1.msra.mxu0 0.0
    %2468 = vmatprep.subr.mxu0 0.0
    %2469 = vmatpush1.msra.mxu0 0.0
    %2470 = vmatprep.subr.mxu0 0.0
    %2471 = vmatpush1.msra.mxu0 0.0
    %2472 = vmatprep.subr.mxu0 0.0
    %2473 = vmatpush1.msra.mxu0 0.0
    %2474 = vmatprep.subr.mxu0 0.0
    %2475 = vmatpush1.msra.mxu0 0.0
    %2476 = vmatprep.subr.mxu0 0.0
    %2477 = vmatpush1.msra.mxu0 0.0
    %2478 = vmatprep.subr.mxu0 0.0
    %2479 = vmatpush1.msra.mxu0 0.0
    %2480 = vmatprep.mubr.f32.mxu0 0.0
    %v2481 = vand.u32 %v2407, 4294901760
    %v2482 = vsub.f32 %v2407, %v2481
    %v2483 = vand.u32 %v2482, 4294901760
    %v2484 = vsub.f32 %v2482, %v2483
    %v2485 = vand.u32 %v2484, 4294901760
    %2486 = vmatmul.mubr.f32.gmra.mrb[0].mxu0 %v2485
    %v2487 = vpop.f32.mrb[0].mxu0
    %v2488 = vadd.f32 %v2369, %v2487
    %v2489 = vpop.f32.mrb[0].mxu0
    %2490 = vmatprep.mubr.f32.mxu0 0.0
    %v2491 = vand.u32 %v2410, 4294901760
    %v2492 = vsub.f32 %v2410, %v2491
    %v2493 = vand.u32 %v2492, 4294901760
    %v2494 = vsub.f32 %v2492, %v2493
    %v2495 = vand.u32 %v2494, 4294901760
    %2496 = vmatmul.mubr.f32.gmra.mrb[0].mxu0 %v2495
    %v2497 = vpop.f32.mrb[0].mxu0
    %v2498 = vadd.f32 %v2375, %v2497
    %v2499 = vpop.f32.mrb[0].mxu0
    %2500 = vdwg.mxu0
    %2501 = vmatprep.subr.mxu0 0.0
    %v2502 = vand.u32 %v2402, 4294901760
    %v2503 = vsub.f32 %v2402, %v2502
    %v2504 = vand.u32 %v2503, 4294901760
    %v2505 = vsub.f32 %v2503, %v2504
    %v2506 = vand.u32 %v2505, 4294901760
    %2507 = vmatpush1.msra.mxu0 %v2506
    %2508 = vmatprep.subr.mxu0 0.0
    %v2509 = vand.u32 %v2403, 4294901760
    %v2510 = vsub.f32 %v2403, %v2509
    %v2511 = vand.u32 %v2510, 4294901760
    %v2512 = vsub.f32 %v2510, %v2511
    %v2513 = vand.u32 %v2512, 4294901760
    %2514 = vmatpush1.msra.mxu0 %v2513
    %2515 = vmatprep.subr.mxu0 0.0
    %v2516 = vand.u32 %v2404, 4294901760
    %v2517 = vsub.f32 %v2404, %v2516
    %v2518 = vand.u32 %v2517, 4294901760
    %v2519 = vsub.f32 %v2517, %v2518
    %v2520 = vand.u32 %v2519, 4294901760
    %2521 = vmatpush1.msra.mxu0 %v2520
    %2522 = vmatprep.subr.mxu0 0.0
    %v2523 = vand.u32 %v2405, 4294901760
    %v2524 = vsub.f32 %v2405, %v2523
    %v2525 = vand.u32 %v2524, 4294901760
    %v2526 = vsub.f32 %v2524, %v2525
    %v2527 = vand.u32 %v2526, 4294901760
    %2528 = vmatpush1.msra.mxu0 %v2527
    %2529 = vmatprep.subr.mxu0 0.0
    %2530 = vmatpush1.msra.mxu0 0.0
    %2531 = vmatprep.subr.mxu0 0.0
    %2532 = vmatpush1.msra.mxu0 0.0
    %2533 = vmatprep.subr.mxu0 0.0
    %2534 = vmatpush1.msra.mxu0 0.0
    %2535 = vmatprep.subr.mxu0 0.0
    %2536 = vmatpush1.msra.mxu0 0.0
    %2537 = vmatprep.subr.mxu0 0.0
    %2538 = vmatpush1.msra.mxu0 0.0
    %2539 = vmatprep.subr.mxu0 0.0
    %2540 = vmatpush1.msra.mxu0 0.0
    %2541 = vmatprep.subr.mxu0 0.0
    %2542 = vmatpush1.msra.mxu0 0.0
    %2543 = vmatprep.subr.mxu0 0.0
    %2544 = vmatpush1.msra.mxu0 0.0
    %2545 = vmatprep.subr.mxu0 0.0
    %2546 = vmatpush1.msra.mxu0 0.0
    %2547 = vmatprep.subr.mxu0 0.0
    %2548 = vmatpush1.msra.mxu0 0.0
    %2549 = vmatprep.subr.mxu0 0.0
    %2550 = vmatpush1.msra.mxu0 0.0
    %2551 = vmatprep.subr.mxu0 0.0
    %2552 = vmatpush1.msra.mxu0 0.0
    %2553 = vmatprep.subr.mxu0 0.0
    %2554 = vmatpush1.msra.mxu0 0.0
    %2555 = vmatprep.subr.mxu0 0.0
    %2556 = vmatpush1.msra.mxu0 0.0
    %2557 = vmatprep.subr.mxu0 0.0
    %2558 = vmatpush1.msra.mxu0 0.0
    %2559 = vmatprep.subr.mxu0 0.0
    %2560 = vmatpush1.msra.mxu0 0.0
    %2561 = vmatprep.subr.mxu0 0.0
    %2562 = vmatpush1.msra.mxu0 0.0
    %2563 = vmatprep.subr.mxu0 0.0
    %2564 = vmatpush1.msra.mxu0 0.0
    %2565 = vmatprep.subr.mxu0 0.0
    %2566 = vmatpush1.msra.mxu0 0.0
    %2567 = vmatprep.subr.mxu0 0.0
    %2568 = vmatpush1.msra.mxu0 0.0
    %2569 = vmatprep.subr.mxu0 0.0
    %2570 = vmatpush1.msra.mxu0 0.0
    %2571 = vmatprep.subr.mxu0 0.0
    %2572 = vmatpush1.msra.mxu0 0.0
    %2573 = vmatprep.subr.mxu0 0.0
    %2574 = vmatpush1.msra.mxu0 0.0
    %2575 = vmatprep.subr.mxu0 0.0
    %2576 = vmatpush1.msra.mxu0 0.0
    %2577 = vmatprep.subr.mxu0 0.0
    %2578 = vmatpush1.msra.mxu0 0.0
    %2579 = vmatprep.subr.mxu0 0.0
    %2580 = vmatpush1.msra.mxu0 0.0
    %2581 = vmatprep.subr.mxu0 0.0
    %2582 = vmatpush1.msra.mxu0 0.0
    %2583 = vmatprep.subr.mxu0 0.0
    %2584 = vmatpush1.msra.mxu0 0.0
    %2585 = vmatprep.mubr.f32.mxu0 0.0
    %v2586 = vand.u32 %v2407, 4294901760
    %2587 = vmatmul.mubr.f32.gmra.mrb[0].mxu0 %v2586
    %v2588 = vpop.f32.mrb[0].mxu0
    %v2589 = vadd.f32 %v2488, %v2588
    %v2590 = vpop.f32.mrb[0].mxu0
    %2591 = vmatprep.mubr.f32.mxu0 0.0
    %v2592 = vand.u32 %v2410, 4294901760
    %2593 = vmatmul.mubr.f32.gmra.mrb[0].mxu0 %v2592
    %v2594 = vpop.f32.mrb[0].mxu0
    %v2595 = vadd.f32 %v2498, %v2594
    %v2596 = vpop.f32.mrb[0].mxu0
    %2597 = vdwg.mxu0
    %2598 = vmatprep.subr.mxu0 0.0
    %v2599 = vand.u32 %v2402, 4294901760
    %v2600 = vsub.f32 %v2402, %v2599
    %2601 = vmatpush1.msra.mxu0 %v2600
    %2602 = vmatprep.subr.mxu0 0.0
    %v2603 = vand.u32 %v2403, 4294901760
    %v2604 = vsub.f32 %v2403, %v2603
    %2605 = vmatpush1.msra.mxu0 %v2604
    %2606 = vmatprep.subr.mxu0 0.0
    %v2607 = vand.u32 %v2404, 4294901760
    %v2608 = vsub.f32 %v2404, %v2607
    %2609 = vmatpush1.msra.mxu0 %v2608
    %2610 = vmatprep.subr.mxu0 0.0
    %v2611 = vand.u32 %v2405, 4294901760
    %v2612 = vsub.f32 %v2405, %v2611
    %2613 = vmatpush1.msra.mxu0 %v2612
    %2614 = vmatprep.subr.mxu0 0.0
    %2615 = vmatpush1.msra.mxu0 0.0
    %2616 = vmatprep.subr.mxu0 0.0
    %2617 = vmatpush1.msra.mxu0 0.0
    %2618 = vmatprep.subr.mxu0 0.0
    %2619 = vmatpush1.msra.mxu0 0.0
    %2620 = vmatprep.subr.mxu0 0.0
    %2621 = vmatpush1.msra.mxu0 0.0
    %2622 = vmatprep.subr.mxu0 0.0
    %2623 = vmatpush1.msra.mxu0 0.0
    %2624 = vmatprep.subr.mxu0 0.0
    %2625 = vmatpush1.msra.mxu0 0.0
    %2626 = vmatprep.subr.mxu0 0.0
    %2627 = vmatpush1.msra.mxu0 0.0
    %2628 = vmatprep.subr.mxu0 0.0
    %2629 = vmatpush1.msra.mxu0 0.0
    %2630 = vmatprep.subr.mxu0 0.0
    %2631 = vmatpush1.msra.mxu0 0.0
    %2632 = vmatprep.subr.mxu0 0.0
    %2633 = vmatpush1.msra.mxu0 0.0
    %2634 = vmatprep.subr.mxu0 0.0
    %2635 = vmatpush1.msra.mxu0 0.0
    %2636 = vmatprep.subr.mxu0 0.0
    %2637 = vmatpush1.msra.mxu0 0.0
    %2638 = vmatprep.subr.mxu0 0.0
    %2639 = vmatpush1.msra.mxu0 0.0
    %2640 = vmatprep.subr.mxu0 0.0
    %2641 = vmatpush1.msra.mxu0 0.0
    %2642 = vmatprep.subr.mxu0 0.0
    %2643 = vmatpush1.msra.mxu0 0.0
    %2644 = vmatprep.subr.mxu0 0.0
    %2645 = vmatpush1.msra.mxu0 0.0
    %2646 = vmatprep.subr.mxu0 0.0
    %2647 = vmatpush1.msra.mxu0 0.0
    %2648 = vmatprep.subr.mxu0 0.0
    %2649 = vmatpush1.msra.mxu0 0.0
    %2650 = vmatprep.subr.mxu0 0.0
    %2651 = vmatpush1.msra.mxu0 0.0
    %2652 = vmatprep.subr.mxu0 0.0
    %2653 = vmatpush1.msra.mxu0 0.0
    %2654 = vmatprep.subr.mxu0 0.0
    %2655 = vmatpush1.msra.mxu0 0.0
    %2656 = vmatprep.subr.mxu0 0.0
    %2657 = vmatpush1.msra.mxu0 0.0
    %2658 = vmatprep.subr.mxu0 0.0
    %2659 = vmatpush1.msra.mxu0 0.0
    %2660 = vmatprep.subr.mxu0 0.0
    %2661 = vmatpush1.msra.mxu0 0.0
    %2662 = vmatprep.subr.mxu0 0.0
    %2663 = vmatpush1.msra.mxu0 0.0
    %2664 = vmatprep.subr.mxu0 0.0
    %2665 = vmatpush1.msra.mxu0 0.0
    %2666 = vmatprep.subr.mxu0 0.0
    %2667 = vmatpush1.msra.mxu0 0.0
    %2668 = vmatprep.subr.mxu0 0.0
    %2669 = vmatpush1.msra.mxu0 0.0
    %2670 = vmatprep.mubr.f32.mxu0 0.0
    %v2671 = vand.u32 %v2407, 4294901760
    %v2672 = vsub.f32 %v2407, %v2671
    %2673 = vmatmul.mubr.f32.gmra.mrb[0].mxu0 %v2672
    %v2674 = vpop.f32.mrb[0].mxu0
    %v2675 = vadd.f32 %v2589, %v2674
    %v2676 = vpop.f32.mrb[0].mxu0
    %2677 = vmatprep.mubr.f32.mxu0 0.0
    %v2678 = vand.u32 %v2410, 4294901760
    %v2679 = vsub.f32 %v2410, %v2678
    %2680 = vmatmul.mubr.f32.gmra.mrb[0].mxu0 %v2679
    %v2681 = vpop.f32.mrb[0].mxu0
    %v2682 = vadd.f32 %v2595, %v2681
    %v2683 = vpop.f32.mrb[0].mxu0
    %2684 = vdwg.mxu0
    %2685 = vmatprep.subr.mxu0 0.0
    %v2686 = vand.u32 %v2402, 4294901760
    %2687 = vmatpush1.msra.mxu0 %v2686
    %2688 = vmatprep.subr.mxu0 0.0
    %v2689 = vand.u32 %v2403, 4294901760
    %2690 = vmatpush1.msra.mxu0 %v2689
    %2691 = vmatprep.subr.mxu0 0.0
    %v2692 = vand.u32 %v2404, 4294901760
    %2693 = vmatpush1.msra.mxu0 %v2692
    %2694 = vmatprep.subr.mxu0 0.0
    %v2695 = vand.u32 %v2405, 4294901760
    %2696 = vmatpush1.msra.mxu0 %v2695
    %2697 = vmatprep.subr.mxu0 0.0
    %2698 = vmatpush1.msra.mxu0 0.0
    %2699 = vmatprep.subr.mxu0 0.0
    %2700 = vmatpush1.msra.mxu0 0.0
    %2701 = vmatprep.subr.mxu0 0.0
    %2702 = vmatpush1.msra.mxu0 0.0
    %2703 = vmatprep.subr.mxu0 0.0
    %2704 = vmatpush1.msra.mxu0 0.0
    %2705 = vmatprep.subr.mxu0 0.0
    %2706 = vmatpush1.msra.mxu0 0.0
    %2707 = vmatprep.subr.mxu0 0.0
    %2708 = vmatpush1.msra.mxu0 0.0
    %2709 = vmatprep.subr.mxu0 0.0
    %2710 = vmatpush1.msra.mxu0 0.0
    %2711 = vmatprep.subr.mxu0 0.0
    %2712 = vmatpush1.msra.mxu0 0.0
    %2713 = vmatprep.subr.mxu0 0.0
    %2714 = vmatpush1.msra.mxu0 0.0
    %2715 = vmatprep.subr.mxu0 0.0
    %2716 = vmatpush1.msra.mxu0 0.0
    %2717 = vmatprep.subr.mxu0 0.0
    %2718 = vmatpush1.msra.mxu0 0.0
    %2719 = vmatprep.subr.mxu0 0.0
    %2720 = vmatpush1.msra.mxu0 0.0
    %2721 = vmatprep.subr.mxu0 0.0
    %2722 = vmatpush1.msra.mxu0 0.0
    %2723 = vmatprep.subr.mxu0 0.0
    %2724 = vmatpush1.msra.mxu0 0.0
    %2725 = vmatprep.subr.mxu0 0.0
    %2726 = vmatpush1.msra.mxu0 0.0
    %2727 = vmatprep.subr.mxu0 0.0
    %2728 = vmatpush1.msra.mxu0 0.0
    %2729 = vmatprep.subr.mxu0 0.0
    %2730 = vmatpush1.msra.mxu0 0.0
    %2731 = vmatprep.subr.mxu0 0.0
    %2732 = vmatpush1.msra.mxu0 0.0
    %2733 = vmatprep.subr.mxu0 0.0
    %2734 = vmatpush1.msra.mxu0 0.0
    %2735 = vmatprep.subr.mxu0 0.0
    %2736 = vmatpush1.msra.mxu0 0.0
    %2737 = vmatprep.subr.mxu0 0.0
    %2738 = vmatpush1.msra.mxu0 0.0
    %2739 = vmatprep.subr.mxu0 0.0
    %2740 = vmatpush1.msra.mxu0 0.0
    %2741 = vmatprep.subr.mxu0 0.0
    %2742 = vmatpush1.msra.mxu0 0.0
    %2743 = vmatprep.subr.mxu0 0.0
    %2744 = vmatpush1.msra.mxu0 0.0
    %2745 = vmatprep.subr.mxu0 0.0
    %2746 = vmatpush1.msra.mxu0 0.0
    %2747 = vmatprep.subr.mxu0 0.0
    %2748 = vmatpush1.msra.mxu0 0.0
    %2749 = vmatprep.subr.mxu0 0.0
    %2750 = vmatpush1.msra.mxu0 0.0
    %2751 = vmatprep.subr.mxu0 0.0
    %2752 = vmatpush1.msra.mxu0 0.0
    %2753 = vmatprep.mubr.f32.mxu0 0.0
    %v2754 = vand.u32 %v2407, 4294901760
    %v2755 = vsub.f32 %v2407, %v2754
    %v2756 = vand.u32 %v2755, 4294901760
    %2757 = vmatmul.mubr.f32.gmra.mrb[0].mxu0 %v2756
    %v2758 = vpop.f32.mrb[0].mxu0
    %v2759 = vadd.f32 %v2675, %v2758
    %v2760 = vpop.f32.mrb[0].mxu0
    %2761 = vmatprep.mubr.f32.mxu0 0.0
    %v2762 = vand.u32 %v2410, 4294901760
    %v2763 = vsub.f32 %v2410, %v2762
    %v2764 = vand.u32 %v2763, 4294901760
    %2765 = vmatmul.mubr.f32.gmra.mrb[0].mxu0 %v2764
    %v2766 = vpop.f32.mrb[0].mxu0
    %v2767 = vadd.f32 %v2682, %v2766
    %v2768 = vpop.f32.mrb[0].mxu0
    %2769 = vdwg.mxu0
    %2770 = vmatprep.subr.mxu0 0.0
    %v2771 = vand.u32 %v2402, 4294901760
    %v2772 = vsub.f32 %v2402, %v2771
    %v2773 = vand.u32 %v2772, 4294901760
    %2774 = vmatpush1.msra.mxu0 %v2773
    %2775 = vmatprep.subr.mxu0 0.0
    %v2776 = vand.u32 %v2403, 4294901760
    %v2777 = vsub.f32 %v2403, %v2776
    %v2778 = vand.u32 %v2777, 4294901760
    %2779 = vmatpush1.msra.mxu0 %v2778
    %2780 = vmatprep.subr.mxu0 0.0
    %v2781 = vand.u32 %v2404, 4294901760
    %v2782 = vsub.f32 %v2404, %v2781
    %v2783 = vand.u32 %v2782, 4294901760
    %2784 = vmatpush1.msra.mxu0 %v2783
    %2785 = vmatprep.subr.mxu0 0.0
    %v2786 = vand.u32 %v2405, 4294901760
    %v2787 = vsub.f32 %v2405, %v2786
    %v2788 = vand.u32 %v2787, 4294901760
    %2789 = vmatpush1.msra.mxu0 %v2788
    %2790 = vmatprep.subr.mxu0 0.0
    %2791 = vmatpush1.msra.mxu0 0.0
    %2792 = vmatprep.subr.mxu0 0.0
    %2793 = vmatpush1.msra.mxu0 0.0
    %2794 = vmatprep.subr.mxu0 0.0
    %2795 = vmatpush1.msra.mxu0 0.0
    %2796 = vmatprep.subr.mxu0 0.0
    %2797 = vmatpush1.msra.mxu0 0.0
    %2798 = vmatprep.subr.mxu0 0.0
    %2799 = vmatpush1.msra.mxu0 0.0
    %2800 = vmatprep.subr.mxu0 0.0
    %2801 = vmatpush1.msra.mxu0 0.0
    %2802 = vmatprep.subr.mxu0 0.0
    %2803 = vmatpush1.msra.mxu0 0.0
    %2804 = vmatprep.subr.mxu0 0.0
    %2805 = vmatpush1.msra.mxu0 0.0
    %2806 = vmatprep.subr.mxu0 0.0
    %2807 = vmatpush1.msra.mxu0 0.0
    %2808 = vmatprep.subr.mxu0 0.0
    %2809 = vmatpush1.msra.mxu0 0.0
    %2810 = vmatprep.subr.mxu0 0.0
    %2811 = vmatpush1.msra.mxu0 0.0
    %2812 = vmatprep.subr.mxu0 0.0
    %2813 = vmatpush1.msra.mxu0 0.0
    %2814 = vmatprep.subr.mxu0 0.0
    %2815 = vmatpush1.msra.mxu0 0.0
    %2816 = vmatprep.subr.mxu0 0.0
    %2817 = vmatpush1.msra.mxu0 0.0
    %2818 = vmatprep.subr.mxu0 0.0
    %2819 = vmatpush1.msra.mxu0 0.0
    %2820 = vmatprep.subr.mxu0 0.0
    %2821 = vmatpush1.msra.mxu0 0.0
    %2822 = vmatprep.subr.mxu0 0.0
    %2823 = vmatpush1.msra.mxu0 0.0
    %2824 = vmatprep.subr.mxu0 0.0
    %2825 = vmatpush1.msra.mxu0 0.0
    %2826 = vmatprep.subr.mxu0 0.0
    %2827 = vmatpush1.msra.mxu0 0.0
    %2828 = vmatprep.subr.mxu0 0.0
    %2829 = vmatpush1.msra.mxu0 0.0
    %2830 = vmatprep.subr.mxu0 0.0
    %2831 = vmatpush1.msra.mxu0 0.0
    %2832 = vmatprep.subr.mxu0 0.0
    %2833 = vmatpush1.msra.mxu0 0.0
    %2834 = vmatprep.subr.mxu0 0.0
    %2835 = vmatpush1.msra.mxu0 0.0
    %2836 = vmatprep.subr.mxu0 0.0
    %2837 = vmatpush1.msra.mxu0 0.0
    %2838 = vmatprep.subr.mxu0 0.0
    %2839 = vmatpush1.msra.mxu0 0.0
    %2840 = vmatprep.subr.mxu0 0.0
    %2841 = vmatpush1.msra.mxu0 0.0
    %2842 = vmatprep.subr.mxu0 0.0
    %2843 = vmatpush1.msra.mxu0 0.0
    %2844 = vmatprep.subr.mxu0 0.0
    %2845 = vmatpush1.msra.mxu0 0.0
    %2846 = vmatprep.mubr.f32.mxu0 0.0
    %v2847 = vand.u32 %v2407, 4294901760
    %2848 = vmatmul.mubr.f32.gmra.mrb[0].mxu0 %v2847
    %v2849 = vpop.f32.mrb[0].mxu0
    %v2850 = vadd.f32 %v2759, %v2849
    %v2851 = vpop.f32.mrb[0].mxu0
    %2852 = vmatprep.mubr.f32.mxu0 0.0
    %v2853 = vand.u32 %v2410, 4294901760
    %2854 = vmatmul.mubr.f32.gmra.mrb[0].mxu0 %v2853
    %v2855 = vpop.f32.mrb[0].mxu0
    %v2856 = vadd.f32 %v2767, %v2855
    %v2857 = vpop.f32.mrb[0].mxu0
    %2858 = vdwg.mxu0
    %2859 = vmatprep.subr.mxu0 0.0
    %v2860 = vand.u32 %v2402, 4294901760
    %2861 = vmatpush1.msra.mxu0 %v2860
    %2862 = vmatprep.subr.mxu0 0.0
    %v2863 = vand.u32 %v2403, 4294901760
    %2864 = vmatpush1.msra.mxu0 %v2863
    %2865 = vmatprep.subr.mxu0 0.0
    %v2866 = vand.u32 %v2404, 4294901760
    %2867 = vmatpush1.msra.mxu0 %v2866
    %2868 = vmatprep.subr.mxu0 0.0
    %v2869 = vand.u32 %v2405, 4294901760
    %2870 = vmatpush1.msra.mxu0 %v2869
    %2871 = vmatprep.subr.mxu0 0.0
    %2872 = vmatpush1.msra.mxu0 0.0
    %2873 = vmatprep.subr.mxu0 0.0
    %2874 = vmatpush1.msra.mxu0 0.0
    %2875 = vmatprep.subr.mxu0 0.0
    %2876 = vmatpush1.msra.mxu0 0.0
    %2877 = vmatprep.subr.mxu0 0.0
    %2878 = vmatpush1.msra.mxu0 0.0
    %2879 = vmatprep.subr.mxu0 0.0
    %2880 = vmatpush1.msra.mxu0 0.0
    %2881 = vmatprep.subr.mxu0 0.0
    %2882 = vmatpush1.msra.mxu0 0.0
    %2883 = vmatprep.subr.mxu0 0.0
    %2884 = vmatpush1.msra.mxu0 0.0
    %2885 = vmatprep.subr.mxu0 0.0
    %2886 = vmatpush1.msra.mxu0 0.0
    %2887 = vmatprep.subr.mxu0 0.0
    %2888 = vmatpush1.msra.mxu0 0.0
    %2889 = vmatprep.subr.mxu0 0.0
    %2890 = vmatpush1.msra.mxu0 0.0
    %2891 = vmatprep.subr.mxu0 0.0
    %2892 = vmatpush1.msra.mxu0 0.0
    %2893 = vmatprep.subr.mxu0 0.0
    %2894 = vmatpush1.msra.mxu0 0.0
    %2895 = vmatprep.subr.mxu0 0.0
    %2896 = vmatpush1.msra.mxu0 0.0
    %2897 = vmatprep.subr.mxu0 0.0
    %2898 = vmatpush1.msra.mxu0 0.0
    %2899 = vmatprep.subr.mxu0 0.0
    %2900 = vmatpush1.msra.mxu0 0.0
    %2901 = vmatprep.subr.mxu0 0.0
    %2902 = vmatpush1.msra.mxu0 0.0
    %2903 = vmatprep.subr.mxu0 0.0
    %2904 = vmatpush1.msra.mxu0 0.0
    %2905 = vmatprep.subr.mxu0 0.0
    %2906 = vmatpush1.msra.mxu0 0.0
    %2907 = vmatprep.subr.mxu0 0.0
    %2908 = vmatpush1.msra.mxu0 0.0
    %2909 = vmatprep.subr.mxu0 0.0
    %2910 = vmatpush1.msra.mxu0 0.0
    %2911 = vmatprep.subr.mxu0 0.0
    %2912 = vmatpush1.msra.mxu0 0.0
    %2913 = vmatprep.subr.mxu0 0.0
    %2914 = vmatpush1.msra.mxu0 0.0
    %2915 = vmatprep.subr.mxu0 0.0
    %2916 = vmatpush1.msra.mxu0 0.0
    %2917 = vmatprep.subr.mxu0 0.0
    %2918 = vmatpush1.msra.mxu0 0.0
    %2919 = vmatprep.subr.mxu0 0.0
    %2920 = vmatpush1.msra.mxu0 0.0
    %2921 = vmatprep.subr.mxu0 0.0
    %2922 = vmatpush1.msra.mxu0 0.0
    %2923 = vmatprep.subr.mxu0 0.0
    %2924 = vmatpush1.msra.mxu0 0.0
    %2925 = vmatprep.subr.mxu0 0.0
    %2926 = vmatpush1.msra.mxu0 0.0
    %2927 = vmatprep.mubr.f32.mxu0 0.0
    %v2928 = vand.u32 %v2407, 4294901760
    %2929 = vmatmul.mubr.f32.gmra.mrb[0].mxu0 %v2928
    %v2930 = vpop.f32.mrb[0].mxu0
    %v2931 = vadd.f32 %v2850, %v2930
    %v2932 = vpop.f32.mrb[0].mxu0
    %2933 = vmatprep.mubr.f32.mxu0 0.0
    %v2934 = vand.u32 %v2410, 4294901760
    %2935 = vmatmul.mubr.f32.gmra.mrb[0].mxu0 %v2934
    %v2936 = vpop.f32.mrb[0].mxu0
    %v2937 = vadd.f32 %v2856, %v2936
    %v2938 = vpop.f32.mrb[0].mxu0
    %2939 = vdwg.mxu0
    %v2940 = vld [vmem:[#allocation2 + $0xd8] sm:$0xff]
    %v2941 = vld [vmem:[#allocation2 + $0xe0] sm:$0xff]
    %v2942 = vld [vmem:[#allocation2 + $0xe8] sm:$0xff]
    %v2943 = vld [vmem:[#allocation2 + $0xf0] sm:$0xff]
    %v2945 = vsel %vm626, %v2381, 0
    %v2948 = vsel %vm626, %v2387, 0
    %2950 = vmatprep.subr.mxu0 0.0
    %v2951 = vand.u32 %v2940, 4294901760
    %2952 = vmatpush1.msra.mxu0 %v2951
    %2953 = vmatprep.subr.mxu0 0.0
    %v2954 = vand.u32 %v2941, 4294901760
    %2955 = vmatpush1.msra.mxu0 %v2954
    %2956 = vmatprep.subr.mxu0 0.0
    %v2957 = vand.u32 %v2942, 4294901760
    %2958 = vmatpush1.msra.mxu0 %v2957
    %2959 = vmatprep.subr.mxu0 0.0
    %v2960 = vand.u32 %v2943, 4294901760
    %2961 = vmatpush1.msra.mxu0 %v2960
    %2962 = vmatprep.subr.mxu0 0.0
    %2963 = vmatpush1.msra.mxu0 0.0
    %2964 = vmatprep.subr.mxu0 0.0
    %2965 = vmatpush1.msra.mxu0 0.0
    %2966 = vmatprep.subr.mxu0 0.0
    %2967 = vmatpush1.msra.mxu0 0.0
    %2968 = vmatprep.subr.mxu0 0.0
    %2969 = vmatpush1.msra.mxu0 0.0
    %2970 = vmatprep.subr.mxu0 0.0
    %2971 = vmatpush1.msra.mxu0 0.0
    %2972 = vmatprep.subr.mxu0 0.0
    %2973 = vmatpush1.msra.mxu0 0.0
    %2974 = vmatprep.subr.mxu0 0.0
    %2975 = vmatpush1.msra.mxu0 0.0
    %2976 = vmatprep.subr.mxu0 0.0
    %2977 = vmatpush1.msra.mxu0 0.0
    %2978 = vmatprep.subr.mxu0 0.0
    %2979 = vmatpush1.msra.mxu0 0.0
    %2980 = vmatprep.subr.mxu0 0.0
    %2981 = vmatpush1.msra.mxu0 0.0
    %2982 = vmatprep.subr.mxu0 0.0
    %2983 = vmatpush1.msra.mxu0 0.0
    %2984 = vmatprep.subr.mxu0 0.0
    %2985 = vmatpush1.msra.mxu0 0.0
    %2986 = vmatprep.subr.mxu0 0.0
    %2987 = vmatpush1.msra.mxu0 0.0
    %2988 = vmatprep.subr.mxu0 0.0
    %2989 = vmatpush1.msra.mxu0 0.0
    %2990 = vmatprep.subr.mxu0 0.0
    %2991 = vmatpush1.msra.mxu0 0.0
    %2992 = vmatprep.subr.mxu0 0.0
    %2993 = vmatpush1.msra.mxu0 0.0
    %2994 = vmatprep.subr.mxu0 0.0
    %2995 = vmatpush1.msra.mxu0 0.0
    %2996 = vmatprep.subr.mxu0 0.0
    %2997 = vmatpush1.msra.mxu0 0.0
    %2998 = vmatprep.subr.mxu0 0.0
    %2999 = vmatpush1.msra.mxu0 0.0
    %3000 = vmatprep.subr.mxu0 0.0
    %3001 = vmatpush1.msra.mxu0 0.0
    %3002 = vmatprep.subr.mxu0 0.0
    %3003 = vmatpush1.msra.mxu0 0.0
    %3004 = vmatprep.subr.mxu0 0.0
    %3005 = vmatpush1.msra.mxu0 0.0
    %3006 = vmatprep.subr.mxu0 0.0
    %3007 = vmatpush1.msra.mxu0 0.0
    %3008 = vmatprep.subr.mxu0 0.0
    %3009 = vmatpush1.msra.mxu0 0.0
    %3010 = vmatprep.subr.mxu0 0.0
    %3011 = vmatpush1.msra.mxu0 0.0
    %3012 = vmatprep.subr.mxu0 0.0
    %3013 = vmatpush1.msra.mxu0 0.0
    %3014 = vmatprep.subr.mxu0 0.0
    %3015 = vmatpush1.msra.mxu0 0.0
    %3016 = vmatprep.subr.mxu0 0.0
    %3017 = vmatpush1.msra.mxu0 0.0
    %3018 = vmatprep.mubr.f32.mxu0 0.0
    %v3019 = vand.u32 %v2945, 4294901760
    %v3020 = vsub.f32 %v2945, %v3019
    %v3021 = vand.u32 %v3020, 4294901760
    %v3022 = vsub.f32 %v3020, %v3021
    %v3023 = vand.u32 %v3022, 4294901760
    %3024 = vmatmul.mubr.f32.gmra.mrb[0].mxu0 %v3023
    %v3025 = vpop.f32.mrb[0].mxu0
    %v3026 = vadd.f32 0.0, %v3025
    %v3027 = vpop.f32.mrb[0].mxu0
    %3028 = vmatprep.mubr.f32.mxu0 0.0
    %v3029 = vand.u32 %v2948, 4294901760
    %v3030 = vsub.f32 %v2948, %v3029
    %v3031 = vand.u32 %v3030, 4294901760
    %v3032 = vsub.f32 %v3030, %v3031
    %v3033 = vand.u32 %v3032, 4294901760
    %3034 = vmatmul.mubr.f32.gmra.mrb[0].mxu0 %v3033
    %v3035 = vpop.f32.mrb[0].mxu0
    %v3036 = vadd.f32 0.0, %v3035
    %v3037 = vpop.f32.mrb[0].mxu0
    %3038 = vdwg.mxu0
    %3039 = vmatprep.subr.mxu0 0.0
    %v3040 = vand.u32 %v2940, 4294901760
    %v3041 = vsub.f32 %v2940, %v3040
    %v3042 = vand.u32 %v3041, 4294901760
    %v3043 = vsub.f32 %v3041, %v3042
    %v3044 = vand.u32 %v3043, 4294901760
    %3045 = vmatpush1.msra.mxu0 %v3044
    %3046 = vmatprep.subr.mxu0 0.0
    %v3047 = vand.u32 %v2941, 4294901760
    %v3048 = vsub.f32 %v2941, %v3047
    %v3049 = vand.u32 %v3048, 4294901760
    %v3050 = vsub.f32 %v3048, %v3049
    %v3051 = vand.u32 %v3050, 4294901760
    %3052 = vmatpush1.msra.mxu0 %v3051
    %3053 = vmatprep.subr.mxu0 0.0
    %v3054 = vand.u32 %v2942, 4294901760
    %v3055 = vsub.f32 %v2942, %v3054
    %v3056 = vand.u32 %v3055, 4294901760
    %v3057 = vsub.f32 %v3055, %v3056
    %v3058 = vand.u32 %v3057, 4294901760
    %3059 = vmatpush1.msra.mxu0 %v3058
    %3060 = vmatprep.subr.mxu0 0.0
    %v3061 = vand.u32 %v2943, 4294901760
    %v3062 = vsub.f32 %v2943, %v3061
    %v3063 = vand.u32 %v3062, 4294901760
    %v3064 = vsub.f32 %v3062, %v3063
    %v3065 = vand.u32 %v3064, 4294901760
    %3066 = vmatpush1.msra.mxu0 %v3065
    %3067 = vmatprep.subr.mxu0 0.0
    %3068 = vmatpush1.msra.mxu0 0.0
    %3069 = vmatprep.subr.mxu0 0.0
    %3070 = vmatpush1.msra.mxu0 0.0
    %3071 = vmatprep.subr.mxu0 0.0
    %3072 = vmatpush1.msra.mxu0 0.0
    %3073 = vmatprep.subr.mxu0 0.0
    %3074 = vmatpush1.msra.mxu0 0.0
    %3075 = vmatprep.subr.mxu0 0.0
    %3076 = vmatpush1.msra.mxu0 0.0
    %3077 = vmatprep.subr.mxu0 0.0
    %3078 = vmatpush1.msra.mxu0 0.0
    %3079 = vmatprep.subr.mxu0 0.0
    %3080 = vmatpush1.msra.mxu0 0.0
    %3081 = vmatprep.subr.mxu0 0.0
    %3082 = vmatpush1.msra.mxu0 0.0
    %3083 = vmatprep.subr.mxu0 0.0
    %3084 = vmatpush1.msra.mxu0 0.0
    %3085 = vmatprep.subr.mxu0 0.0
    %3086 = vmatpush1.msra.mxu0 0.0
    %3087 = vmatprep.subr.mxu0 0.0
    %3088 = vmatpush1.msra.mxu0 0.0
    %3089 = vmatprep.subr.mxu0 0.0
    %3090 = vmatpush1.msra.mxu0 0.0
    %3091 = vmatprep.subr.mxu0 0.0
    %3092 = vmatpush1.msra.mxu0 0.0
    %3093 = vmatprep.subr.mxu0 0.0
    %3094 = vmatpush1.msra.mxu0 0.0
    %3095 = vmatprep.subr.mxu0 0.0
    %3096 = vmatpush1.msra.mxu0 0.0
    %3097 = vmatprep.subr.mxu0 0.0
    %3098 = vmatpush1.msra.mxu0 0.0
    %3099 = vmatprep.subr.mxu0 0.0
    %3100 = vmatpush1.msra.mxu0 0.0
    %3101 = vmatprep.subr.mxu0 0.0
    %3102 = vmatpush1.msra.mxu0 0.0
    %3103 = vmatprep.subr.mxu0 0.0
    %3104 = vmatpush1.msra.mxu0 0.0
    %3105 = vmatprep.subr.mxu0 0.0
    %3106 = vmatpush1.msra.mxu0 0.0
    %3107 = vmatprep.subr.mxu0 0.0
    %3108 = vmatpush1.msra.mxu0 0.0
    %3109 = vmatprep.subr.mxu0 0.0
    %3110 = vmatpush1.msra.mxu0 0.0
    %3111 = vmatprep.subr.mxu0 0.0
    %3112 = vmatpush1.msra.mxu0 0.0
    %3113 = vmatprep.subr.mxu0 0.0
    %3114 = vmatpush1.msra.mxu0 0.0
    %3115 = vmatprep.subr.mxu0 0.0
    %3116 = vmatpush1.msra.mxu0 0.0
    %3117 = vmatprep.subr.mxu0 0.0
    %3118 = vmatpush1.msra.mxu0 0.0
    %3119 = vmatprep.subr.mxu0 0.0
    %3120 = vmatpush1.msra.mxu0 0.0
    %3121 = vmatprep.subr.mxu0 0.0
    %3122 = vmatpush1.msra.mxu0 0.0
    %3123 = vmatprep.mubr.f32.mxu0 0.0
    %v3124 = vand.u32 %v2945, 4294901760
    %3125 = vmatmul.mubr.f32.gmra.mrb[0].mxu0 %v3124
    %v3126 = vpop.f32.mrb[0].mxu0
    %v3127 = vadd.f32 %v3026, %v3126
    %v3128 = vpop.f32.mrb[0].mxu0
    %3129 = vmatprep.mubr.f32.mxu0 0.0
    %v3130 = vand.u32 %v2948, 4294901760
    %3131 = vmatmul.mubr.f32.gmra.mrb[0].mxu0 %v3130
    %v3132 = vpop.f32.mrb[0].mxu0
    %v3133 = vadd.f32 %v3036, %v3132
    %v3134 = vpop.f32.mrb[0].mxu0
    %3135 = vdwg.mxu0
    %3136 = vmatprep.subr.mxu0 0.0
    %v3137 = vand.u32 %v2940, 4294901760
    %v3138 = vsub.f32 %v2940, %v3137
    %3139 = vmatpush1.msra.mxu0 %v3138
    %3140 = vmatprep.subr.mxu0 0.0
    %v3141 = vand.u32 %v2941, 4294901760
    %v3142 = vsub.f32 %v2941, %v3141
    %3143 = vmatpush1.msra.mxu0 %v3142
    %3144 = vmatprep.subr.mxu0 0.0
    %v3145 = vand.u32 %v2942, 4294901760
    %v3146 = vsub.f32 %v2942, %v3145
    %3147 = vmatpush1.msra.mxu0 %v3146
    %3148 = vmatprep.subr.mxu0 0.0
    %v3149 = vand.u32 %v2943, 4294901760
    %v3150 = vsub.f32 %v2943, %v3149
    %3151 = vmatpush1.msra.mxu0 %v3150
    %3152 = vmatprep.subr.mxu0 0.0
    %3153 = vmatpush1.msra.mxu0 0.0
    %3154 = vmatprep.subr.mxu0 0.0
    %3155 = vmatpush1.msra.mxu0 0.0
    %3156 = vmatprep.subr.mxu0 0.0
    %3157 = vmatpush1.msra.mxu0 0.0
    %3158 = vmatprep.subr.mxu0 0.0
    %3159 = vmatpush1.msra.mxu0 0.0
    %3160 = vmatprep.subr.mxu0 0.0
    %3161 = vmatpush1.msra.mxu0 0.0
    %3162 = vmatprep.subr.mxu0 0.0
    %3163 = vmatpush1.msra.mxu0 0.0
    %3164 = vmatprep.subr.mxu0 0.0
    %3165 = vmatpush1.msra.mxu0 0.0
    %3166 = vmatprep.subr.mxu0 0.0
    %3167 = vmatpush1.msra.mxu0 0.0
    %3168 = vmatprep.subr.mxu0 0.0
    %3169 = vmatpush1.msra.mxu0 0.0
    %3170 = vmatprep.subr.mxu0 0.0
    %3171 = vmatpush1.msra.mxu0 0.0
    %3172 = vmatprep.subr.mxu0 0.0
    %3173 = vmatpush1.msra.mxu0 0.0
    %3174 = vmatprep.subr.mxu0 0.0
    %3175 = vmatpush1.msra.mxu0 0.0
    %3176 = vmatprep.subr.mxu0 0.0
    %3177 = vmatpush1.msra.mxu0 0.0
    %3178 = vmatprep.subr.mxu0 0.0
    %3179 = vmatpush1.msra.mxu0 0.0
    %3180 = vmatprep.subr.mxu0 0.0
    %3181 = vmatpush1.msra.mxu0 0.0
    %3182 = vmatprep.subr.mxu0 0.0
    %3183 = vmatpush1.msra.mxu0 0.0
    %3184 = vmatprep.subr.mxu0 0.0
    %3185 = vmatpush1.msra.mxu0 0.0
    %3186 = vmatprep.subr.mxu0 0.0
    %3187 = vmatpush1.msra.mxu0 0.0
    %3188 = vmatprep.subr.mxu0 0.0
    %3189 = vmatpush1.msra.mxu0 0.0
    %3190 = vmatprep.subr.mxu0 0.0
    %3191 = vmatpush1.msra.mxu0 0.0
    %3192 = vmatprep.subr.mxu0 0.0
    %3193 = vmatpush1.msra.mxu0 0.0
    %3194 = vmatprep.subr.mxu0 0.0
    %3195 = vmatpush1.msra.mxu0 0.0
    %3196 = vmatprep.subr.mxu0 0.0
    %3197 = vmatpush1.msra.mxu0 0.0
    %3198 = vmatprep.subr.mxu0 0.0
    %3199 = vmatpush1.msra.mxu0 0.0
    %3200 = vmatprep.subr.mxu0 0.0
    %3201 = vmatpush1.msra.mxu0 0.0
    %3202 = vmatprep.subr.mxu0 0.0
    %3203 = vmatpush1.msra.mxu0 0.0
    %3204 = vmatprep.subr.mxu0 0.0
    %3205 = vmatpush1.msra.mxu0 0.0
    %3206 = vmatprep.subr.mxu0 0.0
    %3207 = vmatpush1.msra.mxu0 0.0
    %3208 = vmatprep.mubr.f32.mxu0 0.0
    %v3209 = vand.u32 %v2945, 4294901760
    %v3210 = vsub.f32 %v2945, %v3209
    %3211 = vmatmul.mubr.f32.gmra.mrb[0].mxu0 %v3210
    %v3212 = vpop.f32.mrb[0].mxu0
    %v3213 = vadd.f32 %v3127, %v3212
    %v3214 = vpop.f32.mrb[0].mxu0
    %3215 = vmatprep.mubr.f32.mxu0 0.0
    %v3216 = vand.u32 %v2948, 4294901760
    %v3217 = vsub.f32 %v2948, %v3216
    %3218 = vmatmul.mubr.f32.gmra.mrb[0].mxu0 %v3217
    %v3219 = vpop.f32.mrb[0].mxu0
    %v3220 = vadd.f32 %v3133, %v3219
    %v3221 = vpop.f32.mrb[0].mxu0
    %3222 = vdwg.mxu0
    %3223 = vmatprep.subr.mxu0 0.0
    %v3224 = vand.u32 %v2940, 4294901760
    %3225 = vmatpush1.msra.mxu0 %v3224
    %3226 = vmatprep.subr.mxu0 0.0
    %v3227 = vand.u32 %v2941, 4294901760
    %3228 = vmatpush1.msra.mxu0 %v3227
    %3229 = vmatprep.subr.mxu0 0.0
    %v3230 = vand.u32 %v2942, 4294901760
    %3231 = vmatpush1.msra.mxu0 %v3230
    %3232 = vmatprep.subr.mxu0 0.0
    %v3233 = vand.u32 %v2943, 4294901760
    %3234 = vmatpush1.msra.mxu0 %v3233
    %3235 = vmatprep.subr.mxu0 0.0
    %3236 = vmatpush1.msra.mxu0 0.0
    %3237 = vmatprep.subr.mxu0 0.0
    %3238 = vmatpush1.msra.mxu0 0.0
    %3239 = vmatprep.subr.mxu0 0.0
    %3240 = vmatpush1.msra.mxu0 0.0
    %3241 = vmatprep.subr.mxu0 0.0
    %3242 = vmatpush1.msra.mxu0 0.0
    %3243 = vmatprep.subr.mxu0 0.0
    %3244 = vmatpush1.msra.mxu0 0.0
    %3245 = vmatprep.subr.mxu0 0.0
    %3246 = vmatpush1.msra.mxu0 0.0
    %3247 = vmatprep.subr.mxu0 0.0
    %3248 = vmatpush1.msra.mxu0 0.0
    %3249 = vmatprep.subr.mxu0 0.0
    %3250 = vmatpush1.msra.mxu0 0.0
    %3251 = vmatprep.subr.mxu0 0.0
    %3252 = vmatpush1.msra.mxu0 0.0
    %3253 = vmatprep.subr.mxu0 0.0
    %3254 = vmatpush1.msra.mxu0 0.0
    %3255 = vmatprep.subr.mxu0 0.0
    %3256 = vmatpush1.msra.mxu0 0.0
    %3257 = vmatprep.subr.mxu0 0.0
    %3258 = vmatpush1.msra.mxu0 0.0
    %3259 = vmatprep.subr.mxu0 0.0
    %3260 = vmatpush1.msra.mxu0 0.0
    %3261 = vmatprep.subr.mxu0 0.0
    %3262 = vmatpush1.msra.mxu0 0.0
    %3263 = vmatprep.subr.mxu0 0.0
    %3264 = vmatpush1.msra.mxu0 0.0
    %3265 = vmatprep.subr.mxu0 0.0
    %3266 = vmatpush1.msra.mxu0 0.0
    %3267 = vmatprep.subr.mxu0 0.0
    %3268 = vmatpush1.msra.mxu0 0.0
    %3269 = vmatprep.subr.mxu0 0.0
    %3270 = vmatpush1.msra.mxu0 0.0
    %3271 = vmatprep.subr.mxu0 0.0
    %3272 = vmatpush1.msra.mxu0 0.0
    %3273 = vmatprep.subr.mxu0 0.0
    %3274 = vmatpush1.msra.mxu0 0.0
    %3275 = vmatprep.subr.mxu0 0.0
    %3276 = vmatpush1.msra.mxu0 0.0
    %3277 = vmatprep.subr.mxu0 0.0
    %3278 = vmatpush1.msra.mxu0 0.0
    %3279 = vmatprep.subr.mxu0 0.0
    %3280 = vmatpush1.msra.mxu0 0.0
    %3281 = vmatprep.subr.mxu0 0.0
    %3282 = vmatpush1.msra.mxu0 0.0
    %3283 = vmatprep.subr.mxu0 0.0
    %3284 = vmatpush1.msra.mxu0 0.0
    %3285 = vmatprep.subr.mxu0 0.0
    %3286 = vmatpush1.msra.mxu0 0.0
    %3287 = vmatprep.subr.mxu0 0.0
    %3288 = vmatpush1.msra.mxu0 0.0
    %3289 = vmatprep.subr.mxu0 0.0
    %3290 = vmatpush1.msra.mxu0 0.0
    %3291 = vmatprep.mubr.f32.mxu0 0.0
    %v3292 = vand.u32 %v2945, 4294901760
    %v3293 = vsub.f32 %v2945, %v3292
    %v3294 = vand.u32 %v3293, 4294901760
    %3295 = vmatmul.mubr.f32.gmra.mrb[0].mxu0 %v3294
    %v3296 = vpop.f32.mrb[0].mxu0
    %v3297 = vadd.f32 %v3213, %v3296
    %v3298 = vpop.f32.mrb[0].mxu0
    %3299 = vmatprep.mubr.f32.mxu0 0.0
    %v3300 = vand.u32 %v2948, 4294901760
    %v3301 = vsub.f32 %v2948, %v3300
    %v3302 = vand.u32 %v3301, 4294901760
    %3303 = vmatmul.mubr.f32.gmra.mrb[0].mxu0 %v3302
    %v3304 = vpop.f32.mrb[0].mxu0
    %v3305 = vadd.f32 %v3220, %v3304
    %v3306 = vpop.f32.mrb[0].mxu0
    %3307 = vdwg.mxu0
    %3308 = vmatprep.subr.mxu0 0.0
    %v3309 = vand.u32 %v2940, 4294901760
    %v3310 = vsub.f32 %v2940, %v3309
    %v3311 = vand.u32 %v3310, 4294901760
    %3312 = vmatpush1.msra.mxu0 %v3311
    %3313 = vmatprep.subr.mxu0 0.0
    %v3314 = vand.u32 %v2941, 4294901760
    %v3315 = vsub.f32 %v2941, %v3314
    %v3316 = vand.u32 %v3315, 4294901760
    %3317 = vmatpush1.msra.mxu0 %v3316
    %3318 = vmatprep.subr.mxu0 0.0
    %v3319 = vand.u32 %v2942, 4294901760
    %v3320 = vsub.f32 %v2942, %v3319
    %v3321 = vand.u32 %v3320, 4294901760
    %3322 = vmatpush1.msra.mxu0 %v3321
    %3323 = vmatprep.subr.mxu0 0.0
    %v3324 = vand.u32 %v2943, 4294901760
    %v3325 = vsub.f32 %v2943, %v3324
    %v3326 = vand.u32 %v3325, 4294901760
    %3327 = vmatpush1.msra.mxu0 %v3326
    %3328 = vmatprep.subr.mxu0 0.0
    %3329 = vmatpush1.msra.mxu0 0.0
    %3330 = vmatprep.subr.mxu0 0.0
    %3331 = vmatpush1.msra.mxu0 0.0
    %3332 = vmatprep.subr.mxu0 0.0
    %3333 = vmatpush1.msra.mxu0 0.0
    %3334 = vmatprep.subr.mxu0 0.0
    %3335 = vmatpush1.msra.mxu0 0.0
    %3336 = vmatprep.subr.mxu0 0.0
    %3337 = vmatpush1.msra.mxu0 0.0
    %3338 = vmatprep.subr.mxu0 0.0
    %3339 = vmatpush1.msra.mxu0 0.0
    %3340 = vmatprep.subr.mxu0 0.0
    %3341 = vmatpush1.msra.mxu0 0.0
    %3342 = vmatprep.subr.mxu0 0.0
    %3343 = vmatpush1.msra.mxu0 0.0
    %3344 = vmatprep.subr.mxu0 0.0
    %3345 = vmatpush1.msra.mxu0 0.0
    %3346 = vmatprep.subr.mxu0 0.0
    %3347 = vmatpush1.msra.mxu0 0.0
    %3348 = vmatprep.subr.mxu0 0.0
    %3349 = vmatpush1.msra.mxu0 0.0
    %3350 = vmatprep.subr.mxu0 0.0
    %3351 = vmatpush1.msra.mxu0 0.0
    %3352 = vmatprep.subr.mxu0 0.0
    %3353 = vmatpush1.msra.mxu0 0.0
    %3354 = vmatprep.subr.mxu0 0.0
    %3355 = vmatpush1.msra.mxu0 0.0
    %3356 = vmatprep.subr.mxu0 0.0
    %3357 = vmatpush1.msra.mxu0 0.0
    %3358 = vmatprep.subr.mxu0 0.0
    %3359 = vmatpush1.msra.mxu0 0.0
    %3360 = vmatprep.subr.mxu0 0.0
    %3361 = vmatpush1.msra.mxu0 0.0
    %3362 = vmatprep.subr.mxu0 0.0
    %3363 = vmatpush1.msra.mxu0 0.0
    %3364 = vmatprep.subr.mxu0 0.0
    %3365 = vmatpush1.msra.mxu0 0.0
    %3366 = vmatprep.subr.mxu0 0.0
    %3367 = vmatpush1.msra.mxu0 0.0
    %3368 = vmatprep.subr.mxu0 0.0
    %3369 = vmatpush1.msra.mxu0 0.0
    %3370 = vmatprep.subr.mxu0 0.0
    %3371 = vmatpush1.msra.mxu0 0.0
    %3372 = vmatprep.subr.mxu0 0.0
    %3373 = vmatpush1.msra.mxu0 0.0
    %3374 = vmatprep.subr.mxu0 0.0
    %3375 = vmatpush1.msra.mxu0 0.0
    %3376 = vmatprep.subr.mxu0 0.0
    %3377 = vmatpush1.msra.mxu0 0.0
    %3378 = vmatprep.subr.mxu0 0.0
    %3379 = vmatpush1.msra.mxu0 0.0
    %3380 = vmatprep.subr.mxu0 0.0
    %3381 = vmatpush1.msra.mxu0 0.0
    %3382 = vmatprep.subr.mxu0 0.0
    %3383 = vmatpush1.msra.mxu0 0.0
    %3384 = vmatprep.mubr.f32.mxu0 0.0
    %v3385 = vand.u32 %v2945, 4294901760
    %3386 = vmatmul.mubr.f32.gmra.mrb[0].mxu0 %v3385
    %v3387 = vpop.f32.mrb[0].mxu0
    %v3388 = vadd.f32 %v3297, %v3387
    %v3389 = vpop.f32.mrb[0].mxu0
    %3390 = vmatprep.mubr.f32.mxu0 0.0
    %v3391 = vand.u32 %v2948, 4294901760
    %3392 = vmatmul.mubr.f32.gmra.mrb[0].mxu0 %v3391
    %v3393 = vpop.f32.mrb[0].mxu0
    %v3394 = vadd.f32 %v3305, %v3393
    %v3395 = vpop.f32.mrb[0].mxu0
    %3396 = vdwg.mxu0
    %3397 = vmatprep.subr.mxu0 0.0
    %v3398 = vand.u32 %v2940, 4294901760
    %3399 = vmatpush1.msra.mxu0 %v3398
    %3400 = vmatprep.subr.mxu0 0.0
    %v3401 = vand.u32 %v2941, 4294901760
    %3402 = vmatpush1.msra.mxu0 %v3401
    %3403 = vmatprep.subr.mxu0 0.0
    %v3404 = vand.u32 %v2942, 4294901760
    %3405 = vmatpush1.msra.mxu0 %v3404
    %3406 = vmatprep.subr.mxu0 0.0
    %v3407 = vand.u32 %v2943, 4294901760
    %3408 = vmatpush1.msra.mxu0 %v3407
    %3409 = vmatprep.subr.mxu0 0.0
    %3410 = vmatpush1.msra.mxu0 0.0
    %3411 = vmatprep.subr.mxu0 0.0
    %3412 = vmatpush1.msra.mxu0 0.0
    %3413 = vmatprep.subr.mxu0 0.0
    %3414 = vmatpush1.msra.mxu0 0.0
    %3415 = vmatprep.subr.mxu0 0.0
    %3416 = vmatpush1.msra.mxu0 0.0
    %3417 = vmatprep.subr.mxu0 0.0
    %3418 = vmatpush1.msra.mxu0 0.0
    %3419 = vmatprep.subr.mxu0 0.0
    %3420 = vmatpush1.msra.mxu0 0.0
    %3421 = vmatprep.subr.mxu0 0.0
    %3422 = vmatpush1.msra.mxu0 0.0
    %3423 = vmatprep.subr.mxu0 0.0
    %3424 = vmatpush1.msra.mxu0 0.0
    %3425 = vmatprep.subr.mxu0 0.0
    %3426 = vmatpush1.msra.mxu0 0.0
    %3427 = vmatprep.subr.mxu0 0.0
    %3428 = vmatpush1.msra.mxu0 0.0
    %3429 = vmatprep.subr.mxu0 0.0
    %3430 = vmatpush1.msra.mxu0 0.0
    %3431 = vmatprep.subr.mxu0 0.0
    %3432 = vmatpush1.msra.mxu0 0.0
    %3433 = vmatprep.subr.mxu0 0.0
    %3434 = vmatpush1.msra.mxu0 0.0
    %3435 = vmatprep.subr.mxu0 0.0
    %3436 = vmatpush1.msra.mxu0 0.0
    %3437 = vmatprep.subr.mxu0 0.0
    %3438 = vmatpush1.msra.mxu0 0.0
    %3439 = vmatprep.subr.mxu0 0.0
    %3440 = vmatpush1.msra.mxu0 0.0
    %3441 = vmatprep.subr.mxu0 0.0
    %3442 = vmatpush1.msra.mxu0 0.0
    %3443 = vmatprep.subr.mxu0 0.0
    %3444 = vmatpush1.msra.mxu0 0.0
    %3445 = vmatprep.subr.mxu0 0.0
    %3446 = vmatpush1.msra.mxu0 0.0
    %3447 = vmatprep.subr.mxu0 0.0
    %3448 = vmatpush1.msra.mxu0 0.0
    %3449 = vmatprep.subr.mxu0 0.0
    %3450 = vmatpush1.msra.mxu0 0.0
    %3451 = vmatprep.subr.mxu0 0.0
    %3452 = vmatpush1.msra.mxu0 0.0
    %3453 = vmatprep.subr.mxu0 0.0
    %3454 = vmatpush1.msra.mxu0 0.0
    %3455 = vmatprep.subr.mxu0 0.0
    %3456 = vmatpush1.msra.mxu0 0.0
    %3457 = vmatprep.subr.mxu0 0.0
    %3458 = vmatpush1.msra.mxu0 0.0
    %3459 = vmatprep.subr.mxu0 0.0
    %3460 = vmatpush1.msra.mxu0 0.0
    %3461 = vmatprep.subr.mxu0 0.0
    %3462 = vmatpush1.msra.mxu0 0.0
    %3463 = vmatprep.subr.mxu0 0.0
    %3464 = vmatpush1.msra.mxu0 0.0
    %3465 = vmatprep.mubr.f32.mxu0 0.0
    %v3466 = vand.u32 %v2945, 4294901760
    %3467 = vmatmul.mubr.f32.gmra.mrb[0].mxu0 %v3466
    %v3468 = vpop.f32.mrb[0].mxu0
    %v3469 = vadd.f32 %v3388, %v3468
    %v3470 = vpop.f32.mrb[0].mxu0
    %3471 = vmatprep.mubr.f32.mxu0 0.0
    %v3472 = vand.u32 %v2948, 4294901760
    %3473 = vmatmul.mubr.f32.gmra.mrb[0].mxu0 %v3472
    %v3474 = vpop.f32.mrb[0].mxu0
    %v3475 = vadd.f32 %v3394, %v3474
    %v3476 = vpop.f32.mrb[0].mxu0
    %3477 = vdwg.mxu0
    %v3478 = vadd.f32 %v2931, %v3469
    %v3479 = vadd.f32 %v2937, %v3475
    %v3480 = vld [vmem:[#allocation2 + $0xa8] sm:$0xff]
    %v3481 = vld [vmem:[#allocation2 + $0xb0] sm:$0xff]
    %3483 = vset.pattern.permute.xlu0 0
    %3484 = vperm.xlu0 %3483, %v3480
    %v3485 = vpop.permute.xlu0 %3484
    %3488 = vset.pattern.permute.xlu0 0
    %3489 = vperm.xlu0 %3488, %v3481
    %v3490 = vpop.permute.xlu0 %3489
    %v3492 = vadd.f32 %v3478, %v3485
    %v3493 = vadd.f32 %v3479, %v3490
    %v3494 = vmax.f32 %v3492, 0.0
    %v3495 = vmax.f32 %v3493, 0.0
    %v3496 = vadd.f32 %v3494, %v2393
    %v3497 = vadd.f32 %v3495, %v2399
    %3498 = vset.pattern.permute.xlu0 1
    %3499 = vperm.xlu0 %3498, %v3480
    %v3500 = vpop.permute.xlu0 %3499
    %3502 = vset.pattern.permute.xlu0 1
    %3503 = vperm.xlu0 %3502, %v3481
    %v3504 = vpop.permute.xlu0 %3503
    %v3506 = vadd.f32 %v3496, %v3500
    %v3507 = vadd.f32 %v3497, %v3504
    %3508 = vst.msk [vmem:[%s2] sm:$0xff] %vm626, %v3506
    %3509 = vst.msk [vmem:[%s2 + $0x8] sm:$0xff] %vm626, %v3507
    // Predicated region
    $region14: #{forward.1} parent=1 // pred_check
      _
    $region15: #{forward.1} parent=1 // pred_check_branch
      %3511 = sbr.rel (0) target = $region17
    $region16: #{forward.1} parent=1 // pred_region
      _
    $region17: #{forward.1} parent=1 // pred_fallthru
      _
    // Predicated region
    $region18: #{forward.1} parent=1 // pred_check
      _
    $region19: #{forward.1} parent=1 // pred_check_branch
      %3513 = sbr.rel (0) target = $region21
    $region20: #{forward.1} parent=1 // pred_region
      _
    $region21: #{forward.1} parent=1 // pred_fallthru
      _
    %3514 = vsyncpa [#allocation3], 1

</llo_original>
